<compile_context>
chip_gen: v6e
topology: v6e:2x2x1
jax: 0.10.0
libtpu: 0.0.40
codegen_flags: <defaults>
</compile_context>

<pallas_src>
import math
from functools import partial

import jax
import jax.numpy as jnp
from jax.experimental import pallas as pl
from jax.experimental.pallas import tpu as pltpu


def _self_attention_kernel(x_ref, wqkv_ref, bqkv_ref, sqmask_ref, hmask_ref,
                           wm_ref, bm_ref, o_ref, *, num_heads, seq_len):
    M, C = x_ref.shape                      # M = blk * L rows, C channels
    L = seq_len
    blk = M // L
    D = C // num_heads
    scale = 1.0 / math.sqrt(D)

    x2 = x_ref[...]                                        # (M, C) f32

    # Fused QKV projection: bf16 MXU operands, f32 accumulation, f32 bias.
    qkv = jnp.dot(x2.astype(jnp.bfloat16), wqkv_ref[...],
                  preferred_element_type=jnp.float32) + bqkv_ref[...]      # (M, 3C)

    # Per-head L2 normalization: sqmask is (3C, 3C) block-diagonal of DxD ones,
    # so this matmul yields each head's sum of squares broadcast to every lane
    # of that head (segmented reduce on the otherwise-idle MXU).
    sq = (qkv * qkv).astype(jnp.bfloat16)
    sumsq = jnp.dot(sq, sqmask_ref[...], preferred_element_type=jnp.float32)
    # F.normalize: x / max(||x||, 1e-12)  ==  x * rsqrt(max(||x||^2, 1e-24)).
    qkv_b = (qkv * jax.lax.rsqrt(jnp.maximum(sumsq, 1e-24))).astype(jnp.bfloat16)

    hmask = hmask_ref[...]                                 # (H*L, C) bf16 {0,1}
    wm = wm_ref[...]                                       # (C, C)  bf16
    bm = bm_ref[...]                                       # (1, C)  f32

    for i in range(blk):                                   # static, unrolled
        r0 = i * L
        q_s = qkv_b[r0:r0 + L, 0:C]                        # (L, C)
        k_s = qkv_b[r0:r0 + L, C:2 * C]                    # (L, C)
        v_s = qkv_b[r0:r0 + L, 2 * C:3 * C]                # (L, C)

        # Block-diagonal head-batched K / V operands: replicate the slice H
        # times along sublanes and keep only each head's D channels.
        k_bd = jnp.concatenate([k_s] * num_heads, axis=0) * hmask        # (H*L, C)
        v_bd = jnp.concatenate([v_s] * num_heads, axis=0) * hmask        # (H*L, C)

        # All heads' scores in one lane-dense matmul:
        #   s[i, h*L + j] = q_h[i] . k_h[j]
        s = jax.lax.dot_general(q_s, k_bd, (((1,), (1,)), ((), ())),
                                preferred_element_type=jnp.float32) * scale
        # q, k are unit-L2 per head => |s| <= 0.5: exp cannot overflow, so the
        # max-subtraction is skipped.  Dropout on the raw scores is eval-mode
        # identity.
        p = jnp.exp(s).astype(jnp.bfloat16)                # (L, H*L)

        # Per-head softmax denominator (segmented row-sum on the MXU), already
        # broadcast into the (L, C) channel layout by the same head mask.
        denom = jnp.dot(p, hmask, preferred_element_type=jnp.float32)    # (L, C)
        # PV: head outputs land at their channel offsets directly (no concat).
        pv = jnp.dot(p, v_bd, preferred_element_type=jnp.float32)        # (L, C)
        attn = pv * pl.reciprocal(denom, approx=True)                    # (L, C)

        # Single output projection against the original Wm + bias + residual.
        out = jnp.dot(attn.astype(jnp.bfloat16), wm,
                      preferred_element_type=jnp.float32)                # (L, C)
        o_ref[r0:r0 + L, :] = (out + bm + x2[r0:r0 + L, :]).astype(o_ref.dtype)


def _tensorcores_per_chip():
    """Best-effort trace-time query; defaults to 1 TensorCore (v5e/v6e)."""
    try:
        info = pltpu.get_tpu_info()
        for attr in ("num_cores", "core_count", "tensorcore_count"):
            val = getattr(info, attr, None)
            if isinstance(val, int) and val > 0:
                return val
        cv = getattr(info, "chip_version", None)
        if cv is not None and "7" in str(cv):
            return 2
    except Exception:
        pass
    try:
        if "7" in jax.devices()[0].device_kind:
            return 2
    except Exception:
        pass
    return 1


def prepare_self_attention_params(params, num_heads, seq_len):
    """One-time parameter preprocessing (hoisted out of the per-call path)."""
    wq, bq, wkv, bkv, wm, bm = params        # weights stored as (in, out)
    c = wq.shape[0]
    d = c // num_heads
    # Fused QKV projection weights / bias; bf16 MXU operands.
    wqkv = jnp.concatenate([wq, wkv], axis=1).astype(jnp.bfloat16)        # (C, 3C)
    bqkv = jnp.concatenate([bq, bkv]).reshape(1, 3 * c).astype(jnp.float32)
    # Block-diagonal DxD-ones mask for the per-head sum-of-squares matmul.
    sqmask = jnp.kron(jnp.eye(3 * num_heads, dtype=jnp.float32),
                      jnp.ones((d, d), dtype=jnp.float32)).astype(jnp.bfloat16)
    # (H*L, C) head mask: row h*L+j keeps only head h's D channels.  Used both
    # to build the block-diagonal K/V operands and as the softmax-denominator
    # segmented-reduce matrix.
    row_head = jnp.repeat(jnp.arange(num_heads), seq_len)                 # (H*L,)
    col_head = jnp.repeat(jnp.arange(num_heads), d)                       # (C,)
    hmask = (row_head[:, None] == col_head[None, :]).astype(jnp.bfloat16)
    return dict(wqkv=wqkv, bqkv=bqkv, sqmask=sqmask, hmask=hmask,
                wm=wm.astype(jnp.bfloat16), bm=bm.reshape(1, c).astype(jnp.float32),
                num_heads=num_heads, seq_len=seq_len)


def self_attention_pallas(x, prep):
    b, t, l, c = x.shape
    num_heads = prep["num_heads"]
    assert l == prep["seq_len"] and c % num_heads == 0
    bt = b * t
    hl = num_heads * l
    x2 = x.reshape(bt * l, c)

    # 2 parallel grid steps only on 2-TensorCore chips (v7x); 1 step otherwise.
    num_blocks = 2 if (_tensorcores_per_chip() >= 2 and bt % 2 == 0 and bt >= 2) else 1
    rows_per_block = (bt // num_blocks) * l

    # Advisory cost estimate so XLA schedules this cheap custom call sensibly.
    m_rows = bt * l
    flops = int(2 * m_rows * c * 3 * c                    # fused QKV projection
                + 2 * m_rows * 3 * c * 3 * c              # sum-of-squares matmul
                + bt * 2 * l * c * (3 * hl + c))          # scores+denom+PV+proj
    transcendentals = int(m_rows * 3 * c + bt * l * hl + bt * l * c)
    bytes_accessed = int(2 * m_rows * c * 4
                         + prep["wqkv"].size * 2 + prep["sqmask"].size * 2
                         + prep["hmask"].size * 2 + prep["wm"].size * 2
                         + prep["bqkv"].size * 4 + prep["bm"].size * 4)

    kernel = partial(_self_attention_kernel, num_heads=num_heads, seq_len=l)
    out = pl.pallas_call(
        kernel,
        out_shape=jax.ShapeDtypeStruct((bt * l, c), x.dtype),
        grid=(num_blocks,),
        in_specs=[
            pl.BlockSpec((rows_per_block, c), lambda i: (i, 0)),      # x rows
            pl.BlockSpec((c, 3 * c), lambda i: (0, 0)),               # W_qkv
            pl.BlockSpec((1, 3 * c), lambda i: (0, 0)),               # b_qkv
            pl.BlockSpec((3 * c, 3 * c), lambda i: (0, 0)),           # sumsq mask
            pl.BlockSpec((hl, c), lambda i: (0, 0)),                  # head mask
            pl.BlockSpec((c, c), lambda i: (0, 0)),                   # W_m
            pl.BlockSpec((1, c), lambda i: (0, 0)),                   # b_m
        ],
        out_specs=pl.BlockSpec((rows_per_block, c), lambda i: (i, 0)),
        compiler_params=pltpu.CompilerParams(dimension_semantics=("parallel",)),
        cost_estimate=pl.CostEstimate(flops=flops,
                                      transcendentals=transcendentals,
                                      bytes_accessed=bytes_accessed),
    )(x2, prep["wqkv"], prep["bqkv"], prep["sqmask"], prep["hmask"],
      prep["wm"], prep["bm"])
    return out.reshape(b, t, l, c)


def self_attention_ref(x, params, num_heads):
    """Pure-JAX f32 reference mirroring the PyTorch forward (eval mode)."""
    wq, bq, wkv, bkv, wm, bm = params
    b, t, l, c = x.shape
    d = c // num_heads
    q = x @ wq + bq
    kv = x @ wkv + bkv
    q = q.reshape(b, t, l, num_heads, d).transpose(0, 1, 3, 2, 4)
    kv = kv.reshape(b, t, l, 2 * num_heads, d).transpose(0, 1, 3, 2, 4)
    k, v = kv[:, :, :num_heads], kv[:, :, num_heads:]

    def norm(a):
        return a / jnp.maximum(jnp.linalg.norm(a, axis=-1, keepdims=True), 1e-12)

    q, k, v = norm(q), norm(k), norm(v)
    s = jnp.einsum('bthqd,bthkd->bthqk', q, k) / math.sqrt(d)
    p = jax.nn.softmax(s, axis=-1)
    o = jnp.einsum('bthqk,bthkd->bthqd', p, v)
    o = o.transpose(0, 1, 3, 2, 4).reshape(b, t, l, c)
    return o @ wm + bm + x


if __name__ == "__main__":
    # Small shapes consistent with the module: x is (b, t, l, c), num_heads=8.
    B, T, L, C = 2, 4, 16, 32
    NUM_HEADS = 8

    key = jax.random.PRNGKey(0)
    kx, kq, kbq, kkv, kbkv, km, kbm = jax.random.split(key, 7)

    x = jax.random.normal(kx, (B, T, L, C), dtype=jnp.float32)

    # Deterministic parameter init; weights stored as (in, out).
    s = 1.0 / math.sqrt(C)
    wq = jax.random.uniform(kq, (C, C), jnp.float32, -s, s)
    bq = jax.random.uniform(kbq, (C,), jnp.float32, -s, s)
    wkv = jax.random.uniform(kkv, (C, 2 * C), jnp.float32, -s, s)
    bkv = jax.random.uniform(kbkv, (2 * C,), jnp.float32, -s, s)
    wm = jax.random.uniform(km, (C, C), jnp.float32, -s, s)
    bm = jax.random.uniform(kbm, (C,), jnp.float32, -s, s)
    params = (wq, bq, wkv, bkv, wm, bm)

    # One-time parameter preprocessing (hoisted out of the forward path).
    prep = jax.tree_util.tree_map(
        lambda a: jax.block_until_ready(a) if isinstance(a, jax.Array) else a,
        prepare_self_attention_params(params, NUM_HEADS, L))

    out = self_attention_pallas(x, prep)
    out = jax.block_until_ready(out)

    ref = jax.block_until_ready(self_attention_ref(x, params, NUM_HEADS))
    assert out.shape == (B, T, L, C)
    # Tolerance reflects bf16 MXU operands (kernel) vs an all-f32 reference;
    # expected max abs deviation is ~1e-2, genuine bugs produce O(0.1-1) errors.
    assert jnp.allclose(out, ref, atol=2e-2, rtol=2e-2), "mismatch vs reference"

    print("KERNEL_OK")
</pallas_src>

<mosaic_0001>
module attributes {stable_mosaic.version = 11 : i64} {
  func.func @_self_attention_kernel(%arg0: i32, %arg1: memref<128x32xf32, #tpu.memory_space<vmem>>, %arg2: memref<32x96xbf16, #tpu.memory_space<vmem>>, %arg3: memref<1x96xf32, #tpu.memory_space<vmem>>, %arg4: memref<96x96xbf16, #tpu.memory_space<vmem>>, %arg5: memref<128x32xbf16, #tpu.memory_space<vmem>>, %arg6: memref<32x32xbf16, #tpu.memory_space<vmem>>, %arg7: memref<1x32xf32, #tpu.memory_space<vmem>>, %arg8: memref<128x32xf32, #tpu.memory_space<vmem>>) attributes {dimension_semantics = [#tpu.dimension_semantics<parallel>], iteration_bounds = array<i64: 1>, scalar_prefetch = 0 : i64, scratch_operands = 0 : i64, tpu.core_type = #tpu.core_type<tc>, window_params = [{transform_indices = @transform_0, window_bounds = array<i64: 128, 32>}, {pipeline_mode = #tpu.pipeline_mode<synchronous>, transform_indices = @transform_1, window_bounds = array<i64: 32, 96>}, {pipeline_mode = #tpu.pipeline_mode<synchronous>, transform_indices = @transform_2, window_bounds = array<i64: 1, 96>}, {pipeline_mode = #tpu.pipeline_mode<synchronous>, transform_indices = @transform_3, window_bounds = array<i64: 96, 96>}, {pipeline_mode = #tpu.pipeline_mode<synchronous>, transform_indices = @transform_4, window_bounds = array<i64: 128, 32>}, {pipeline_mode = #tpu.pipeline_mode<synchronous>, transform_indices = @transform_5, window_bounds = array<i64: 32, 32>}, {pipeline_mode = #tpu.pipeline_mode<synchronous>, transform_indices = @transform_6, window_bounds = array<i64: 1, 32>}, {transform_indices = @transform_7, window_bounds = array<i64: 128, 32>}]} {
    %c0 = arith.constant 0 : index
    %c0_0 = arith.constant 0 : index
    %0 = vector.load %arg1[%c0, %c0_0] : memref<128x32xf32, #tpu.memory_space<vmem>>, vector<128x32xf32>
    %1 = arith.truncf %0 : vector<128x32xf32> to vector<128x32xbf16>
    %c0_1 = arith.constant 0 : index
    %c0_2 = arith.constant 0 : index
    %2 = vector.load %arg2[%c0_1, %c0_2] : memref<32x96xbf16, #tpu.memory_space<vmem>>, vector<32x96xbf16>
    %cst = arith.constant dense<0.000000e+00> : vector<128x96xf32>
    %3 = tpu.matmul %1, %2, %cst {dimension_numbers = #tpu.dot_dimension_numbers<[1], [0], [0], [1], [0, 0, 1, 1], [], []>} : vector<128x32xbf16>, vector<32x96xbf16>, vector<128x96xf32> -> vector<128x96xf32>
    %c0_3 = arith.constant 0 : index
    %c0_4 = arith.constant 0 : index
    %4 = vector.load %arg3[%c0_3, %c0_4] : memref<1x96xf32, #tpu.memory_space<vmem>>, vector<1x96xf32>
    %5 = vector.broadcast %4 : vector<1x96xf32> to vector<128x96xf32>
    %6 = arith.addf %3, %5 : vector<128x96xf32>
    %7 = arith.mulf %6, %6 : vector<128x96xf32>
    %8 = arith.truncf %7 : vector<128x96xf32> to vector<128x96xbf16>
    %c0_5 = arith.constant 0 : index
    %c0_6 = arith.constant 0 : index
    %9 = vector.load %arg4[%c0_5, %c0_6] : memref<96x96xbf16, #tpu.memory_space<vmem>>, vector<96x96xbf16>
    %cst_7 = arith.constant dense<0.000000e+00> : vector<128x96xf32>
    %10 = tpu.matmul %8, %9, %cst_7 {dimension_numbers = #tpu.dot_dimension_numbers<[1], [0], [0], [1], [0, 0, 1, 1], [], []>} : vector<128x96xbf16>, vector<96x96xbf16>, vector<128x96xf32> -> vector<128x96xf32>
    %cst_8 = arith.constant 1.000000e-24 : f32
    %11 = vector.broadcast %cst_8 : f32 to vector<128x96xf32>
    %12 = arith.maximumf %10, %11 : vector<128x96xf32>
    %13 = math.rsqrt %12 : vector<128x96xf32>
    %14 = arith.mulf %6, %13 : vector<128x96xf32>
    %15 = arith.truncf %14 : vector<128x96xf32> to vector<128x96xbf16>
    %c0_9 = arith.constant 0 : index
    %c0_10 = arith.constant 0 : index
    %16 = vector.load %arg5[%c0_9, %c0_10] : memref<128x32xbf16, #tpu.memory_space<vmem>>, vector<128x32xbf16>
    %c0_11 = arith.constant 0 : index
    %c0_12 = arith.constant 0 : index
    %17 = vector.load %arg6[%c0_11, %c0_12] : memref<32x32xbf16, #tpu.memory_space<vmem>>, vector<32x32xbf16>
    %c0_13 = arith.constant 0 : index
    %c0_14 = arith.constant 0 : index
    %18 = vector.load %arg7[%c0_13, %c0_14] : memref<1x32xf32, #tpu.memory_space<vmem>>, vector<1x32xf32>
    %19 = vector.extract_strided_slice %15 {offsets = [0, 0], sizes = [16, 32], strides = [1, 1]} : vector<128x96xbf16> to vector<16x32xbf16>
    %20 = vector.extract_strided_slice %15 {offsets = [0, 32], sizes = [16, 32], strides = [1, 1]} : vector<128x96xbf16> to vector<16x32xbf16>
    %21 = vector.extract_strided_slice %15 {offsets = [0, 64], sizes = [16, 32], strides = [1, 1]} : vector<128x96xbf16> to vector<16x32xbf16>
    %22 = tpu.concatenate %20, %20, %20, %20, %20, %20, %20, %20 in 0 : vector<16x32xbf16>, vector<16x32xbf16>, vector<16x32xbf16>, vector<16x32xbf16>, vector<16x32xbf16>, vector<16x32xbf16>, vector<16x32xbf16>, vector<16x32xbf16> -> vector<128x32xbf16>
    %23 = arith.mulf %22, %16 : vector<128x32xbf16>
    %24 = tpu.concatenate %21, %21, %21, %21, %21, %21, %21, %21 in 0 : vector<16x32xbf16>, vector<16x32xbf16>, vector<16x32xbf16>, vector<16x32xbf16>, vector<16x32xbf16>, vector<16x32xbf16>, vector<16x32xbf16>, vector<16x32xbf16> -> vector<128x32xbf16>
    %25 = arith.mulf %24, %16 : vector<128x32xbf16>
    %cst_15 = arith.constant dense<0.000000e+00> : vector<16x128xf32>
    %26 = tpu.matmul %19, %23, %cst_15 {dimension_numbers = #tpu.dot_dimension_numbers<[1], [1], [0], [0], [0, 0, 1, 0], [], []>} : vector<16x32xbf16>, vector<128x32xbf16>, vector<16x128xf32> -> vector<16x128xf32>
    %cst_16 = arith.constant 5.000000e-01 : f32
    %27 = vector.broadcast %cst_16 : f32 to vector<16x128xf32>
    %28 = arith.mulf %26, %27 : vector<16x128xf32>
    %29 = math.exp %28 : vector<16x128xf32>
    %30 = arith.truncf %29 : vector<16x128xf32> to vector<16x128xbf16>
    %cst_17 = arith.constant dense<0.000000e+00> : vector<16x32xf32>
    %31 = tpu.matmul %30, %16, %cst_17 {dimension_numbers = #tpu.dot_dimension_numbers<[1], [0], [0], [1], [0, 0, 1, 1], [], []>} : vector<16x128xbf16>, vector<128x32xbf16>, vector<16x32xf32> -> vector<16x32xf32>
    %cst_18 = arith.constant dense<0.000000e+00> : vector<16x32xf32>
    %32 = tpu.matmul %30, %25, %cst_18 {dimension_numbers = #tpu.dot_dimension_numbers<[1], [0], [0], [1], [0, 0, 1, 1], [], []>} : vector<16x128xbf16>, vector<128x32xbf16>, vector<16x32xf32> -> vector<16x32xf32>
    %33 = tpu.reciprocal %31 {approx = true} : vector<16x32xf32> -> vector<16x32xf32>
    %34 = arith.mulf %32, %33 : vector<16x32xf32>
    %35 = arith.truncf %34 : vector<16x32xf32> to vector<16x32xbf16>
    %cst_19 = arith.constant dense<0.000000e+00> : vector<16x32xf32>
    %36 = tpu.matmul %35, %17, %cst_19 {dimension_numbers = #tpu.dot_dimension_numbers<[1], [0], [0], [1], [0, 0, 1, 1], [], []>} : vector<16x32xbf16>, vector<32x32xbf16>, vector<16x32xf32> -> vector<16x32xf32>
    %37 = vector.broadcast %18 : vector<1x32xf32> to vector<16x32xf32>
    %38 = arith.addf %36, %37 : vector<16x32xf32>
    %39 = vector.extract_strided_slice %0 {offsets = [0, 0], sizes = [16, 32], strides = [1, 1]} : vector<128x32xf32> to vector<16x32xf32>
    %40 = arith.addf %38, %39 : vector<16x32xf32>
    %c0_20 = arith.constant 0 : index
    %c0_21 = arith.constant 0 : index
    %41 = vector.load %arg8[%c0_20, %c0_21] : memref<128x32xf32, #tpu.memory_space<vmem>>, vector<16x32xf32>
    tpu.vector_store %arg8[%c0_20, %c0_21], %40 {strides = array<i32>} : memref<128x32xf32, #tpu.memory_space<vmem>>, vector<16x32xf32>,
    %42 = vector.extract_strided_slice %15 {offsets = [16, 0], sizes = [16, 32], strides = [1, 1]} : vector<128x96xbf16> to vector<16x32xbf16>
    %43 = vector.extract_strided_slice %15 {offsets = [16, 32], sizes = [16, 32], strides = [1, 1]} : vector<128x96xbf16> to vector<16x32xbf16>
    %44 = vector.extract_strided_slice %15 {offsets = [16, 64], sizes = [16, 32], strides = [1, 1]} : vector<128x96xbf16> to vector<16x32xbf16>
    %45 = tpu.concatenate %43, %43, %43, %43, %43, %43, %43, %43 in 0 : vector<16x32xbf16>, vector<16x32xbf16>, vector<16x32xbf16>, vector<16x32xbf16>, vector<16x32xbf16>, vector<16x32xbf16>, vector<16x32xbf16>, vector<16x32xbf16> -> vector<128x32xbf16>
    %46 = arith.mulf %45, %16 : vector<128x32xbf16>
    %47 = tpu.concatenate %44, %44, %44, %44, %44, %44, %44, %44 in 0 : vector<16x32xbf16>, vector<16x32xbf16>, vector<16x32xbf16>, vector<16x32xbf16>, vector<16x32xbf16>, vector<16x32xbf16>, vector<16x32xbf16>, vector<16x32xbf16> -> vector<128x32xbf16>
    %48 = arith.mulf %47, %16 : vector<128x32xbf16>
    %cst_22 = arith.constant dense<0.000000e+00> : vector<16x128xf32>
    %49 = tpu.matmul %42, %46, %cst_22 {dimension_numbers = #tpu.dot_dimension_numbers<[1], [1], [0], [0], [0, 0, 1, 0], [], []>} : vector<16x32xbf16>, vector<128x32xbf16>, vector<16x128xf32> -> vector<16x128xf32>
    %cst_23 = arith.constant 5.000000e-01 : f32
    %50 = vector.broadcast %cst_23 : f32 to vector<16x128xf32>
    %51 = arith.mulf %49, %50 : vector<16x128xf32>
    %52 = math.exp %51 : vector<16x128xf32>
    %53 = arith.truncf %52 : vector<16x128xf32> to vector<16x128xbf16>
    %cst_24 = arith.constant dense<0.000000e+00> : vector<16x32xf32>
    %54 = tpu.matmul %53, %16, %cst_24 {dimension_numbers = #tpu.dot_dimension_numbers<[1], [0], [0], [1], [0, 0, 1, 1], [], []>} : vector<16x128xbf16>, vector<128x32xbf16>, vector<16x32xf32> -> vector<16x32xf32>
    %cst_25 = arith.constant dense<0.000000e+00> : vector<16x32xf32>
    %55 = tpu.matmul %53, %48, %cst_25 {dimension_numbers = #tpu.dot_dimension_numbers<[1], [0], [0], [1], [0, 0, 1, 1], [], []>} : vector<16x128xbf16>, vector<128x32xbf16>, vector<16x32xf32> -> vector<16x32xf32>
    %56 = tpu.reciprocal %54 {approx = true} : vector<16x32xf32> -> vector<16x32xf32>
    %57 = arith.mulf %55, %56 : vector<16x32xf32>
    %58 = arith.truncf %57 : vector<16x32xf32> to vector<16x32xbf16>
    %cst_26 = arith.constant dense<0.000000e+00> : vector<16x32xf32>
    %59 = tpu.matmul %58, %17, %cst_26 {dimension_numbers = #tpu.dot_dimension_numbers<[1], [0], [0], [1], [0, 0, 1, 1], [], []>} : vector<16x32xbf16>, vector<32x32xbf16>, vector<16x32xf32> -> vector<16x32xf32>
    %60 = vector.broadcast %18 : vector<1x32xf32> to vector<16x32xf32>
    %61 = arith.addf %59, %60 : vector<16x32xf32>
    %62 = vector.extract_strided_slice %0 {offsets = [16, 0], sizes = [16, 32], strides = [1, 1]} : vector<128x32xf32> to vector<16x32xf32>
    %63 = arith.addf %61, %62 : vector<16x32xf32>
    %c16 = arith.constant 16 : index
    %c0_27 = arith.constant 0 : index
    %64 = vector.load %arg8[%c16, %c0_27] : memref<128x32xf32, #tpu.memory_space<vmem>>, vector<16x32xf32>
    tpu.vector_store %arg8[%c16, %c0_27], %63 {strides = array<i32>} : memref<128x32xf32, #tpu.memory_space<vmem>>, vector<16x32xf32>,
    %65 = vector.extract_strided_slice %15 {offsets = [32, 0], sizes = [16, 32], strides = [1, 1]} : vector<128x96xbf16> to vector<16x32xbf16>
    %66 = vector.extract_strided_slice %15 {offsets = [32, 32], sizes = [16, 32], strides = [1, 1]} : vector<128x96xbf16> to vector<16x32xbf16>
    %67 = vector.extract_strided_slice %15 {offsets = [32, 64], sizes = [16, 32], strides = [1, 1]} : vector<128x96xbf16> to vector<16x32xbf16>
    %68 = tpu.concatenate %66, %66, %66, %66, %66, %66, %66, %66 in 0 : vector<16x32xbf16>, vector<16x32xbf16>, vector<16x32xbf16>, vector<16x32xbf16>, vector<16x32xbf16>, vector<16x32xbf16>, vector<16x32xbf16>, vector<16x32xbf16> -> vector<128x32xbf16>
    %69 = arith.mulf %68, %16 : vector<128x32xbf16>
    %70 = tpu.concatenate %67, %67, %67, %67, %67, %67, %67, %67 in 0 : vector<16x32xbf16>, vector<16x32xbf16>, vector<16x32xbf16>, vector<16x32xbf16>, vector<16x32xbf16>, vector<16x32xbf16>, vector<16x32xbf16>, vector<16x32xbf16> -> vector<128x32xbf16>
    %71 = arith.mulf %70, %16 : vector<128x32xbf16>
    %cst_28 = arith.constant dense<0.000000e+00> : vector<16x128xf32>
    %72 = tpu.matmul %65, %69, %cst_28 {dimension_numbers = #tpu.dot_dimension_numbers<[1], [1], [0], [0], [0, 0, 1, 0], [], []>} : vector<16x32xbf16>, vector<128x32xbf16>, vector<16x128xf32> -> vector<16x128xf32>
    %cst_29 = arith.constant 5.000000e-01 : f32
    %73 = vector.broadcast %cst_29 : f32 to vector<16x128xf32>
    %74 = arith.mulf %72, %73 : vector<16x128xf32>
    %75 = math.exp %74 : vector<16x128xf32>
    %76 = arith.truncf %75 : vector<16x128xf32> to vector<16x128xbf16>
    %cst_30 = arith.constant dense<0.000000e+00> : vector<16x32xf32>
    %77 = tpu.matmul %76, %16, %cst_30 {dimension_numbers = #tpu.dot_dimension_numbers<[1], [0], [0], [1], [0, 0, 1, 1], [], []>} : vector<16x128xbf16>, vector<128x32xbf16>, vector<16x32xf32> -> vector<16x32xf32>
    %cst_31 = arith.constant dense<0.000000e+00> : vector<16x32xf32>
    %78 = tpu.matmul %76, %71, %cst_31 {dimension_numbers = #tpu.dot_dimension_numbers<[1], [0], [0], [1], [0, 0, 1, 1], [], []>} : vector<16x128xbf16>, vector<128x32xbf16>, vector<16x32xf32> -> vector<16x32xf32>
    %79 = tpu.reciprocal %77 {approx = true} : vector<16x32xf32> -> vector<16x32xf32>
    %80 = arith.mulf %78, %79 : vector<16x32xf32>
    %81 = arith.truncf %80 : vector<16x32xf32> to vector<16x32xbf16>
    %cst_32 = arith.constant dense<0.000000e+00> : vector<16x32xf32>
    %82 = tpu.matmul %81, %17, %cst_32 {dimension_numbers = #tpu.dot_dimension_numbers<[1], [0], [0], [1], [0, 0, 1, 1], [], []>} : vector<16x32xbf16>, vector<32x32xbf16>, vector<16x32xf32> -> vector<16x32xf32>
    %83 = vector.broadcast %18 : vector<1x32xf32> to vector<16x32xf32>
    %84 = arith.addf %82, %83 : vector<16x32xf32>
    %85 = vector.extract_strided_slice %0 {offsets = [32, 0], sizes = [16, 32], strides = [1, 1]} : vector<128x32xf32> to vector<16x32xf32>
    %86 = arith.addf %84, %85 : vector<16x32xf32>
    %c32 = arith.constant 32 : index
    %c0_33 = arith.constant 0 : index
    %87 = vector.load %arg8[%c32, %c0_33] : memref<128x32xf32, #tpu.memory_space<vmem>>, vector<16x32xf32>
    tpu.vector_store %arg8[%c32, %c0_33], %86 {strides = array<i32>} : memref<128x32xf32, #tpu.memory_space<vmem>>, vector<16x32xf32>,
    %88 = vector.extract_strided_slice %15 {offsets = [48, 0], sizes = [16, 32], strides = [1, 1]} : vector<128x96xbf16> to vector<16x32xbf16>
    %89 = vector.extract_strided_slice %15 {offsets = [48, 32], sizes = [16, 32], strides = [1, 1]} : vector<128x96xbf16> to vector<16x32xbf16>
    %90 = vector.extract_strided_slice %15 {offsets = [48, 64], sizes = [16, 32], strides = [1, 1]} : vector<128x96xbf16> to vector<16x32xbf16>
    %91 = tpu.concatenate %89, %89, %89, %89, %89, %89, %89, %89 in 0 : vector<16x32xbf16>, vector<16x32xbf16>, vector<16x32xbf16>, vector<16x32xbf16>, vector<16x32xbf16>, vector<16x32xbf16>, vector<16x32xbf16>, vector<16x32xbf16> -> vector<128x32xbf16>
    %92 = arith.mulf %91, %16 : vector<128x32xbf16>
    %93 = tpu.concatenate %90, %90, %90, %90, %90, %90, %90, %90 in 0 : vector<16x32xbf16>, vector<16x32xbf16>, vector<16x32xbf16>, vector<16x32xbf16>, vector<16x32xbf16>, vector<16x32xbf16>, vector<16x32xbf16>, vector<16x32xbf16> -> vector<128x32xbf16>
    %94 = arith.mulf %93, %16 : vector<128x32xbf16>
    %cst_34 = arith.constant dense<0.000000e+00> : vector<16x128xf32>
    %95 = tpu.matmul %88, %92, %cst_34 {dimension_numbers = #tpu.dot_dimension_numbers<[1], [1], [0], [0], [0, 0, 1, 0], [], []>} : vector<16x32xbf16>, vector<128x32xbf16>, vector<16x128xf32> -> vector<16x128xf32>
    %cst_35 = arith.constant 5.000000e-01 : f32
    %96 = vector.broadcast %cst_35 : f32 to vector<16x128xf32>
    %97 = arith.mulf %95, %96 : vector<16x128xf32>
    %98 = math.exp %97 : vector<16x128xf32>
    %99 = arith.truncf %98 : vector<16x128xf32> to vector<16x128xbf16>
    %cst_36 = arith.constant dense<0.000000e+00> : vector<16x32xf32>
    %100 = tpu.matmul %99, %16, %cst_36 {dimension_numbers = #tpu.dot_dimension_numbers<[1], [0], [0], [1], [0, 0, 1, 1], [], []>} : vector<16x128xbf16>, vector<128x32xbf16>, vector<16x32xf32> -> vector<16x32xf32>
    %cst_37 = arith.constant dense<0.000000e+00> : vector<16x32xf32>
    %101 = tpu.matmul %99, %94, %cst_37 {dimension_numbers = #tpu.dot_dimension_numbers<[1], [0], [0], [1], [0, 0, 1, 1], [], []>} : vector<16x128xbf16>, vector<128x32xbf16>, vector<16x32xf32> -> vector<16x32xf32>
    %102 = tpu.reciprocal %100 {approx = true} : vector<16x32xf32> -> vector<16x32xf32>
    %103 = arith.mulf %101, %102 : vector<16x32xf32>
    %104 = arith.truncf %103 : vector<16x32xf32> to vector<16x32xbf16>
    %cst_38 = arith.constant dense<0.000000e+00> : vector<16x32xf32>
    %105 = tpu.matmul %104, %17, %cst_38 {dimension_numbers = #tpu.dot_dimension_numbers<[1], [0], [0], [1], [0, 0, 1, 1], [], []>} : vector<16x32xbf16>, vector<32x32xbf16>, vector<16x32xf32> -> vector<16x32xf32>
    %106 = vector.broadcast %18 : vector<1x32xf32> to vector<16x32xf32>
    %107 = arith.addf %105, %106 : vector<16x32xf32>
    %108 = vector.extract_strided_slice %0 {offsets = [48, 0], sizes = [16, 32], strides = [1, 1]} : vector<128x32xf32> to vector<16x32xf32>
    %109 = arith.addf %107, %108 : vector<16x32xf32>
    %c48 = arith.constant 48 : index
    %c0_39 = arith.constant 0 : index
    %110 = vector.load %arg8[%c48, %c0_39] : memref<128x32xf32, #tpu.memory_space<vmem>>, vector<16x32xf32>
    tpu.vector_store %arg8[%c48, %c0_39], %109 {strides = array<i32>} : memref<128x32xf32, #tpu.memory_space<vmem>>, vector<16x32xf32>,
    %111 = vector.extract_strided_slice %15 {offsets = [64, 0], sizes = [16, 32], strides = [1, 1]} : vector<128x96xbf16> to vector<16x32xbf16>
    %112 = vector.extract_strided_slice %15 {offsets = [64, 32], sizes = [16, 32], strides = [1, 1]} : vector<128x96xbf16> to vector<16x32xbf16>
    %113 = vector.extract_strided_slice %15 {offsets = [64, 64], sizes = [16, 32], strides = [1, 1]} : vector<128x96xbf16> to vector<16x32xbf16>
    %114 = tpu.concatenate %112, %112, %112, %112, %112, %112, %112, %112 in 0 : vector<16x32xbf16>, vector<16x32xbf16>, vector<16x32xbf16>, vector<16x32xbf16>, vector<16x32xbf16>, vector<16x32xbf16>, vector<16x32xbf16>, vector<16x32xbf16> -> vector<128x32xbf16>
    %115 = arith.mulf %114, %16 : vector<128x32xbf16>
    %116 = tpu.concatenate %113, %113, %113, %113, %113, %113, %113, %113 in 0 : vector<16x32xbf16>, vector<16x32xbf16>, vector<16x32xbf16>, vector<16x32xbf16>, vector<16x32xbf16>, vector<16x32xbf16>, vector<16x32xbf16>, vector<16x32xbf16> -> vector<128x32xbf16>
    %117 = arith.mulf %116, %16 : vector<128x32xbf16>
    %cst_40 = arith.constant dense<0.000000e+00> : vector<16x128xf32>
    %118 = tpu.matmul %111, %115, %cst_40 {dimension_numbers = #tpu.dot_dimension_numbers<[1], [1], [0], [0], [0, 0, 1, 0], [], []>} : vector<16x32xbf16>, vector<128x32xbf16>, vector<16x128xf32> -> vector<16x128xf32>
    %cst_41 = arith.constant 5.000000e-01 : f32
    %119 = vector.broadcast %cst_41 : f32 to vector<16x128xf32>
    %120 = arith.mulf %118, %119 : vector<16x128xf32>
    %121 = math.exp %120 : vector<16x128xf32>
    %122 = arith.truncf %121 : vector<16x128xf32> to vector<16x128xbf16>
    %cst_42 = arith.constant dense<0.000000e+00> : vector<16x32xf32>
    %123 = tpu.matmul %122, %16, %cst_42 {dimension_numbers = #tpu.dot_dimension_numbers<[1], [0], [0], [1], [0, 0, 1, 1], [], []>} : vector<16x128xbf16>, vector<128x32xbf16>, vector<16x32xf32> -> vector<16x32xf32>
    %cst_43 = arith.constant dense<0.000000e+00> : vector<16x32xf32>
    %124 = tpu.matmul %122, %117, %cst_43 {dimension_numbers = #tpu.dot_dimension_numbers<[1], [0], [0], [1], [0, 0, 1, 1], [], []>} : vector<16x128xbf16>, vector<128x32xbf16>, vector<16x32xf32> -> vector<16x32xf32>
    %125 = tpu.reciprocal %123 {approx = true} : vector<16x32xf32> -> vector<16x32xf32>
    %126 = arith.mulf %124, %125 : vector<16x32xf32>
    %127 = arith.truncf %126 : vector<16x32xf32> to vector<16x32xbf16>
    %cst_44 = arith.constant dense<0.000000e+00> : vector<16x32xf32>
    %128 = tpu.matmul %127, %17, %cst_44 {dimension_numbers = #tpu.dot_dimension_numbers<[1], [0], [0], [1], [0, 0, 1, 1], [], []>} : vector<16x32xbf16>, vector<32x32xbf16>, vector<16x32xf32> -> vector<16x32xf32>
    %129 = vector.broadcast %18 : vector<1x32xf32> to vector<16x32xf32>
    %130 = arith.addf %128, %129 : vector<16x32xf32>
    %131 = vector.extract_strided_slice %0 {offsets = [64, 0], sizes = [16, 32], strides = [1, 1]} : vector<128x32xf32> to vector<16x32xf32>
    %132 = arith.addf %130, %131 : vector<16x32xf32>
    %c64 = arith.constant 64 : index
    %c0_45 = arith.constant 0 : index
    %133 = vector.load %arg8[%c64, %c0_45] : memref<128x32xf32, #tpu.memory_space<vmem>>, vector<16x32xf32>
    tpu.vector_store %arg8[%c64, %c0_45], %132 {strides = array<i32>} : memref<128x32xf32, #tpu.memory_space<vmem>>, vector<16x32xf32>,
    %134 = vector.extract_strided_slice %15 {offsets = [80, 0], sizes = [16, 32], strides = [1, 1]} : vector<128x96xbf16> to vector<16x32xbf16>
    %135 = vector.extract_strided_slice %15 {offsets = [80, 32], sizes = [16, 32], strides = [1, 1]} : vector<128x96xbf16> to vector<16x32xbf16>
    %136 = vector.extract_strided_slice %15 {offsets = [80, 64], sizes = [16, 32], strides = [1, 1]} : vector<128x96xbf16> to vector<16x32xbf16>
    %137 = tpu.concatenate %135, %135, %135, %135, %135, %135, %135, %135 in 0 : vector<16x32xbf16>, vector<16x32xbf16>, vector<16x32xbf16>, vector<16x32xbf16>, vector<16x32xbf16>, vector<16x32xbf16>, vector<16x32xbf16>, vector<16x32xbf16> -> vector<128x32xbf16>
    %138 = arith.mulf %137, %16 : vector<128x32xbf16>
    %139 = tpu.concatenate %136, %136, %136, %136, %136, %136, %136, %136 in 0 : vector<16x32xbf16>, vector<16x32xbf16>, vector<16x32xbf16>, vector<16x32xbf16>, vector<16x32xbf16>, vector<16x32xbf16>, vector<16x32xbf16>, vector<16x32xbf16> -> vector<128x32xbf16>
    %140 = arith.mulf %139, %16 : vector<128x32xbf16>
    %cst_46 = arith.constant dense<0.000000e+00> : vector<16x128xf32>
    %141 = tpu.matmul %134, %138, %cst_46 {dimension_numbers = #tpu.dot_dimension_numbers<[1], [1], [0], [0], [0, 0, 1, 0], [], []>} : vector<16x32xbf16>, vector<128x32xbf16>, vector<16x128xf32> -> vector<16x128xf32>
    %cst_47 = arith.constant 5.000000e-01 : f32
    %142 = vector.broadcast %cst_47 : f32 to vector<16x128xf32>
    %143 = arith.mulf %141, %142 : vector<16x128xf32>
    %144 = math.exp %143 : vector<16x128xf32>
    %145 = arith.truncf %144 : vector<16x128xf32> to vector<16x128xbf16>
    %cst_48 = arith.constant dense<0.000000e+00> : vector<16x32xf32>
    %146 = tpu.matmul %145, %16, %cst_48 {dimension_numbers = #tpu.dot_dimension_numbers<[1], [0], [0], [1], [0, 0, 1, 1], [], []>} : vector<16x128xbf16>, vector<128x32xbf16>, vector<16x32xf32> -> vector<16x32xf32>
    %cst_49 = arith.constant dense<0.000000e+00> : vector<16x32xf32>
    %147 = tpu.matmul %145, %140, %cst_49 {dimension_numbers = #tpu.dot_dimension_numbers<[1], [0], [0], [1], [0, 0, 1, 1], [], []>} : vector<16x128xbf16>, vector<128x32xbf16>, vector<16x32xf32> -> vector<16x32xf32>
    %148 = tpu.reciprocal %146 {approx = true} : vector<16x32xf32> -> vector<16x32xf32>
    %149 = arith.mulf %147, %148 : vector<16x32xf32>
    %150 = arith.truncf %149 : vector<16x32xf32> to vector<16x32xbf16>
    %cst_50 = arith.constant dense<0.000000e+00> : vector<16x32xf32>
    %151 = tpu.matmul %150, %17, %cst_50 {dimension_numbers = #tpu.dot_dimension_numbers<[1], [0], [0], [1], [0, 0, 1, 1], [], []>} : vector<16x32xbf16>, vector<32x32xbf16>, vector<16x32xf32> -> vector<16x32xf32>
    %152 = vector.broadcast %18 : vector<1x32xf32> to vector<16x32xf32>
    %153 = arith.addf %151, %152 : vector<16x32xf32>
    %154 = vector.extract_strided_slice %0 {offsets = [80, 0], sizes = [16, 32], strides = [1, 1]} : vector<128x32xf32> to vector<16x32xf32>
    %155 = arith.addf %153, %154 : vector<16x32xf32>
    %c80 = arith.constant 80 : index
    %c0_51 = arith.constant 0 : index
    %156 = vector.load %arg8[%c80, %c0_51] : memref<128x32xf32, #tpu.memory_space<vmem>>, vector<16x32xf32>
    tpu.vector_store %arg8[%c80, %c0_51], %155 {strides = array<i32>} : memref<128x32xf32, #tpu.memory_space<vmem>>, vector<16x32xf32>,
    %157 = vector.extract_strided_slice %15 {offsets = [96, 0], sizes = [16, 32], strides = [1, 1]} : vector<128x96xbf16> to vector<16x32xbf16>
    %158 = vector.extract_strided_slice %15 {offsets = [96, 32], sizes = [16, 32], strides = [1, 1]} : vector<128x96xbf16> to vector<16x32xbf16>
    %159 = vector.extract_strided_slice %15 {offsets = [96, 64], sizes = [16, 32], strides = [1, 1]} : vector<128x96xbf16> to vector<16x32xbf16>
    %160 = tpu.concatenate %158, %158, %158, %158, %158, %158, %158, %158 in 0 : vector<16x32xbf16>, vector<16x32xbf16>, vector<16x32xbf16>, vector<16x32xbf16>, vector<16x32xbf16>, vector<16x32xbf16>, vector<16x32xbf16>, vector<16x32xbf16> -> vector<128x32xbf16>
    %161 = arith.mulf %160, %16 : vector<128x32xbf16>
    %162 = tpu.concatenate %159, %159, %159, %159, %159, %159, %159, %159 in 0 : vector<16x32xbf16>, vector<16x32xbf16>, vector<16x32xbf16>, vector<16x32xbf16>, vector<16x32xbf16>, vector<16x32xbf16>, vector<16x32xbf16>, vector<16x32xbf16> -> vector<128x32xbf16>
    %163 = arith.mulf %162, %16 : vector<128x32xbf16>
    %cst_52 = arith.constant dense<0.000000e+00> : vector<16x128xf32>
    %164 = tpu.matmul %157, %161, %cst_52 {dimension_numbers = #tpu.dot_dimension_numbers<[1], [1], [0], [0], [0, 0, 1, 0], [], []>} : vector<16x32xbf16>, vector<128x32xbf16>, vector<16x128xf32> -> vector<16x128xf32>
    %cst_53 = arith.constant 5.000000e-01 : f32
    %165 = vector.broadcast %cst_53 : f32 to vector<16x128xf32>
    %166 = arith.mulf %164, %165 : vector<16x128xf32>
    %167 = math.exp %166 : vector<16x128xf32>
    %168 = arith.truncf %167 : vector<16x128xf32> to vector<16x128xbf16>
    %cst_54 = arith.constant dense<0.000000e+00> : vector<16x32xf32>
    %169 = tpu.matmul %168, %16, %cst_54 {dimension_numbers = #tpu.dot_dimension_numbers<[1], [0], [0], [1], [0, 0, 1, 1], [], []>} : vector<16x128xbf16>, vector<128x32xbf16>, vector<16x32xf32> -> vector<16x32xf32>
    %cst_55 = arith.constant dense<0.000000e+00> : vector<16x32xf32>
    %170 = tpu.matmul %168, %163, %cst_55 {dimension_numbers = #tpu.dot_dimension_numbers<[1], [0], [0], [1], [0, 0, 1, 1], [], []>} : vector<16x128xbf16>, vector<128x32xbf16>, vector<16x32xf32> -> vector<16x32xf32>
    %171 = tpu.reciprocal %169 {approx = true} : vector<16x32xf32> -> vector<16x32xf32>
    %172 = arith.mulf %170, %171 : vector<16x32xf32>
    %173 = arith.truncf %172 : vector<16x32xf32> to vector<16x32xbf16>
    %cst_56 = arith.constant dense<0.000000e+00> : vector<16x32xf32>
    %174 = tpu.matmul %173, %17, %cst_56 {dimension_numbers = #tpu.dot_dimension_numbers<[1], [0], [0], [1], [0, 0, 1, 1], [], []>} : vector<16x32xbf16>, vector<32x32xbf16>, vector<16x32xf32> -> vector<16x32xf32>
    %175 = vector.broadcast %18 : vector<1x32xf32> to vector<16x32xf32>
    %176 = arith.addf %174, %175 : vector<16x32xf32>
    %177 = vector.extract_strided_slice %0 {offsets = [96, 0], sizes = [16, 32], strides = [1, 1]} : vector<128x32xf32> to vector<16x32xf32>
    %178 = arith.addf %176, %177 : vector<16x32xf32>
    %c96 = arith.constant 96 : index
    %c0_57 = arith.constant 0 : index
    %179 = vector.load %arg8[%c96, %c0_57] : memref<128x32xf32, #tpu.memory_space<vmem>>, vector<16x32xf32>
    tpu.vector_store %arg8[%c96, %c0_57], %178 {strides = array<i32>} : memref<128x32xf32, #tpu.memory_space<vmem>>, vector<16x32xf32>,
    %180 = vector.extract_strided_slice %15 {offsets = [112, 0], sizes = [16, 32], strides = [1, 1]} : vector<128x96xbf16> to vector<16x32xbf16>
    %181 = vector.extract_strided_slice %15 {offsets = [112, 32], sizes = [16, 32], strides = [1, 1]} : vector<128x96xbf16> to vector<16x32xbf16>
    %182 = vector.extract_strided_slice %15 {offsets = [112, 64], sizes = [16, 32], strides = [1, 1]} : vector<128x96xbf16> to vector<16x32xbf16>
    %183 = tpu.concatenate %181, %181, %181, %181, %181, %181, %181, %181 in 0 : vector<16x32xbf16>, vector<16x32xbf16>, vector<16x32xbf16>, vector<16x32xbf16>, vector<16x32xbf16>, vector<16x32xbf16>, vector<16x32xbf16>, vector<16x32xbf16> -> vector<128x32xbf16>
    %184 = arith.mulf %183, %16 : vector<128x32xbf16>
    %185 = tpu.concatenate %182, %182, %182, %182, %182, %182, %182, %182 in 0 : vector<16x32xbf16>, vector<16x32xbf16>, vector<16x32xbf16>, vector<16x32xbf16>, vector<16x32xbf16>, vector<16x32xbf16>, vector<16x32xbf16>, vector<16x32xbf16> -> vector<128x32xbf16>
    %186 = arith.mulf %185, %16 : vector<128x32xbf16>
    %cst_58 = arith.constant dense<0.000000e+00> : vector<16x128xf32>
    %187 = tpu.matmul %180, %184, %cst_58 {dimension_numbers = #tpu.dot_dimension_numbers<[1], [1], [0], [0], [0, 0, 1, 0], [], []>} : vector<16x32xbf16>, vector<128x32xbf16>, vector<16x128xf32> -> vector<16x128xf32>
    %cst_59 = arith.constant 5.000000e-01 : f32
    %188 = vector.broadcast %cst_59 : f32 to vector<16x128xf32>
    %189 = arith.mulf %187, %188 : vector<16x128xf32>
    %190 = math.exp %189 : vector<16x128xf32>
    %191 = arith.truncf %190 : vector<16x128xf32> to vector<16x128xbf16>
    %cst_60 = arith.constant dense<0.000000e+00> : vector<16x32xf32>
    %192 = tpu.matmul %191, %16, %cst_60 {dimension_numbers = #tpu.dot_dimension_numbers<[1], [0], [0], [1], [0, 0, 1, 1], [], []>} : vector<16x128xbf16>, vector<128x32xbf16>, vector<16x32xf32> -> vector<16x32xf32>
    %cst_61 = arith.constant dense<0.000000e+00> : vector<16x32xf32>
    %193 = tpu.matmul %191, %186, %cst_61 {dimension_numbers = #tpu.dot_dimension_numbers<[1], [0], [0], [1], [0, 0, 1, 1], [], []>} : vector<16x128xbf16>, vector<128x32xbf16>, vector<16x32xf32> -> vector<16x32xf32>
    %194 = tpu.reciprocal %192 {approx = true} : vector<16x32xf32> -> vector<16x32xf32>
    %195 = arith.mulf %193, %194 : vector<16x32xf32>
    %196 = arith.truncf %195 : vector<16x32xf32> to vector<16x32xbf16>
    %cst_62 = arith.constant dense<0.000000e+00> : vector<16x32xf32>
    %197 = tpu.matmul %196, %17, %cst_62 {dimension_numbers = #tpu.dot_dimension_numbers<[1], [0], [0], [1], [0, 0, 1, 1], [], []>} : vector<16x32xbf16>, vector<32x32xbf16>, vector<16x32xf32> -> vector<16x32xf32>
    %198 = vector.broadcast %18 : vector<1x32xf32> to vector<16x32xf32>
    %199 = arith.addf %197, %198 : vector<16x32xf32>
    %200 = vector.extract_strided_slice %0 {offsets = [112, 0], sizes = [16, 32], strides = [1, 1]} : vector<128x32xf32> to vector<16x32xf32>
    %201 = arith.addf %199, %200 : vector<16x32xf32>
    %c112 = arith.constant 112 : index
    %c0_63 = arith.constant 0 : index
    %202 = vector.load %arg8[%c112, %c0_63] : memref<128x32xf32, #tpu.memory_space<vmem>>, vector<16x32xf32>
    tpu.vector_store %arg8[%c112, %c0_63], %201 {strides = array<i32>} : memref<128x32xf32, #tpu.memory_space<vmem>>, vector<16x32xf32>,
    return
  }
  func.func @transform_0(%arg0: i32) -> (i32, i32) {
    %c0_i32 = arith.constant 0 : i32
    %c0_i32_0 = arith.constant 0 : i32
    return %arg0, %c0_i32 : i32, i32
  }
  func.func @transform_1(%arg0: i32) -> (i32, i32) {
    %c0_i32 = arith.constant 0 : i32
    %c0_i32_0 = arith.constant 0 : i32
    %c0_i32_1 = arith.constant 0 : i32
    return %c0_i32, %c0_i32_0 : i32, i32
  }
  func.func @transform_2(%arg0: i32) -> (i32, i32) {
    %c0_i32 = arith.constant 0 : i32
    %c0_i32_0 = arith.constant 0 : i32
    %c0_i32_1 = arith.constant 0 : i32
    return %c0_i32, %c0_i32_0 : i32, i32
  }
  func.func @transform_3(%arg0: i32) -> (i32, i32) {
    %c0_i32 = arith.constant 0 : i32
    %c0_i32_0 = arith.constant 0 : i32
    %c0_i32_1 = arith.constant 0 : i32
    return %c0_i32, %c0_i32_0 : i32, i32
  }
  func.func @transform_4(%arg0: i32) -> (i32, i32) {
    %c0_i32 = arith.constant 0 : i32
    %c0_i32_0 = arith.constant 0 : i32
    %c0_i32_1 = arith.constant 0 : i32
    return %c0_i32, %c0_i32_0 : i32, i32
  }
  func.func @transform_5(%arg0: i32) -> (i32, i32) {
    %c0_i32 = arith.constant 0 : i32
    %c0_i32_0 = arith.constant 0 : i32
    %c0_i32_1 = arith.constant 0 : i32
    return %c0_i32, %c0_i32_0 : i32, i32
  }
  func.func @transform_6(%arg0: i32) -> (i32, i32) {
    %c0_i32 = arith.constant 0 : i32
    %c0_i32_0 = arith.constant 0 : i32
    %c0_i32_1 = arith.constant 0 : i32
    return %c0_i32, %c0_i32_0 : i32, i32
  }
  func.func @transform_7(%arg0: i32) -> (i32, i32) {
    %c0_i32 = arith.constant 0 : i32
    %c0_i32_0 = arith.constant 0 : i32
    return %arg0, %c0_i32 : i32, i32
  }
}

</mosaic_0001>

<llo_original>
// kernel: tpu_custom_call.1
$region0: #{tpu_custom_call.1}
  #allocation0 [shape = 'u32[]', space=smem, size = 0x4, offset = 0x4, fixed_abs, tag = 'smem constant byte address 0x4 - core index']
  #allocation1 [shape = 'u32[144,128]{1,0:T(1,128)}', space=vmem, size = 0x12000, scoped, tag = 'internal scratch']
  %s0 = inlined_call_operand.vmem [shape: f32[128,32], index: 0, kind: input, shape index: {}]
  %s1 = inlined_call_operand.vmem [shape: bf16[32,96], index: 1, kind: input, shape index: {}]
  %s2 = inlined_call_operand.vmem [shape: f32[1,96], index: 2, kind: input, shape index: {}]
  %s3 = inlined_call_operand.vmem [shape: bf16[96,96], index: 3, kind: input, shape index: {}]
  %s4 = inlined_call_operand.vmem [shape: bf16[128,32], index: 4, kind: input, shape index: {}]
  %s5 = inlined_call_operand.vmem [shape: bf16[32,32], index: 5, kind: input, shape index: {}]
  %s6 = inlined_call_operand.vmem [shape: f32[1,32], index: 6, kind: input, shape index: {}]
  %s7 = inlined_call_operand.vmem [shape: f32[128,32], index: 7, kind: output, shape index: {}]
  %s8 = sld [smem:[#allocation0]]
  $region38: #{tpu_custom_call.1} parent=0
    _
  %s10 = ssub.s32 1, %s8
  %s11 = scalar_select 0, %s10, %s8
  // Predicated region
  $region2: #{tpu_custom_call.1} parent=0 // pred_check
    _
  $region3: #{tpu_custom_call.1} parent=0 // pred_check_branch
    %13 = sbr.rel (0) target = $region5
  $region4: #{tpu_custom_call.1} parent=0 // pred_region
    _
  $region5: #{tpu_custom_call.1} parent=0 // pred_fallthru
    _
  // Predicated region
  $region6: #{tpu_custom_call.1} parent=0 // pred_check
    _
  $region7: #{tpu_custom_call.1} parent=0 // pred_check_branch
    %15 = sbr.rel (0) target = $region9
  $region8: #{tpu_custom_call.1} parent=0 // pred_region
    _
  $region9: #{tpu_custom_call.1} parent=0 // pred_fallthru
    _
  // Predicated region
  $region10: #{tpu_custom_call.1} parent=0 // pred_check
    _
  $region11: #{tpu_custom_call.1} parent=0 // pred_check_branch
    %17 = sbr.rel (0) target = $region13
  $region12: #{tpu_custom_call.1} parent=0 // pred_region
    _
  $region13: #{tpu_custom_call.1} parent=0 // pred_fallthru
    _
  // Predicated region
  $region14: #{tpu_custom_call.1} parent=0 // pred_check
    _
  $region15: #{tpu_custom_call.1} parent=0 // pred_check_branch
    %19 = sbr.rel (0) target = $region17
  $region16: #{tpu_custom_call.1} parent=0 // pred_region
    _
  $region17: #{tpu_custom_call.1} parent=0 // pred_fallthru
    _
  // Predicated region
  $region18: #{tpu_custom_call.1} parent=0 // pred_check
    _
  $region19: #{tpu_custom_call.1} parent=0 // pred_check_branch
    %21 = sbr.rel (0) target = $region21
  $region20: #{tpu_custom_call.1} parent=0 // pred_region
    _
  $region21: #{tpu_custom_call.1} parent=0 // pred_fallthru
    _
  // Predicated region
  $region22: #{tpu_custom_call.1} parent=0 // pred_check
    _
  $region23: #{tpu_custom_call.1} parent=0 // pred_check_branch
    %23 = sbr.rel (0) target = $region25
  $region24: #{tpu_custom_call.1} parent=0 // pred_region
    _
  $region25: #{tpu_custom_call.1} parent=0 // pred_fallthru
    _
  // Predicated region
  $region26: #{tpu_custom_call.1} parent=0 // pred_check
    _
  $region27: #{tpu_custom_call.1} parent=0 // pred_check_branch
    %25 = sbr.rel (0) target = $region29
  $region28: #{tpu_custom_call.1} parent=0 // pred_region
    _
  $region29: #{tpu_custom_call.1} parent=0 // pred_fallthru
    _
  %v27 = vld [vmem:[%s0] sm:$0xff]
  %v28 = vld [vmem:[%s0 + $0x8] sm:$0xff]
  %v29 = vld [vmem:[%s0 + $0x10] sm:$0xff]
  %v30 = vld [vmem:[%s0 + $0x18] sm:$0xff]
  %v31 = vld [vmem:[%s0 + $0x20] sm:$0xff]
  %v32 = vld [vmem:[%s0 + $0x28] sm:$0xff]
  %v33 = vld [vmem:[%s0 + $0x30] sm:$0xff]
  %v34 = vld [vmem:[%s0 + $0x38] sm:$0xff]
  %v35 = vld [vmem:[%s0 + $0x40] sm:$0xff]
  %v36 = vld [vmem:[%s0 + $0x48] sm:$0xff]
  %v37 = vld [vmem:[%s0 + $0x50] sm:$0xff]
  %v38 = vld [vmem:[%s0 + $0x58] sm:$0xff]
  %v39 = vld [vmem:[%s0 + $0x60] sm:$0xff]
  %v40 = vld [vmem:[%s0 + $0x68] sm:$0xff]
  %v41 = vld [vmem:[%s0 + $0x70] sm:$0xff]
  %v42 = vld [vmem:[%s0 + $0x78] sm:$0xff]
  %v43 = vpack.c.bf16 %v28, %v27
  %v44 = vpack.c.bf16 %v30, %v29
  %v45 = vpack.c.bf16 %v32, %v31
  %v46 = vpack.c.bf16 %v34, %v33
  %v47 = vpack.c.bf16 %v36, %v35
  %v48 = vpack.c.bf16 %v38, %v37
  %v49 = vpack.c.bf16 %v40, %v39
  %v50 = vpack.c.bf16 %v42, %v41
  %v51 = vld [vmem:[%s1] sm:$0xf]
  %v52 = vld [vmem:[%s1 + $0x4] sm:$0xf]
  %v53 = vld [vmem:[%s1 + $0x8] sm:$0xf]
  %v54 = vld [vmem:[%s1 + $0xc] sm:$0xf]
  %v55 = vld [vmem:[%s2] sm:$0x1]
  %v57 = vlaneseq
  %v58 = vshrl.u32 %v57, 7
  %v59 = vsub.s32 0, %v58
  %v60 = vrot.slane %v55, %v59
  %v66 = vunpack.c.l.b16 %v51
  %v67 = vunpack.c.l.b16 %v52
  %v68 = vunpack.c.l.b16 %v53
  %v69 = vunpack.c.l.b16 %v54
  %v70 = vpack.c.b16 %v67, %v66
  %v71 = vpack.c.b16 %v69, %v68
  %vm74 = vcmask 261120
  %v76 = vsel %vm74, %v43, 0
  %v79 = vsel %vm74, %v44, 0
  %v82 = vsel %vm74, %v45, 0
  %v85 = vsel %vm74, %v46, 0
  %v88 = vsel %vm74, %v47, 0
  %v91 = vsel %vm74, %v48, 0
  %v94 = vsel %vm74, %v49, 0
  %v97 = vsel %vm74, %v50, 0
  %99 = vmatprep.subr.bf16.mxu0 0
  %100 = vmatpush1.bf16.msra.mxu0 0
  %101 = vmatprep.subr.bf16.mxu0 0
  %102 = vmatpush1.bf16.msra.mxu0 0
  %103 = vmatprep.subr.bf16.mxu0 0
  %104 = vmatpush1.bf16.msra.mxu0 0
  %105 = vmatprep.subr.bf16.mxu0 0
  %106 = vmatpush1.bf16.msra.mxu0 0
  %107 = vmatprep.subr.bf16.mxu0 0
  %108 = vmatpush1.bf16.msra.mxu0 0
  %109 = vmatprep.subr.bf16.mxu0 0
  %110 = vmatpush1.bf16.msra.mxu0 0
  %111 = vmatprep.subr.bf16.mxu0 0
  %112 = vmatpush1.bf16.msra.mxu0 %v71
  %113 = vmatprep.subr.bf16.mxu0 0
  %114 = vmatpush1.bf16.msra.mxu0 %v70
  %115 = vmatprep.subr.bf16.mxu0 0
  %116 = vmatpush2.bf16.msra.mxu0 0
  %117 = vmatprep.subr.bf16.mxu0 0
  %118 = vmatpush2.bf16.msra.mxu0 0
  %119 = vmatprep.subr.bf16.mxu0 0
  %120 = vmatpush2.bf16.msra.mxu0 0
  %121 = vmatprep.subr.bf16.mxu0 0
  %122 = vmatpush2.bf16.msra.mxu0 0
  %123 = vmatprep.subr.bf16.mxu0 0
  %124 = vmatpush2.bf16.msra.mxu0 0
  %125 = vmatprep.subr.bf16.mxu0 0
  %126 = vmatpush2.bf16.msra.mxu0 0
  %127 = vmatprep.subr.bf16.mxu0 0
  %128 = vmatpush2.bf16.msra.mxu0 0
  %129 = vmatprep.subr.bf16.mxu0 0
  %130 = vmatpush2.bf16.msra.mxu0 0
  %131 = vmatprep.mubr.bf16.mxu0 0
  %132 = vmatmul.mubr.bf16.gmra.mxu0 %v76
  %v133 = vpop.f32.mrf.mxu0
  %v134 = vadd.f32 %v60, %v133
  %v135 = vpop.f32.mrf.mxu0
  %v136 = vpop.f32.mrf.mxu0
  %v137 = vadd.f32 %v60, %v136
  %v138 = vpop.f32.mrf.mxu0
  %139 = vmatprep.mubr.bf16.mxu0 0
  %140 = vmatmul.mubr.bf16.gmra.mxu0 %v79
  %v141 = vpop.f32.mrf.mxu0
  %v142 = vadd.f32 %v60, %v141
  %v143 = vpop.f32.mrf.mxu0
  %v144 = vpop.f32.mrf.mxu0
  %v145 = vadd.f32 %v60, %v144
  %v146 = vpop.f32.mrf.mxu0
  %147 = vmatprep.mubr.bf16.mxu0 0
  %148 = vmatmul.mubr.bf16.gmra.mxu0 %v82
  %v149 = vpop.f32.mrf.mxu0
  %v150 = vadd.f32 %v60, %v149
  %v151 = vpop.f32.mrf.mxu0
  %v152 = vpop.f32.mrf.mxu0
  %v153 = vadd.f32 %v60, %v152
  %v154 = vpop.f32.mrf.mxu0
  %155 = vmatprep.mubr.bf16.mxu0 0
  %156 = vmatmul.mubr.bf16.gmra.mxu0 %v85
  %v157 = vpop.f32.mrf.mxu0
  %v158 = vadd.f32 %v60, %v157
  %v159 = vpop.f32.mrf.mxu0
  %v160 = vpop.f32.mrf.mxu0
  %v161 = vadd.f32 %v60, %v160
  %v162 = vpop.f32.mrf.mxu0
  %163 = vmatprep.mubr.bf16.mxu0 0
  %164 = vmatmul.mubr.bf16.gmra.mxu0 %v88
  %v165 = vpop.f32.mrf.mxu0
  %v166 = vadd.f32 %v60, %v165
  %v167 = vpop.f32.mrf.mxu0
  %v168 = vpop.f32.mrf.mxu0
  %v169 = vadd.f32 %v60, %v168
  %v170 = vpop.f32.mrf.mxu0
  %171 = vmatprep.mubr.bf16.mxu0 0
  %172 = vmatmul.mubr.bf16.gmra.mxu0 %v91
  %v173 = vpop.f32.mrf.mxu0
  %v174 = vadd.f32 %v60, %v173
  %v175 = vpop.f32.mrf.mxu0
  %v176 = vpop.f32.mrf.mxu0
  %v177 = vadd.f32 %v60, %v176
  %v178 = vpop.f32.mrf.mxu0
  %179 = vmatprep.mubr.bf16.mxu0 0
  %180 = vmatmul.mubr.bf16.gmra.mxu0 %v94
  %v181 = vpop.f32.mrf.mxu0
  %v182 = vadd.f32 %v60, %v181
  %v183 = vpop.f32.mrf.mxu0
  %v184 = vpop.f32.mrf.mxu0
  %v185 = vadd.f32 %v60, %v184
  %v186 = vpop.f32.mrf.mxu0
  %187 = vmatprep.mubr.bf16.mxu0 0
  %188 = vmatmul.mubr.bf16.gmra.mxu0 %v97
  %v189 = vpop.f32.mrf.mxu0
  %v190 = vadd.f32 %v60, %v189
  %v191 = vpop.f32.mrf.mxu0
  %v192 = vpop.f32.mrf.mxu0
  %v193 = vadd.f32 %v60, %v192
  %v194 = vpop.f32.mrf.mxu0
  %195 = vdwg.mxu0
  %v196 = vmul.f32 %v134, %v134
  %v197 = vmul.f32 %v137, %v137
  %v198 = vmul.f32 %v142, %v142
  %v199 = vmul.f32 %v145, %v145
  %v200 = vmul.f32 %v150, %v150
  %v201 = vmul.f32 %v153, %v153
  %v202 = vmul.f32 %v158, %v158
  %v203 = vmul.f32 %v161, %v161
  %v204 = vmul.f32 %v166, %v166
  %v205 = vmul.f32 %v169, %v169
  %v206 = vmul.f32 %v174, %v174
  %v207 = vmul.f32 %v177, %v177
  %v208 = vmul.f32 %v182, %v182
  %v209 = vmul.f32 %v185, %v185
  %v210 = vmul.f32 %v190, %v190
  %v211 = vmul.f32 %v193, %v193
  %v212 = vpack.c.bf16 %v197, %v196
  %v213 = vpack.c.bf16 %v199, %v198
  %v214 = vpack.c.bf16 %v201, %v200
  %v215 = vpack.c.bf16 %v203, %v202
  %v216 = vpack.c.bf16 %v205, %v204
  %v217 = vpack.c.bf16 %v207, %v206
  %v218 = vpack.c.bf16 %v209, %v208
  %v219 = vpack.c.bf16 %v211, %v210
  %v220 = vld [vmem:[%s3] sm:$0xf]
  %v221 = vld [vmem:[%s3 + $0x4] sm:$0xf]
  %v222 = vld [vmem:[%s3 + $0x8] sm:$0xf]
  %v223 = vld [vmem:[%s3 + $0xc] sm:$0xf]
  %v224 = vld [vmem:[%s3 + $0x10] sm:$0xf]
  %v225 = vld [vmem:[%s3 + $0x14] sm:$0xf]
  %v226 = vld [vmem:[%s3 + $0x18] sm:$0xf]
  %v227 = vld [vmem:[%s3 + $0x1c] sm:$0xf]
  %v228 = vld [vmem:[%s3 + $0x20] sm:$0xf]
  %v229 = vld [vmem:[%s3 + $0x24] sm:$0xf]
  %v230 = vld [vmem:[%s3 + $0x28] sm:$0xf]
  %v231 = vld [vmem:[%s3 + $0x2c] sm:$0xf]
  %v244 = vunpack.c.l.b16 %v220
  %v245 = vunpack.c.l.b16 %v221
  %v246 = vunpack.c.l.b16 %v222
  %v247 = vunpack.c.l.b16 %v223
  %v248 = vunpack.c.l.b16 %v224
  %v249 = vunpack.c.l.b16 %v225
  %v250 = vunpack.c.l.b16 %v226
  %v251 = vunpack.c.l.b16 %v227
  %v252 = vunpack.c.l.b16 %v228
  %v253 = vunpack.c.l.b16 %v229
  %v254 = vunpack.c.l.b16 %v230
  %v255 = vunpack.c.l.b16 %v231
  %v256 = vpack.c.b16 %v245, %v244
  %v257 = vpack.c.b16 %v247, %v246
  %v258 = vpack.c.b16 %v249, %v248
  %v259 = vpack.c.b16 %v251, %v250
  %v260 = vpack.c.b16 %v253, %v252
  %v261 = vpack.c.b16 %v255, %v254
  %vm268 = vcmask 785408
  %v270 = vsel %vm268, %v212, 0
  %v273 = vsel %vm268, %v213, 0
  %v276 = vsel %vm268, %v214, 0
  %v279 = vsel %vm268, %v215, 0
  %v282 = vsel %vm268, %v216, 0
  %v285 = vsel %vm268, %v217, 0
  %v288 = vsel %vm268, %v218, 0
  %v291 = vsel %vm268, %v219, 0
  %293 = vmatprep.subr.bf16.mxu0 0
  %294 = vmatpush1.bf16.msra.mxu0 0
  %295 = vmatprep.subr.bf16.mxu0 0
  %296 = vmatpush1.bf16.msra.mxu0 0
  %297 = vmatprep.subr.bf16.mxu0 0
  %298 = vmatpush1.bf16.msra.mxu0 %v261
  %299 = vmatprep.subr.bf16.mxu0 0
  %300 = vmatpush1.bf16.msra.mxu0 %v260
  %301 = vmatprep.subr.bf16.mxu0 0
  %302 = vmatpush1.bf16.msra.mxu0 %v259
  %303 = vmatprep.subr.bf16.mxu0 0
  %304 = vmatpush1.bf16.msra.mxu0 %v258
  %305 = vmatprep.subr.bf16.mxu0 0
  %306 = vmatpush1.bf16.msra.mxu0 %v257
  %307 = vmatprep.subr.bf16.mxu0 0
  %308 = vmatpush1.bf16.msra.mxu0 %v256
  %309 = vmatprep.subr.bf16.mxu0 0
  %310 = vmatpush2.bf16.msra.mxu0 0
  %311 = vmatprep.subr.bf16.mxu0 0
  %312 = vmatpush2.bf16.msra.mxu0 0
  %313 = vmatprep.subr.bf16.mxu0 0
  %314 = vmatpush2.bf16.msra.mxu0 0
  %315 = vmatprep.subr.bf16.mxu0 0
  %316 = vmatpush2.bf16.msra.mxu0 0
  %317 = vmatprep.subr.bf16.mxu0 0
  %318 = vmatpush2.bf16.msra.mxu0 0
  %319 = vmatprep.subr.bf16.mxu0 0
  %320 = vmatpush2.bf16.msra.mxu0 0
  %321 = vmatprep.subr.bf16.mxu0 0
  %322 = vmatpush2.bf16.msra.mxu0 0
  %323 = vmatprep.subr.bf16.mxu0 0
  %324 = vmatpush2.bf16.msra.mxu0 0
  %325 = vmatprep.mubr.bf16.mxu0 0
  %326 = vmatmul.mubr.bf16.gmra.mxu0 %v270
  %v327 = vpop.f32.mrf.mxu0
  %v328 = vadd.f32 0.0, %v327
  %v329 = vpop.f32.mrf.mxu0
  %v330 = vpop.f32.mrf.mxu0
  %v331 = vadd.f32 0.0, %v330
  %v332 = vpop.f32.mrf.mxu0
  %333 = vmatprep.mubr.bf16.mxu0 0
  %334 = vmatmul.mubr.bf16.gmra.mxu0 %v273
  %v335 = vpop.f32.mrf.mxu0
  %v336 = vadd.f32 0.0, %v335
  %v337 = vpop.f32.mrf.mxu0
  %v338 = vpop.f32.mrf.mxu0
  %v339 = vadd.f32 0.0, %v338
  %v340 = vpop.f32.mrf.mxu0
  %341 = vmatprep.mubr.bf16.mxu0 0
  %342 = vmatmul.mubr.bf16.gmra.mxu0 %v276
  %v343 = vpop.f32.mrf.mxu0
  %v344 = vadd.f32 0.0, %v343
  %v345 = vpop.f32.mrf.mxu0
  %v346 = vpop.f32.mrf.mxu0
  %v347 = vadd.f32 0.0, %v346
  %v348 = vpop.f32.mrf.mxu0
  %349 = vmatprep.mubr.bf16.mxu0 0
  %350 = vmatmul.mubr.bf16.gmra.mxu0 %v279
  %v351 = vpop.f32.mrf.mxu0
  %v352 = vadd.f32 0.0, %v351
  %v353 = vpop.f32.mrf.mxu0
  %v354 = vpop.f32.mrf.mxu0
  %v355 = vadd.f32 0.0, %v354
  %v356 = vpop.f32.mrf.mxu0
  %357 = vmatprep.mubr.bf16.mxu0 0
  %358 = vmatmul.mubr.bf16.gmra.mxu0 %v282
  %v359 = vpop.f32.mrf.mxu0
  %v360 = vadd.f32 0.0, %v359
  %v361 = vpop.f32.mrf.mxu0
  %v362 = vpop.f32.mrf.mxu0
  %v363 = vadd.f32 0.0, %v362
  %v364 = vpop.f32.mrf.mxu0
  %365 = vmatprep.mubr.bf16.mxu0 0
  %366 = vmatmul.mubr.bf16.gmra.mxu0 %v285
  %v367 = vpop.f32.mrf.mxu0
  %v368 = vadd.f32 0.0, %v367
  %v369 = vpop.f32.mrf.mxu0
  %v370 = vpop.f32.mrf.mxu0
  %v371 = vadd.f32 0.0, %v370
  %v372 = vpop.f32.mrf.mxu0
  %373 = vmatprep.mubr.bf16.mxu0 0
  %374 = vmatmul.mubr.bf16.gmra.mxu0 %v288
  %v375 = vpop.f32.mrf.mxu0
  %v376 = vadd.f32 0.0, %v375
  %v377 = vpop.f32.mrf.mxu0
  %v378 = vpop.f32.mrf.mxu0
  %v379 = vadd.f32 0.0, %v378
  %v380 = vpop.f32.mrf.mxu0
  %381 = vmatprep.mubr.bf16.mxu0 0
  %382 = vmatmul.mubr.bf16.gmra.mxu0 %v291
  %v383 = vpop.f32.mrf.mxu0
  %v384 = vadd.f32 0.0, %v383
  %v385 = vpop.f32.mrf.mxu0
  %v386 = vpop.f32.mrf.mxu0
  %v387 = vadd.f32 0.0, %v386
  %v388 = vpop.f32.mrf.mxu0
  %389 = vdwg.mxu0
  %v390 = vmax.f32 %v328, 1e-24
  %v391 = vmax.f32 %v331, 1e-24
  %v392 = vmax.f32 %v336, 1e-24
  %v393 = vmax.f32 %v339, 1e-24
  %v394 = vmax.f32 %v344, 1e-24
  %v395 = vmax.f32 %v347, 1e-24
  %v396 = vmax.f32 %v352, 1e-24
  %v397 = vmax.f32 %v355, 1e-24
  %v398 = vmax.f32 %v360, 1e-24
  %v399 = vmax.f32 %v363, 1e-24
  %v400 = vmax.f32 %v368, 1e-24
  %v401 = vmax.f32 %v371, 1e-24
  %v402 = vmax.f32 %v376, 1e-24
  %v403 = vmax.f32 %v379, 1e-24
  %v404 = vmax.f32 %v384, 1e-24
  %v405 = vmax.f32 %v387, 1e-24
  %v406 = vrsqrt.pop %v390
  %v407 = vrsqrt.pop %v391
  %v408 = vrsqrt.pop %v392
  %v409 = vrsqrt.pop %v393
  %v410 = vrsqrt.pop %v394
  %v411 = vrsqrt.pop %v395
  %v412 = vrsqrt.pop %v396
  %v413 = vrsqrt.pop %v397
  %v414 = vrsqrt.pop %v398
  %v415 = vrsqrt.pop %v399
  %v416 = vrsqrt.pop %v400
  %v417 = vrsqrt.pop %v401
  %v418 = vrsqrt.pop %v402
  %v419 = vrsqrt.pop %v403
  %v420 = vrsqrt.pop %v404
  %v421 = vrsqrt.pop %v405
  %v422 = vmul.f32 %v134, %v406
  %v423 = vmul.f32 %v137, %v407
  %v424 = vmul.f32 %v142, %v408
  %v425 = vmul.f32 %v145, %v409
  %v426 = vmul.f32 %v150, %v410
  %v427 = vmul.f32 %v153, %v411
  %v428 = vmul.f32 %v158, %v412
  %v429 = vmul.f32 %v161, %v413
  %v430 = vmul.f32 %v166, %v414
  %v431 = vmul.f32 %v169, %v415
  %v432 = vmul.f32 %v174, %v416
  %v433 = vmul.f32 %v177, %v417
  %v434 = vmul.f32 %v182, %v418
  %v435 = vmul.f32 %v185, %v419
  %v436 = vmul.f32 %v190, %v420
  %v437 = vmul.f32 %v193, %v421
  %v438 = vpack.c.bf16 %v423, %v422
  %v439 = vpack.c.bf16 %v425, %v424
  %v440 = vpack.c.bf16 %v427, %v426
  %v441 = vpack.c.bf16 %v429, %v428
  %v442 = vpack.c.bf16 %v431, %v430
  %v443 = vpack.c.bf16 %v433, %v432
  %v444 = vpack.c.bf16 %v435, %v434
  %v445 = vpack.c.bf16 %v437, %v436
  %v446 = vld [vmem:[%s4] sm:$0xf]
  %v447 = vld [vmem:[%s4 + $0x4] sm:$0xf]
  %v448 = vld [vmem:[%s4 + $0x8] sm:$0xf]
  %v449 = vld [vmem:[%s4 + $0xc] sm:$0xf]
  %v450 = vld [vmem:[%s4 + $0x10] sm:$0xf]
  %v451 = vld [vmem:[%s4 + $0x14] sm:$0xf]
  %v452 = vld [vmem:[%s4 + $0x18] sm:$0xf]
  %v453 = vld [vmem:[%s4 + $0x1c] sm:$0xf]
  %v454 = vld [vmem:[%s4 + $0x20] sm:$0xf]
  %v455 = vld [vmem:[%s4 + $0x24] sm:$0xf]
  %v456 = vld [vmem:[%s4 + $0x28] sm:$0xf]
  %v457 = vld [vmem:[%s4 + $0x2c] sm:$0xf]
  %v458 = vld [vmem:[%s4 + $0x30] sm:$0xf]
  %v459 = vld [vmem:[%s4 + $0x34] sm:$0xf]
  %v460 = vld [vmem:[%s4 + $0x38] sm:$0xf]
  %v461 = vld [vmem:[%s4 + $0x3c] sm:$0xf]
  %v462 = vld [vmem:[%s5] sm:$0xf]
  %v463 = vld [vmem:[%s5 + $0x4] sm:$0xf]
  %v464 = vld [vmem:[%s5 + $0x8] sm:$0xf]
  %v465 = vld [vmem:[%s5 + $0xc] sm:$0xf]
  %v466 = vld [vmem:[%s6] sm:$0x1]
  %v483 = vunpack.c.l.b16 %v446
  %v484 = vunpack.c.l.b16 %v447
  %v485 = vunpack.c.l.b16 %v448
  %v486 = vunpack.c.l.b16 %v449
  %v487 = vunpack.c.l.b16 %v450
  %v488 = vunpack.c.l.b16 %v451
  %v489 = vunpack.c.l.b16 %v452
  %v490 = vunpack.c.l.b16 %v453
  %v491 = vunpack.c.l.b16 %v454
  %v492 = vunpack.c.l.b16 %v455
  %v493 = vunpack.c.l.b16 %v456
  %v494 = vunpack.c.l.b16 %v457
  %v495 = vunpack.c.l.b16 %v458
  %v496 = vunpack.c.l.b16 %v459
  %v497 = vunpack.c.l.b16 %v460
  %v498 = vunpack.c.l.b16 %v461
  %v499 = vpack.c.b16 %v484, %v483
  %v500 = vpack.c.b16 %v486, %v485
  %v501 = vpack.c.b16 %v488, %v487
  %v502 = vpack.c.b16 %v490, %v489
  %v503 = vpack.c.b16 %v492, %v491
  %v504 = vpack.c.b16 %v494, %v493
  %v505 = vpack.c.b16 %v496, %v495
  %v506 = vpack.c.b16 %v498, %v497
  %507 = vrot.lane.b32.xlu0 %v499, 32
  %v508 = vpop.permute.xlu0 %507
  %509 = vrot.lane.b32.xlu0 %v500, 32
  %v510 = vpop.permute.xlu0 %509
  %511 = vrot.lane.b32.xlu0 %v501, 32
  %v512 = vpop.permute.xlu0 %511
  %513 = vrot.lane.b32.xlu0 %v502, 32
  %v514 = vpop.permute.xlu0 %513
  %515 = vrot.lane.b32.xlu0 %v503, 32
  %v516 = vpop.permute.xlu0 %515
  %517 = vrot.lane.b32.xlu0 %v504, 32
  %v518 = vpop.permute.xlu0 %517
  %519 = vrot.lane.b32.xlu0 %v505, 32
  %v520 = vpop.permute.xlu0 %519
  %521 = vrot.lane.b32.xlu0 %v506, 32
  %v522 = vpop.permute.xlu0 %521
  %v531 = vmul.bf16 %v438, %v508
  %v532 = vmul.bf16 %v438, %v510
  %v533 = vmul.bf16 %v438, %v512
  %v534 = vmul.bf16 %v438, %v514
  %v535 = vmul.bf16 %v438, %v516
  %v536 = vmul.bf16 %v438, %v518
  %v537 = vmul.bf16 %v438, %v520
  %v538 = vmul.bf16 %v438, %v522
  %539 = vrot.lane.b32.xlu0 %v499, 64
  %v540 = vpop.permute.xlu0 %539
  %541 = vrot.lane.b32.xlu0 %v500, 64
  %v542 = vpop.permute.xlu0 %541
  %543 = vrot.lane.b32.xlu0 %v501, 64
  %v544 = vpop.permute.xlu0 %543
  %545 = vrot.lane.b32.xlu0 %v502, 64
  %v546 = vpop.permute.xlu0 %545
  %547 = vrot.lane.b32.xlu0 %v503, 64
  %v548 = vpop.permute.xlu0 %547
  %549 = vrot.lane.b32.xlu0 %v504, 64
  %v550 = vpop.permute.xlu0 %549
  %551 = vrot.lane.b32.xlu0 %v505, 64
  %v552 = vpop.permute.xlu0 %551
  %553 = vrot.lane.b32.xlu0 %v506, 64
  %v554 = vpop.permute.xlu0 %553
  %v563 = vmul.bf16 %v438, %v540
  %v564 = vmul.bf16 %v438, %v542
  %v565 = vmul.bf16 %v438, %v544
  %v566 = vmul.bf16 %v438, %v546
  %v567 = vmul.bf16 %v438, %v548
  %v568 = vmul.bf16 %v438, %v550
  %v569 = vmul.bf16 %v438, %v552
  %v570 = vmul.bf16 %v438, %v554
  %579 = vrot.lane.b32.xlu0 %v531, 96
  %v580 = vpop.permute.xlu0 %579
  %581 = vrot.lane.b32.xlu0 %v532, 96
  %v582 = vpop.permute.xlu0 %581
  %583 = vrot.lane.b32.xlu0 %v533, 96
  %v584 = vpop.permute.xlu0 %583
  %585 = vrot.lane.b32.xlu0 %v534, 96
  %v586 = vpop.permute.xlu0 %585
  %587 = vrot.lane.b32.xlu0 %v535, 96
  %v588 = vpop.permute.xlu0 %587
  %589 = vrot.lane.b32.xlu0 %v536, 96
  %v590 = vpop.permute.xlu0 %589
  %591 = vrot.lane.b32.xlu0 %v537, 96
  %v592 = vpop.permute.xlu0 %591
  %593 = vrot.lane.b32.xlu0 %v538, 96
  %v594 = vpop.permute.xlu0 %593
  %v596 = vsel %vm74, %v438, 0
  %v599 = vsel %vm74, %v580, 0
  %v602 = vsel %vm74, %v582, 0
  %v605 = vsel %vm74, %v584, 0
  %v608 = vsel %vm74, %v586, 0
  %v611 = vsel %vm74, %v588, 0
  %v614 = vsel %vm74, %v590, 0
  %v617 = vsel %vm74, %v592, 0
  %v620 = vsel %vm74, %v594, 0
  %622 = vmatprep.subr.bf16.mxu0 0
  %623 = vmatpush1.bf16.xpose.msra.mxu0 %v620
  %624 = vmatprep.subr.bf16.mxu0 0
  %625 = vmatpush1.bf16.xpose.msra.mxu0 %v617
  %626 = vmatprep.subr.bf16.mxu0 0
  %627 = vmatpush1.bf16.xpose.msra.mxu0 %v614
  %628 = vmatprep.subr.bf16.mxu0 0
  %629 = vmatpush1.bf16.xpose.msra.mxu0 %v611
  %630 = vmatprep.subr.bf16.mxu0 0
  %631 = vmatpush1.bf16.xpose.msra.mxu0 %v608
  %632 = vmatprep.subr.bf16.mxu0 0
  %633 = vmatpush1.bf16.xpose.msra.mxu0 %v605
  %634 = vmatprep.subr.bf16.mxu0 0
  %635 = vmatpush1.bf16.xpose.msra.mxu0 %v602
  %636 = vmatprep.subr.bf16.mxu0 0
  %637 = vmatpush1.bf16.xpose.msra.mxu0 %v599
  %638 = vmatprep.subr.bf16.mxu0 0
  %639 = vmatpush2.bf16.xpose.msra.mxu0 0
  %640 = vmatprep.subr.bf16.mxu0 0
  %641 = vmatpush2.bf16.xpose.msra.mxu0 0
  %642 = vmatprep.subr.bf16.mxu0 0
  %643 = vmatpush2.bf16.xpose.msra.mxu0 0
  %644 = vmatprep.subr.bf16.mxu0 0
  %645 = vmatpush2.bf16.xpose.msra.mxu0 0
  %646 = vmatprep.subr.bf16.mxu0 0
  %647 = vmatpush2.bf16.xpose.msra.mxu0 0
  %648 = vmatprep.subr.bf16.mxu0 0
  %649 = vmatpush2.bf16.xpose.msra.mxu0 0
  %650 = vmatprep.subr.bf16.mxu0 0
  %651 = vmatpush2.bf16.xpose.msra.mxu0 0
  %652 = vmatprep.subr.bf16.mxu0 0
  %653 = vmatpush2.bf16.xpose.msra.mxu0 0
  %654 = vmatprep.mubr.bf16.mxu0 0
  %655 = vmatmul.mubr.bf16.gmra.mxu0 %v596
  %v656 = vpop.f32.mrf.mxu0
  %v657 = vadd.f32 0.0, %v656
  %v658 = vpop.f32.mrf.mxu0
  %v659 = vpop.f32.mrf.mxu0
  %v660 = vadd.f32 0.0, %v659
  %v661 = vpop.f32.mrf.mxu0
  %662 = vdwg.mxu0
  %v663 = vmul.f32 %v657, 0.5
  %v664 = vmul.f32 %v660, 0.5
  %v665 = vmul.f32 %v663, 1.442695
  %v666 = vpow.pop %v665
  %v667 = vmul.f32 %v664, 1.442695
  %v668 = vpow.pop %v667
  %v669 = vpack.c.bf16 %v668, %v666
  %678 = vmatprep.subr.bf16.mxu0 0
  %679 = vmatpush1.bf16.msra.mxu0 %v506
  %680 = vmatprep.subr.bf16.mxu0 0
  %681 = vmatpush1.bf16.msra.mxu0 %v505
  %682 = vmatprep.subr.bf16.mxu0 0
  %683 = vmatpush1.bf16.msra.mxu0 %v504
  %684 = vmatprep.subr.bf16.mxu0 0
  %685 = vmatpush1.bf16.msra.mxu0 %v503
  %686 = vmatprep.subr.bf16.mxu0 0
  %687 = vmatpush1.bf16.msra.mxu0 %v502
  %688 = vmatprep.subr.bf16.mxu0 0
  %689 = vmatpush1.bf16.msra.mxu0 %v501
  %690 = vmatprep.subr.bf16.mxu0 0
  %691 = vmatpush1.bf16.msra.mxu0 %v500
  %692 = vmatprep.subr.bf16.mxu0 0
  %693 = vmatpush1.bf16.msra.mxu0 %v499
  %694 = vmatprep.subr.bf16.mxu0 0
  %695 = vmatpush2.bf16.msra.mxu0 0
  %696 = vmatprep.subr.bf16.mxu0 0
  %697 = vmatpush2.bf16.msra.mxu0 0
  %698 = vmatprep.subr.bf16.mxu0 0
  %699 = vmatpush2.bf16.msra.mxu0 0
  %700 = vmatprep.subr.bf16.mxu0 0
  %701 = vmatpush2.bf16.msra.mxu0 0
  %702 = vmatprep.subr.bf16.mxu0 0
  %703 = vmatpush2.bf16.msra.mxu0 0
  %704 = vmatprep.subr.bf16.mxu0 0
  %705 = vmatpush2.bf16.msra.mxu0 0
  %706 = vmatprep.subr.bf16.mxu0 0
  %707 = vmatpush2.bf16.msra.mxu0 0
  %708 = vmatprep.subr.bf16.mxu0 0
  %709 = vmatpush2.bf16.msra.mxu0 0
  %710 = vmatprep.mubr.bf16.mxu0 0
  %711 = vmatmul.mubr.bf16.gmra.mxu0 %v669
  %v712 = vpop.f32.mrf.mxu0
  %v713 = vadd.f32 0.0, %v712
  %v714 = vpop.f32.mrf.mxu0
  %v715 = vpop.f32.mrf.mxu0
  %v716 = vadd.f32 0.0, %v715
  %v717 = vpop.f32.mrf.mxu0
  %718 = vdwg.mxu0
  %727 = vrot.lane.b32.xlu0 %v563, 64
  %v728 = vpop.permute.xlu0 %727
  %729 = vrot.lane.b32.xlu0 %v564, 64
  %v730 = vpop.permute.xlu0 %729
  %731 = vrot.lane.b32.xlu0 %v565, 64
  %v732 = vpop.permute.xlu0 %731
  %733 = vrot.lane.b32.xlu0 %v566, 64
  %v734 = vpop.permute.xlu0 %733
  %735 = vrot.lane.b32.xlu0 %v567, 64
  %v736 = vpop.permute.xlu0 %735
  %737 = vrot.lane.b32.xlu0 %v568, 64
  %v738 = vpop.permute.xlu0 %737
  %739 = vrot.lane.b32.xlu0 %v569, 64
  %v740 = vpop.permute.xlu0 %739
  %741 = vrot.lane.b32.xlu0 %v570, 64
  %v742 = vpop.permute.xlu0 %741
  %751 = vmatprep.subr.bf16.mxu0 0
  %752 = vmatpush1.bf16.msra.mxu0 %v742
  %753 = vmatprep.subr.bf16.mxu0 0
  %754 = vmatpush1.bf16.msra.mxu0 %v740
  %755 = vmatprep.subr.bf16.mxu0 0
  %756 = vmatpush1.bf16.msra.mxu0 %v738
  %757 = vmatprep.subr.bf16.mxu0 0
  %758 = vmatpush1.bf16.msra.mxu0 %v736
  %759 = vmatprep.subr.bf16.mxu0 0
  %760 = vmatpush1.bf16.msra.mxu0 %v734
  %761 = vmatprep.subr.bf16.mxu0 0
  %762 = vmatpush1.bf16.msra.mxu0 %v732
  %763 = vmatprep.subr.bf16.mxu0 0
  %764 = vmatpush1.bf16.msra.mxu0 %v730
  %765 = vmatprep.subr.bf16.mxu0 0
  %766 = vmatpush1.bf16.msra.mxu0 %v728
  %767 = vmatprep.subr.bf16.mxu0 0
  %768 = vmatpush2.bf16.msra.mxu0 0
  %769 = vmatprep.subr.bf16.mxu0 0
  %770 = vmatpush2.bf16.msra.mxu0 0
  %771 = vmatprep.subr.bf16.mxu0 0
  %772 = vmatpush2.bf16.msra.mxu0 0
  %773 = vmatprep.subr.bf16.mxu0 0
  %774 = vmatpush2.bf16.msra.mxu0 0
  %775 = vmatprep.subr.bf16.mxu0 0
  %776 = vmatpush2.bf16.msra.mxu0 0
  %777 = vmatprep.subr.bf16.mxu0 0
  %778 = vmatpush2.bf16.msra.mxu0 0
  %779 = vmatprep.subr.bf16.mxu0 0
  %780 = vmatpush2.bf16.msra.mxu0 0
  %781 = vmatprep.subr.bf16.mxu0 0
  %782 = vmatpush2.bf16.msra.mxu0 0
  %783 = vmatprep.mubr.bf16.mxu0 0
  %784 = vmatmul.mubr.bf16.gmra.mxu0 %v669
  %v785 = vpop.f32.mrf.mxu0
  %v786 = vadd.f32 0.0, %v785
  %v787 = vpop.f32.mrf.mxu0
  %v788 = vpop.f32.mrf.mxu0
  %v789 = vadd.f32 0.0, %v788
  %v790 = vpop.f32.mrf.mxu0
  %791 = vdwg.mxu0
  %v792 = vrcp.pop %v713
  %v793 = vrcp.pop %v716
  %v794 = vmul.f32 %v786, %v792
  %v795 = vmul.f32 %v789, %v793
  %v796 = vpack.c.bf16 %v795, %v794
  %v798 = vlaneseq
  %v799 = vshrl.u32 %v798, 7
  %v800 = vsub.s32 0, %v799
  %v801 = vrot.slane %v466, %v800
  %v807 = vunpack.c.l.b16 %v462
  %v808 = vunpack.c.l.b16 %v463
  %v809 = vunpack.c.l.b16 %v464
  %v810 = vunpack.c.l.b16 %v465
  %v811 = vpack.c.b16 %v808, %v807
  %v812 = vpack.c.b16 %v810, %v809
  %v816 = vsel %vm74, %v796, 0
  %818 = vmatprep.subr.bf16.mxu0 0
  %819 = vmatpush1.bf16.msra.mxu0 0
  %820 = vmatprep.subr.bf16.mxu0 0
  %821 = vmatpush1.bf16.msra.mxu0 0
  %822 = vmatprep.subr.bf16.mxu0 0
  %823 = vmatpush1.bf16.msra.mxu0 0
  %824 = vmatprep.subr.bf16.mxu0 0
  %825 = vmatpush1.bf16.msra.mxu0 0
  %826 = vmatprep.subr.bf16.mxu0 0
  %827 = vmatpush1.bf16.msra.mxu0 0
  %828 = vmatprep.subr.bf16.mxu0 0
  %829 = vmatpush1.bf16.msra.mxu0 0
  %830 = vmatprep.subr.bf16.mxu0 0
  %831 = vmatpush1.bf16.msra.mxu0 %v812
  %832 = vmatprep.subr.bf16.mxu0 0
  %833 = vmatpush1.bf16.msra.mxu0 %v811
  %834 = vmatprep.subr.bf16.mxu0 0
  %835 = vmatpush2.bf16.msra.mxu0 0
  %836 = vmatprep.subr.bf16.mxu0 0
  %837 = vmatpush2.bf16.msra.mxu0 0
  %838 = vmatprep.subr.bf16.mxu0 0
  %839 = vmatpush2.bf16.msra.mxu0 0
  %840 = vmatprep.subr.bf16.mxu0 0
  %841 = vmatpush2.bf16.msra.mxu0 0
  %842 = vmatprep.subr.bf16.mxu0 0
  %843 = vmatpush2.bf16.msra.mxu0 0
  %844 = vmatprep.subr.bf16.mxu0 0
  %845 = vmatpush2.bf16.msra.mxu0 0
  %846 = vmatprep.subr.bf16.mxu0 0
  %847 = vmatpush2.bf16.msra.mxu0 0
  %848 = vmatprep.subr.bf16.mxu0 0
  %849 = vmatpush2.bf16.msra.mxu0 0
  %850 = vmatprep.mubr.bf16.mxu0 0
  %851 = vmatmul.mubr.bf16.gmra.mxu0 %v816
  %v852 = vpop.f32.mrf.mxu0
  %v853 = vadd.f32 %v801, %v852
  %v854 = vpop.f32.mrf.mxu0
  %v855 = vpop.f32.mrf.mxu0
  %v856 = vadd.f32 %v801, %v855
  %v857 = vpop.f32.mrf.mxu0
  %858 = vdwg.mxu0
  %v859 = vadd.f32 %v853, %v27
  %v860 = vadd.f32 %v856, %v28
  %861 = vst.msk [vmem:[%s7] sm:$0xff] %vm74, %v859
  %862 = vst.msk [vmem:[%s7 + $0x8] sm:$0xff] %vm74, %v860
  %v863 = vmul.bf16 %v439, %v508
  %v864 = vmul.bf16 %v439, %v510
  %v865 = vmul.bf16 %v439, %v512
  %v866 = vmul.bf16 %v439, %v514
  %v867 = vmul.bf16 %v439, %v516
  %v868 = vmul.bf16 %v439, %v518
  %v869 = vmul.bf16 %v439, %v520
  %v870 = vmul.bf16 %v439, %v522
  %v871 = vmul.bf16 %v439, %v540
  %v872 = vmul.bf16 %v439, %v542
  %v873 = vmul.bf16 %v439, %v544
  %v874 = vmul.bf16 %v439, %v546
  %v875 = vmul.bf16 %v439, %v548
  %v876 = vmul.bf16 %v439, %v550
  %v877 = vmul.bf16 %v439, %v552
  %v878 = vmul.bf16 %v439, %v554
  %887 = vrot.lane.b32.xlu0 %v863, 96
  %v888 = vpop.permute.xlu0 %887
  %889 = vrot.lane.b32.xlu0 %v864, 96
  %v890 = vpop.permute.xlu0 %889
  %891 = vrot.lane.b32.xlu0 %v865, 96
  %v892 = vpop.permute.xlu0 %891
  %893 = vrot.lane.b32.xlu0 %v866, 96
  %v894 = vpop.permute.xlu0 %893
  %895 = vrot.lane.b32.xlu0 %v867, 96
  %v896 = vpop.permute.xlu0 %895
  %897 = vrot.lane.b32.xlu0 %v868, 96
  %v898 = vpop.permute.xlu0 %897
  %899 = vrot.lane.b32.xlu0 %v869, 96
  %v900 = vpop.permute.xlu0 %899
  %901 = vrot.lane.b32.xlu0 %v870, 96
  %v902 = vpop.permute.xlu0 %901
  %v904 = vsel %vm74, %v439, 0
  %v907 = vsel %vm74, %v888, 0
  %v910 = vsel %vm74, %v890, 0
  %v913 = vsel %vm74, %v892, 0
  %v916 = vsel %vm74, %v894, 0
  %v919 = vsel %vm74, %v896, 0
  %v922 = vsel %vm74, %v898, 0
  %v925 = vsel %vm74, %v900, 0
  %v928 = vsel %vm74, %v902, 0
  %930 = vmatprep.subr.bf16.mxu0 0
  %931 = vmatpush1.bf16.xpose.msra.mxu0 %v928
  %932 = vmatprep.subr.bf16.mxu0 0
  %933 = vmatpush1.bf16.xpose.msra.mxu0 %v925
  %934 = vmatprep.subr.bf16.mxu0 0
  %935 = vmatpush1.bf16.xpose.msra.mxu0 %v922
  %936 = vmatprep.subr.bf16.mxu0 0
  %937 = vmatpush1.bf16.xpose.msra.mxu0 %v919
  %938 = vmatprep.subr.bf16.mxu0 0
  %939 = vmatpush1.bf16.xpose.msra.mxu0 %v916
  %940 = vmatprep.subr.bf16.mxu0 0
  %941 = vmatpush1.bf16.xpose.msra.mxu0 %v913
  %942 = vmatprep.subr.bf16.mxu0 0
  %943 = vmatpush1.bf16.xpose.msra.mxu0 %v910
  %944 = vmatprep.subr.bf16.mxu0 0
  %945 = vmatpush1.bf16.xpose.msra.mxu0 %v907
  %946 = vmatprep.subr.bf16.mxu0 0
  %947 = vmatpush2.bf16.xpose.msra.mxu0 0
  %948 = vmatprep.subr.bf16.mxu0 0
  %949 = vmatpush2.bf16.xpose.msra.mxu0 0
  %950 = vmatprep.subr.bf16.mxu0 0
  %951 = vmatpush2.bf16.xpose.msra.mxu0 0
  %952 = vmatprep.subr.bf16.mxu0 0
  %953 = vmatpush2.bf16.xpose.msra.mxu0 0
  %954 = vmatprep.subr.bf16.mxu0 0
  %955 = vmatpush2.bf16.xpose.msra.mxu0 0
  %956 = vmatprep.subr.bf16.mxu0 0
  %957 = vmatpush2.bf16.xpose.msra.mxu0 0
  %958 = vmatprep.subr.bf16.mxu0 0
  %959 = vmatpush2.bf16.xpose.msra.mxu0 0
  %960 = vmatprep.subr.bf16.mxu0 0
  %961 = vmatpush2.bf16.xpose.msra.mxu0 0
  %962 = vmatprep.mubr.bf16.mxu0 0
  %963 = vmatmul.mubr.bf16.gmra.mxu0 %v904
  %v964 = vpop.f32.mrf.mxu0
  %v965 = vadd.f32 0.0, %v964
  %v966 = vpop.f32.mrf.mxu0
  %v967 = vpop.f32.mrf.mxu0
  %v968 = vadd.f32 0.0, %v967
  %v969 = vpop.f32.mrf.mxu0
  %970 = vdwg.mxu0
  %v971 = vmul.f32 %v965, 0.5
  %v972 = vmul.f32 %v968, 0.5
  %v973 = vmul.f32 %v971, 1.442695
  %v974 = vpow.pop %v973
  %v975 = vmul.f32 %v972, 1.442695
  %v976 = vpow.pop %v975
  %v977 = vpack.c.bf16 %v976, %v974
  %978 = vmatprep.subr.bf16.mxu0 0
  %979 = vmatpush1.bf16.msra.mxu0 %v506
  %980 = vmatprep.subr.bf16.mxu0 0
  %981 = vmatpush1.bf16.msra.mxu0 %v505
  %982 = vmatprep.subr.bf16.mxu0 0
  %983 = vmatpush1.bf16.msra.mxu0 %v504
  %984 = vmatprep.subr.bf16.mxu0 0
  %985 = vmatpush1.bf16.msra.mxu0 %v503
  %986 = vmatprep.subr.bf16.mxu0 0
  %987 = vmatpush1.bf16.msra.mxu0 %v502
  %988 = vmatprep.subr.bf16.mxu0 0
  %989 = vmatpush1.bf16.msra.mxu0 %v501
  %990 = vmatprep.subr.bf16.mxu0 0
  %991 = vmatpush1.bf16.msra.mxu0 %v500
  %992 = vmatprep.subr.bf16.mxu0 0
  %993 = vmatpush1.bf16.msra.mxu0 %v499
  %994 = vmatprep.subr.bf16.mxu0 0
  %995 = vmatpush2.bf16.msra.mxu0 0
  %996 = vmatprep.subr.bf16.mxu0 0
  %997 = vmatpush2.bf16.msra.mxu0 0
  %998 = vmatprep.subr.bf16.mxu0 0
  %999 = vmatpush2.bf16.msra.mxu0 0
  %1000 = vmatprep.subr.bf16.mxu0 0
  %1001 = vmatpush2.bf16.msra.mxu0 0
  %1002 = vmatprep.subr.bf16.mxu0 0
  %1003 = vmatpush2.bf16.msra.mxu0 0
  %1004 = vmatprep.subr.bf16.mxu0 0
  %1005 = vmatpush2.bf16.msra.mxu0 0
  %1006 = vmatprep.subr.bf16.mxu0 0
  %1007 = vmatpush2.bf16.msra.mxu0 0
  %1008 = vmatprep.subr.bf16.mxu0 0
  %1009 = vmatpush2.bf16.msra.mxu0 0
  %1010 = vmatprep.mubr.bf16.mxu0 0
  %1011 = vmatmul.mubr.bf16.gmra.mxu0 %v977
  %v1012 = vpop.f32.mrf.mxu0
  %v1013 = vadd.f32 0.0, %v1012
  %v1014 = vpop.f32.mrf.mxu0
  %v1015 = vpop.f32.mrf.mxu0
  %v1016 = vadd.f32 0.0, %v1015
  %v1017 = vpop.f32.mrf.mxu0
  %1018 = vdwg.mxu0
  %1027 = vrot.lane.b32.xlu0 %v871, 64
  %v1028 = vpop.permute.xlu0 %1027
  %1029 = vrot.lane.b32.xlu0 %v872, 64
  %v1030 = vpop.permute.xlu0 %1029
  %1031 = vrot.lane.b32.xlu0 %v873, 64
  %v1032 = vpop.permute.xlu0 %1031
  %1033 = vrot.lane.b32.xlu0 %v874, 64
  %v1034 = vpop.permute.xlu0 %1033
  %1035 = vrot.lane.b32.xlu0 %v875, 64
  %v1036 = vpop.permute.xlu0 %1035
  %1037 = vrot.lane.b32.xlu0 %v876, 64
  %v1038 = vpop.permute.xlu0 %1037
  %1039 = vrot.lane.b32.xlu0 %v877, 64
  %v1040 = vpop.permute.xlu0 %1039
  %1041 = vrot.lane.b32.xlu0 %v878, 64
  %v1042 = vpop.permute.xlu0 %1041
  %1051 = vmatprep.subr.bf16.mxu0 0
  %1052 = vmatpush1.bf16.msra.mxu0 %v1042
  %1053 = vmatprep.subr.bf16.mxu0 0
  %1054 = vmatpush1.bf16.msra.mxu0 %v1040
  %1055 = vmatprep.subr.bf16.mxu0 0
  %1056 = vmatpush1.bf16.msra.mxu0 %v1038
  %1057 = vmatprep.subr.bf16.mxu0 0
  %1058 = vmatpush1.bf16.msra.mxu0 %v1036
  %1059 = vmatprep.subr.bf16.mxu0 0
  %1060 = vmatpush1.bf16.msra.mxu0 %v1034
  %1061 = vmatprep.subr.bf16.mxu0 0
  %1062 = vmatpush1.bf16.msra.mxu0 %v1032
  %1063 = vmatprep.subr.bf16.mxu0 0
  %1064 = vmatpush1.bf16.msra.mxu0 %v1030
  %1065 = vmatprep.subr.bf16.mxu0 0
  %1066 = vmatpush1.bf16.msra.mxu0 %v1028
  %1067 = vmatprep.subr.bf16.mxu0 0
  %1068 = vmatpush2.bf16.msra.mxu0 0
  %1069 = vmatprep.subr.bf16.mxu0 0
  %1070 = vmatpush2.bf16.msra.mxu0 0
  %1071 = vmatprep.subr.bf16.mxu0 0
  %1072 = vmatpush2.bf16.msra.mxu0 0
  %1073 = vmatprep.subr.bf16.mxu0 0
  %1074 = vmatpush2.bf16.msra.mxu0 0
  %1075 = vmatprep.subr.bf16.mxu0 0
  %1076 = vmatpush2.bf16.msra.mxu0 0
  %1077 = vmatprep.subr.bf16.mxu0 0
  %1078 = vmatpush2.bf16.msra.mxu0 0
  %1079 = vmatprep.subr.bf16.mxu0 0
  %1080 = vmatpush2.bf16.msra.mxu0 0
  %1081 = vmatprep.subr.bf16.mxu0 0
  %1082 = vmatpush2.bf16.msra.mxu0 0
  %1083 = vmatprep.mubr.bf16.mxu0 0
  %1084 = vmatmul.mubr.bf16.gmra.mxu0 %v977
  %v1085 = vpop.f32.mrf.mxu0
  %v1086 = vadd.f32 0.0, %v1085
  %v1087 = vpop.f32.mrf.mxu0
  %v1088 = vpop.f32.mrf.mxu0
  %v1089 = vadd.f32 0.0, %v1088
  %v1090 = vpop.f32.mrf.mxu0
  %1091 = vdwg.mxu0
  %v1092 = vrcp.pop %v1013
  %v1093 = vrcp.pop %v1016
  %v1094 = vmul.f32 %v1086, %v1092
  %v1095 = vmul.f32 %v1089, %v1093
  %v1096 = vpack.c.bf16 %v1095, %v1094
  %v1098 = vsel %vm74, %v1096, 0
  %1100 = vmatprep.subr.bf16.mxu0 0
  %1101 = vmatpush1.bf16.msra.mxu0 0
  %1102 = vmatprep.subr.bf16.mxu0 0
  %1103 = vmatpush1.bf16.msra.mxu0 0
  %1104 = vmatprep.subr.bf16.mxu0 0
  %1105 = vmatpush1.bf16.msra.mxu0 0
  %1106 = vmatprep.subr.bf16.mxu0 0
  %1107 = vmatpush1.bf16.msra.mxu0 0
  %1108 = vmatprep.subr.bf16.mxu0 0
  %1109 = vmatpush1.bf16.msra.mxu0 0
  %1110 = vmatprep.subr.bf16.mxu0 0
  %1111 = vmatpush1.bf16.msra.mxu0 0
  %1112 = vmatprep.subr.bf16.mxu0 0
  %1113 = vmatpush1.bf16.msra.mxu0 %v812
  %1114 = vmatprep.subr.bf16.mxu0 0
  %1115 = vmatpush1.bf16.msra.mxu0 %v811
  %1116 = vmatprep.subr.bf16.mxu0 0
  %1117 = vmatpush2.bf16.msra.mxu0 0
  %1118 = vmatprep.subr.bf16.mxu0 0
  %1119 = vmatpush2.bf16.msra.mxu0 0
  %1120 = vmatprep.subr.bf16.mxu0 0
  %1121 = vmatpush2.bf16.msra.mxu0 0
  %1122 = vmatprep.subr.bf16.mxu0 0
  %1123 = vmatpush2.bf16.msra.mxu0 0
  %1124 = vmatprep.subr.bf16.mxu0 0
  %1125 = vmatpush2.bf16.msra.mxu0 0
  %1126 = vmatprep.subr.bf16.mxu0 0
  %1127 = vmatpush2.bf16.msra.mxu0 0
  %1128 = vmatprep.subr.bf16.mxu0 0
  %1129 = vmatpush2.bf16.msra.mxu0 0
  %1130 = vmatprep.subr.bf16.mxu0 0
  %1131 = vmatpush2.bf16.msra.mxu0 0
  %1132 = vmatprep.mubr.bf16.mxu0 0
  %1133 = vmatmul.mubr.bf16.gmra.mxu0 %v1098
  %v1134 = vpop.f32.mrf.mxu0
  %v1135 = vadd.f32 %v801, %v1134
  %v1136 = vpop.f32.mrf.mxu0
  %v1137 = vpop.f32.mrf.mxu0
  %v1138 = vadd.f32 %v801, %v1137
  %v1139 = vpop.f32.mrf.mxu0
  %1140 = vdwg.mxu0
  %v1141 = vadd.f32 %v1135, %v29
  %v1142 = vadd.f32 %v1138, %v30
  %1143 = vst.msk [vmem:[%s7 + $0x10] sm:$0xff] %vm74, %v1141
  %1144 = vst.msk [vmem:[%s7 + $0x18] sm:$0xff] %vm74, %v1142
  %v1145 = vmul.bf16 %v440, %v508
  %v1146 = vmul.bf16 %v440, %v510
  %v1147 = vmul.bf16 %v440, %v512
  %v1148 = vmul.bf16 %v440, %v514
  %v1149 = vmul.bf16 %v440, %v516
  %v1150 = vmul.bf16 %v440, %v518
  %v1151 = vmul.bf16 %v440, %v520
  %v1152 = vmul.bf16 %v440, %v522
  %v1153 = vmul.bf16 %v440, %v540
  %v1154 = vmul.bf16 %v440, %v542
  %v1155 = vmul.bf16 %v440, %v544
  %v1156 = vmul.bf16 %v440, %v546
  %v1157 = vmul.bf16 %v440, %v548
  %v1158 = vmul.bf16 %v440, %v550
  %v1159 = vmul.bf16 %v440, %v552
  %v1160 = vmul.bf16 %v440, %v554
  %1169 = vrot.lane.b32.xlu0 %v1145, 96
  %v1170 = vpop.permute.xlu0 %1169
  %1171 = vrot.lane.b32.xlu0 %v1146, 96
  %v1172 = vpop.permute.xlu0 %1171
  %1173 = vrot.lane.b32.xlu0 %v1147, 96
  %v1174 = vpop.permute.xlu0 %1173
  %1175 = vrot.lane.b32.xlu0 %v1148, 96
  %v1176 = vpop.permute.xlu0 %1175
  %1177 = vrot.lane.b32.xlu0 %v1149, 96
  %v1178 = vpop.permute.xlu0 %1177
  %1179 = vrot.lane.b32.xlu0 %v1150, 96
  %v1180 = vpop.permute.xlu0 %1179
  %1181 = vrot.lane.b32.xlu0 %v1151, 96
  %v1182 = vpop.permute.xlu0 %1181
  %1183 = vrot.lane.b32.xlu0 %v1152, 96
  %v1184 = vpop.permute.xlu0 %1183
  %v1186 = vsel %vm74, %v440, 0
  %v1189 = vsel %vm74, %v1170, 0
  %v1192 = vsel %vm74, %v1172, 0
  %v1195 = vsel %vm74, %v1174, 0
  %v1198 = vsel %vm74, %v1176, 0
  %v1201 = vsel %vm74, %v1178, 0
  %v1204 = vsel %vm74, %v1180, 0
  %v1207 = vsel %vm74, %v1182, 0
  %v1210 = vsel %vm74, %v1184, 0
  %1212 = vmatprep.subr.bf16.mxu0 0
  %1213 = vmatpush1.bf16.xpose.msra.mxu0 %v1210
  %1214 = vmatprep.subr.bf16.mxu0 0
  %1215 = vmatpush1.bf16.xpose.msra.mxu0 %v1207
  %1216 = vmatprep.subr.bf16.mxu0 0
  %1217 = vmatpush1.bf16.xpose.msra.mxu0 %v1204
  %1218 = vmatprep.subr.bf16.mxu0 0
  %1219 = vmatpush1.bf16.xpose.msra.mxu0 %v1201
  %1220 = vmatprep.subr.bf16.mxu0 0
  %1221 = vmatpush1.bf16.xpose.msra.mxu0 %v1198
  %1222 = vmatprep.subr.bf16.mxu0 0
  %1223 = vmatpush1.bf16.xpose.msra.mxu0 %v1195
  %1224 = vmatprep.subr.bf16.mxu0 0
  %1225 = vmatpush1.bf16.xpose.msra.mxu0 %v1192
  %1226 = vmatprep.subr.bf16.mxu0 0
  %1227 = vmatpush1.bf16.xpose.msra.mxu0 %v1189
  %1228 = vmatprep.subr.bf16.mxu0 0
  %1229 = vmatpush2.bf16.xpose.msra.mxu0 0
  %1230 = vmatprep.subr.bf16.mxu0 0
  %1231 = vmatpush2.bf16.xpose.msra.mxu0 0
  %1232 = vmatprep.subr.bf16.mxu0 0
  %1233 = vmatpush2.bf16.xpose.msra.mxu0 0
  %1234 = vmatprep.subr.bf16.mxu0 0
  %1235 = vmatpush2.bf16.xpose.msra.mxu0 0
  %1236 = vmatprep.subr.bf16.mxu0 0
  %1237 = vmatpush2.bf16.xpose.msra.mxu0 0
  %1238 = vmatprep.subr.bf16.mxu0 0
  %1239 = vmatpush2.bf16.xpose.msra.mxu0 0
  %1240 = vmatprep.subr.bf16.mxu0 0
  %1241 = vmatpush2.bf16.xpose.msra.mxu0 0
  %1242 = vmatprep.subr.bf16.mxu0 0
  %1243 = vmatpush2.bf16.xpose.msra.mxu0 0
  %1244 = vmatprep.mubr.bf16.mxu0 0
  %1245 = vmatmul.mubr.bf16.gmra.mxu0 %v1186
  %v1246 = vpop.f32.mrf.mxu0
  %v1247 = vadd.f32 0.0, %v1246
  %v1248 = vpop.f32.mrf.mxu0
  %v1249 = vpop.f32.mrf.mxu0
  %v1250 = vadd.f32 0.0, %v1249
  %v1251 = vpop.f32.mrf.mxu0
  %1252 = vdwg.mxu0
  %v1253 = vmul.f32 %v1247, 0.5
  %v1254 = vmul.f32 %v1250, 0.5
  %v1255 = vmul.f32 %v1253, 1.442695
  %v1256 = vpow.pop %v1255
  %v1257 = vmul.f32 %v1254, 1.442695
  %v1258 = vpow.pop %v1257
  %v1259 = vpack.c.bf16 %v1258, %v1256
  %1260 = vmatprep.subr.bf16.mxu0 0
  %1261 = vmatpush1.bf16.msra.mxu0 %v506
  %1262 = vmatprep.subr.bf16.mxu0 0
  %1263 = vmatpush1.bf16.msra.mxu0 %v505
  %1264 = vmatprep.subr.bf16.mxu0 0
  %1265 = vmatpush1.bf16.msra.mxu0 %v504
  %1266 = vmatprep.subr.bf16.mxu0 0
  %1267 = vmatpush1.bf16.msra.mxu0 %v503
  %1268 = vmatprep.subr.bf16.mxu0 0
  %1269 = vmatpush1.bf16.msra.mxu0 %v502
  %1270 = vmatprep.subr.bf16.mxu0 0
  %1271 = vmatpush1.bf16.msra.mxu0 %v501
  %1272 = vmatprep.subr.bf16.mxu0 0
  %1273 = vmatpush1.bf16.msra.mxu0 %v500
  %1274 = vmatprep.subr.bf16.mxu0 0
  %1275 = vmatpush1.bf16.msra.mxu0 %v499
  %1276 = vmatprep.subr.bf16.mxu0 0
  %1277 = vmatpush2.bf16.msra.mxu0 0
  %1278 = vmatprep.subr.bf16.mxu0 0
  %1279 = vmatpush2.bf16.msra.mxu0 0
  %1280 = vmatprep.subr.bf16.mxu0 0
  %1281 = vmatpush2.bf16.msra.mxu0 0
  %1282 = vmatprep.subr.bf16.mxu0 0
  %1283 = vmatpush2.bf16.msra.mxu0 0
  %1284 = vmatprep.subr.bf16.mxu0 0
  %1285 = vmatpush2.bf16.msra.mxu0 0
  %1286 = vmatprep.subr.bf16.mxu0 0
  %1287 = vmatpush2.bf16.msra.mxu0 0
  %1288 = vmatprep.subr.bf16.mxu0 0
  %1289 = vmatpush2.bf16.msra.mxu0 0
  %1290 = vmatprep.subr.bf16.mxu0 0
  %1291 = vmatpush2.bf16.msra.mxu0 0
  %1292 = vmatprep.mubr.bf16.mxu0 0
  %1293 = vmatmul.mubr.bf16.gmra.mxu0 %v1259
  %v1294 = vpop.f32.mrf.mxu0
  %v1295 = vadd.f32 0.0, %v1294
  %v1296 = vpop.f32.mrf.mxu0
  %v1297 = vpop.f32.mrf.mxu0
  %v1298 = vadd.f32 0.0, %v1297
  %v1299 = vpop.f32.mrf.mxu0
  %1300 = vdwg.mxu0
  %1309 = vrot.lane.b32.xlu0 %v1153, 64
  %v1310 = vpop.permute.xlu0 %1309
  %1311 = vrot.lane.b32.xlu0 %v1154, 64
  %v1312 = vpop.permute.xlu0 %1311
  %1313 = vrot.lane.b32.xlu0 %v1155, 64
  %v1314 = vpop.permute.xlu0 %1313
  %1315 = vrot.lane.b32.xlu0 %v1156, 64
  %v1316 = vpop.permute.xlu0 %1315
  %1317 = vrot.lane.b32.xlu0 %v1157, 64
  %v1318 = vpop.permute.xlu0 %1317
  %1319 = vrot.lane.b32.xlu0 %v1158, 64
  %v1320 = vpop.permute.xlu0 %1319
  %1321 = vrot.lane.b32.xlu0 %v1159, 64
  %v1322 = vpop.permute.xlu0 %1321
  %1323 = vrot.lane.b32.xlu0 %v1160, 64
  %v1324 = vpop.permute.xlu0 %1323
  %1333 = vmatprep.subr.bf16.mxu0 0
  %1334 = vmatpush1.bf16.msra.mxu0 %v1324
  %1335 = vmatprep.subr.bf16.mxu0 0
  %1336 = vmatpush1.bf16.msra.mxu0 %v1322
  %1337 = vmatprep.subr.bf16.mxu0 0
  %1338 = vmatpush1.bf16.msra.mxu0 %v1320
  %1339 = vmatprep.subr.bf16.mxu0 0
  %1340 = vmatpush1.bf16.msra.mxu0 %v1318
  %1341 = vmatprep.subr.bf16.mxu0 0
  %1342 = vmatpush1.bf16.msra.mxu0 %v1316
  %1343 = vmatprep.subr.bf16.mxu0 0
  %1344 = vmatpush1.bf16.msra.mxu0 %v1314
  %1345 = vmatprep.subr.bf16.mxu0 0
  %1346 = vmatpush1.bf16.msra.mxu0 %v1312
  %1347 = vmatprep.subr.bf16.mxu0 0
  %1348 = vmatpush1.bf16.msra.mxu0 %v1310
  %1349 = vmatprep.subr.bf16.mxu0 0
  %1350 = vmatpush2.bf16.msra.mxu0 0
  %1351 = vmatprep.subr.bf16.mxu0 0
  %1352 = vmatpush2.bf16.msra.mxu0 0
  %1353 = vmatprep.subr.bf16.mxu0 0
  %1354 = vmatpush2.bf16.msra.mxu0 0
  %1355 = vmatprep.subr.bf16.mxu0 0
  %1356 = vmatpush2.bf16.msra.mxu0 0
  %1357 = vmatprep.subr.bf16.mxu0 0
  %1358 = vmatpush2.bf16.msra.mxu0 0
  %1359 = vmatprep.subr.bf16.mxu0 0
  %1360 = vmatpush2.bf16.msra.mxu0 0
  %1361 = vmatprep.subr.bf16.mxu0 0
  %1362 = vmatpush2.bf16.msra.mxu0 0
  %1363 = vmatprep.subr.bf16.mxu0 0
  %1364 = vmatpush2.bf16.msra.mxu0 0
  %1365 = vmatprep.mubr.bf16.mxu0 0
  %1366 = vmatmul.mubr.bf16.gmra.mxu0 %v1259
  %v1367 = vpop.f32.mrf.mxu0
  %v1368 = vadd.f32 0.0, %v1367
  %v1369 = vpop.f32.mrf.mxu0
  %v1370 = vpop.f32.mrf.mxu0
  %v1371 = vadd.f32 0.0, %v1370
  %v1372 = vpop.f32.mrf.mxu0
  %1373 = vdwg.mxu0
  %v1374 = vrcp.pop %v1295
  %v1375 = vrcp.pop %v1298
  %v1376 = vmul.f32 %v1368, %v1374
  %v1377 = vmul.f32 %v1371, %v1375
  %v1378 = vpack.c.bf16 %v1377, %v1376
  %v1380 = vsel %vm74, %v1378, 0
  %1382 = vmatprep.subr.bf16.mxu0 0
  %1383 = vmatpush1.bf16.msra.mxu0 0
  %1384 = vmatprep.subr.bf16.mxu0 0
  %1385 = vmatpush1.bf16.msra.mxu0 0
  %1386 = vmatprep.subr.bf16.mxu0 0
  %1387 = vmatpush1.bf16.msra.mxu0 0
  %1388 = vmatprep.subr.bf16.mxu0 0
  %1389 = vmatpush1.bf16.msra.mxu0 0
  %1390 = vmatprep.subr.bf16.mxu0 0
  %1391 = vmatpush1.bf16.msra.mxu0 0
  %1392 = vmatprep.subr.bf16.mxu0 0
  %1393 = vmatpush1.bf16.msra.mxu0 0
  %1394 = vmatprep.subr.bf16.mxu0 0
  %1395 = vmatpush1.bf16.msra.mxu0 %v812
  %1396 = vmatprep.subr.bf16.mxu0 0
  %1397 = vmatpush1.bf16.msra.mxu0 %v811
  %1398 = vmatprep.subr.bf16.mxu0 0
  %1399 = vmatpush2.bf16.msra.mxu0 0
  %1400 = vmatprep.subr.bf16.mxu0 0
  %1401 = vmatpush2.bf16.msra.mxu0 0
  %1402 = vmatprep.subr.bf16.mxu0 0
  %1403 = vmatpush2.bf16.msra.mxu0 0
  %1404 = vmatprep.subr.bf16.mxu0 0
  %1405 = vmatpush2.bf16.msra.mxu0 0
  %1406 = vmatprep.subr.bf16.mxu0 0
  %1407 = vmatpush2.bf16.msra.mxu0 0
  %1408 = vmatprep.subr.bf16.mxu0 0
  %1409 = vmatpush2.bf16.msra.mxu0 0
  %1410 = vmatprep.subr.bf16.mxu0 0
  %1411 = vmatpush2.bf16.msra.mxu0 0
  %1412 = vmatprep.subr.bf16.mxu0 0
  %1413 = vmatpush2.bf16.msra.mxu0 0
  %1414 = vmatprep.mubr.bf16.mxu0 0
  %1415 = vmatmul.mubr.bf16.gmra.mxu0 %v1380
  %v1416 = vpop.f32.mrf.mxu0
  %v1417 = vadd.f32 %v801, %v1416
  %v1418 = vpop.f32.mrf.mxu0
  %v1419 = vpop.f32.mrf.mxu0
  %v1420 = vadd.f32 %v801, %v1419
  %v1421 = vpop.f32.mrf.mxu0
  %1422 = vdwg.mxu0
  %v1423 = vadd.f32 %v1417, %v31
  %v1424 = vadd.f32 %v1420, %v32
  %1425 = vst.msk [vmem:[%s7 + $0x20] sm:$0xff] %vm74, %v1423
  %1426 = vst.msk [vmem:[%s7 + $0x28] sm:$0xff] %vm74, %v1424
  %v1427 = vmul.bf16 %v441, %v508
  %v1428 = vmul.bf16 %v441, %v510
  %v1429 = vmul.bf16 %v441, %v512
  %v1430 = vmul.bf16 %v441, %v514
  %v1431 = vmul.bf16 %v441, %v516
  %v1432 = vmul.bf16 %v441, %v518
  %v1433 = vmul.bf16 %v441, %v520
  %v1434 = vmul.bf16 %v441, %v522
  %v1435 = vmul.bf16 %v441, %v540
  %v1436 = vmul.bf16 %v441, %v542
  %v1437 = vmul.bf16 %v441, %v544
  %v1438 = vmul.bf16 %v441, %v546
  %v1439 = vmul.bf16 %v441, %v548
  %v1440 = vmul.bf16 %v441, %v550
  %v1441 = vmul.bf16 %v441, %v552
  %v1442 = vmul.bf16 %v441, %v554
  %1451 = vrot.lane.b32.xlu0 %v1427, 96
  %v1452 = vpop.permute.xlu0 %1451
  %1453 = vrot.lane.b32.xlu0 %v1428, 96
  %v1454 = vpop.permute.xlu0 %1453
  %1455 = vrot.lane.b32.xlu0 %v1429, 96
  %v1456 = vpop.permute.xlu0 %1455
  %1457 = vrot.lane.b32.xlu0 %v1430, 96
  %v1458 = vpop.permute.xlu0 %1457
  %1459 = vrot.lane.b32.xlu0 %v1431, 96
  %v1460 = vpop.permute.xlu0 %1459
  %1461 = vrot.lane.b32.xlu0 %v1432, 96
  %v1462 = vpop.permute.xlu0 %1461
  %1463 = vrot.lane.b32.xlu0 %v1433, 96
  %v1464 = vpop.permute.xlu0 %1463
  %1465 = vrot.lane.b32.xlu0 %v1434, 96
  %v1466 = vpop.permute.xlu0 %1465
  %v1468 = vsel %vm74, %v441, 0
  %v1471 = vsel %vm74, %v1452, 0
  %v1474 = vsel %vm74, %v1454, 0
  %v1477 = vsel %vm74, %v1456, 0
  %v1480 = vsel %vm74, %v1458, 0
  %v1483 = vsel %vm74, %v1460, 0
  %v1486 = vsel %vm74, %v1462, 0
  %v1489 = vsel %vm74, %v1464, 0
  %v1492 = vsel %vm74, %v1466, 0
  %1494 = vmatprep.subr.bf16.mxu0 0
  %1495 = vmatpush1.bf16.xpose.msra.mxu0 %v1492
  %1496 = vmatprep.subr.bf16.mxu0 0
  %1497 = vmatpush1.bf16.xpose.msra.mxu0 %v1489
  %1498 = vmatprep.subr.bf16.mxu0 0
  %1499 = vmatpush1.bf16.xpose.msra.mxu0 %v1486
  %1500 = vmatprep.subr.bf16.mxu0 0
  %1501 = vmatpush1.bf16.xpose.msra.mxu0 %v1483
  %1502 = vmatprep.subr.bf16.mxu0 0
  %1503 = vmatpush1.bf16.xpose.msra.mxu0 %v1480
  %1504 = vmatprep.subr.bf16.mxu0 0
  %1505 = vmatpush1.bf16.xpose.msra.mxu0 %v1477
  %1506 = vmatprep.subr.bf16.mxu0 0
  %1507 = vmatpush1.bf16.xpose.msra.mxu0 %v1474
  %1508 = vmatprep.subr.bf16.mxu0 0
  %1509 = vmatpush1.bf16.xpose.msra.mxu0 %v1471
  %1510 = vmatprep.subr.bf16.mxu0 0
  %1511 = vmatpush2.bf16.xpose.msra.mxu0 0
  %1512 = vmatprep.subr.bf16.mxu0 0
  %1513 = vmatpush2.bf16.xpose.msra.mxu0 0
  %1514 = vmatprep.subr.bf16.mxu0 0
  %1515 = vmatpush2.bf16.xpose.msra.mxu0 0
  %1516 = vmatprep.subr.bf16.mxu0 0
  %1517 = vmatpush2.bf16.xpose.msra.mxu0 0
  %1518 = vmatprep.subr.bf16.mxu0 0
  %1519 = vmatpush2.bf16.xpose.msra.mxu0 0
  %1520 = vmatprep.subr.bf16.mxu0 0
  %1521 = vmatpush2.bf16.xpose.msra.mxu0 0
  %1522 = vmatprep.subr.bf16.mxu0 0
  %1523 = vmatpush2.bf16.xpose.msra.mxu0 0
  %1524 = vmatprep.subr.bf16.mxu0 0
  %1525 = vmatpush2.bf16.xpose.msra.mxu0 0
  %1526 = vmatprep.mubr.bf16.mxu0 0
  %1527 = vmatmul.mubr.bf16.gmra.mxu0 %v1468
  %v1528 = vpop.f32.mrf.mxu0
  %v1529 = vadd.f32 0.0, %v1528
  %v1530 = vpop.f32.mrf.mxu0
  %v1531 = vpop.f32.mrf.mxu0
  %v1532 = vadd.f32 0.0, %v1531
  %v1533 = vpop.f32.mrf.mxu0
  %1534 = vdwg.mxu0
  %v1535 = vmul.f32 %v1529, 0.5
  %v1536 = vmul.f32 %v1532, 0.5
  %v1537 = vmul.f32 %v1535, 1.442695
  %v1538 = vpow.pop %v1537
  %v1539 = vmul.f32 %v1536, 1.442695
  %v1540 = vpow.pop %v1539
  %v1541 = vpack.c.bf16 %v1540, %v1538
  %1542 = vmatprep.subr.bf16.mxu0 0
  %1543 = vmatpush1.bf16.msra.mxu0 %v506
  %1544 = vmatprep.subr.bf16.mxu0 0
  %1545 = vmatpush1.bf16.msra.mxu0 %v505
  %1546 = vmatprep.subr.bf16.mxu0 0
  %1547 = vmatpush1.bf16.msra.mxu0 %v504
  %1548 = vmatprep.subr.bf16.mxu0 0
  %1549 = vmatpush1.bf16.msra.mxu0 %v503
  %1550 = vmatprep.subr.bf16.mxu0 0
  %1551 = vmatpush1.bf16.msra.mxu0 %v502
  %1552 = vmatprep.subr.bf16.mxu0 0
  %1553 = vmatpush1.bf16.msra.mxu0 %v501
  %1554 = vmatprep.subr.bf16.mxu0 0
  %1555 = vmatpush1.bf16.msra.mxu0 %v500
  %1556 = vmatprep.subr.bf16.mxu0 0
  %1557 = vmatpush1.bf16.msra.mxu0 %v499
  %1558 = vmatprep.subr.bf16.mxu0 0
  %1559 = vmatpush2.bf16.msra.mxu0 0
  %1560 = vmatprep.subr.bf16.mxu0 0
  %1561 = vmatpush2.bf16.msra.mxu0 0
  %1562 = vmatprep.subr.bf16.mxu0 0
  %1563 = vmatpush2.bf16.msra.mxu0 0
  %1564 = vmatprep.subr.bf16.mxu0 0
  %1565 = vmatpush2.bf16.msra.mxu0 0
  %1566 = vmatprep.subr.bf16.mxu0 0
  %1567 = vmatpush2.bf16.msra.mxu0 0
  %1568 = vmatprep.subr.bf16.mxu0 0
  %1569 = vmatpush2.bf16.msra.mxu0 0
  %1570 = vmatprep.subr.bf16.mxu0 0
  %1571 = vmatpush2.bf16.msra.mxu0 0
  %1572 = vmatprep.subr.bf16.mxu0 0
  %1573 = vmatpush2.bf16.msra.mxu0 0
  %1574 = vmatprep.mubr.bf16.mxu0 0
  %1575 = vmatmul.mubr.bf16.gmra.mxu0 %v1541
  %v1576 = vpop.f32.mrf.mxu0
  %v1577 = vadd.f32 0.0, %v1576
  %v1578 = vpop.f32.mrf.mxu0
  %v1579 = vpop.f32.mrf.mxu0
  %v1580 = vadd.f32 0.0, %v1579
  %v1581 = vpop.f32.mrf.mxu0
  %1582 = vdwg.mxu0
  %1591 = vrot.lane.b32.xlu0 %v1435, 64
  %v1592 = vpop.permute.xlu0 %1591
  %1593 = vrot.lane.b32.xlu0 %v1436, 64
  %v1594 = vpop.permute.xlu0 %1593
  %1595 = vrot.lane.b32.xlu0 %v1437, 64
  %v1596 = vpop.permute.xlu0 %1595
  %1597 = vrot.lane.b32.xlu0 %v1438, 64
  %v1598 = vpop.permute.xlu0 %1597
  %1599 = vrot.lane.b32.xlu0 %v1439, 64
  %v1600 = vpop.permute.xlu0 %1599
  %1601 = vrot.lane.b32.xlu0 %v1440, 64
  %v1602 = vpop.permute.xlu0 %1601
  %1603 = vrot.lane.b32.xlu0 %v1441, 64
  %v1604 = vpop.permute.xlu0 %1603
  %1605 = vrot.lane.b32.xlu0 %v1442, 64
  %v1606 = vpop.permute.xlu0 %1605
  %1615 = vmatprep.subr.bf16.mxu0 0
  %1616 = vmatpush1.bf16.msra.mxu0 %v1606
  %1617 = vmatprep.subr.bf16.mxu0 0
  %1618 = vmatpush1.bf16.msra.mxu0 %v1604
  %1619 = vmatprep.subr.bf16.mxu0 0
  %1620 = vmatpush1.bf16.msra.mxu0 %v1602
  %1621 = vmatprep.subr.bf16.mxu0 0
  %1622 = vmatpush1.bf16.msra.mxu0 %v1600
  %1623 = vmatprep.subr.bf16.mxu0 0
  %1624 = vmatpush1.bf16.msra.mxu0 %v1598
  %1625 = vmatprep.subr.bf16.mxu0 0
  %1626 = vmatpush1.bf16.msra.mxu0 %v1596
  %1627 = vmatprep.subr.bf16.mxu0 0
  %1628 = vmatpush1.bf16.msra.mxu0 %v1594
  %1629 = vmatprep.subr.bf16.mxu0 0
  %1630 = vmatpush1.bf16.msra.mxu0 %v1592
  %1631 = vmatprep.subr.bf16.mxu0 0
  %1632 = vmatpush2.bf16.msra.mxu0 0
  %1633 = vmatprep.subr.bf16.mxu0 0
  %1634 = vmatpush2.bf16.msra.mxu0 0
  %1635 = vmatprep.subr.bf16.mxu0 0
  %1636 = vmatpush2.bf16.msra.mxu0 0
  %1637 = vmatprep.subr.bf16.mxu0 0
  %1638 = vmatpush2.bf16.msra.mxu0 0
  %1639 = vmatprep.subr.bf16.mxu0 0
  %1640 = vmatpush2.bf16.msra.mxu0 0
  %1641 = vmatprep.subr.bf16.mxu0 0
  %1642 = vmatpush2.bf16.msra.mxu0 0
  %1643 = vmatprep.subr.bf16.mxu0 0
  %1644 = vmatpush2.bf16.msra.mxu0 0
  %1645 = vmatprep.subr.bf16.mxu0 0
  %1646 = vmatpush2.bf16.msra.mxu0 0
  %1647 = vmatprep.mubr.bf16.mxu0 0
  %1648 = vmatmul.mubr.bf16.gmra.mxu0 %v1541
  %v1649 = vpop.f32.mrf.mxu0
  %v1650 = vadd.f32 0.0, %v1649
  %v1651 = vpop.f32.mrf.mxu0
  %v1652 = vpop.f32.mrf.mxu0
  %v1653 = vadd.f32 0.0, %v1652
  %v1654 = vpop.f32.mrf.mxu0
  %1655 = vdwg.mxu0
  %v1656 = vrcp.pop %v1577
  %v1657 = vrcp.pop %v1580
  %v1658 = vmul.f32 %v1650, %v1656
  %v1659 = vmul.f32 %v1653, %v1657
  %v1660 = vpack.c.bf16 %v1659, %v1658
  %v1662 = vsel %vm74, %v1660, 0
  %1664 = vmatprep.subr.bf16.mxu0 0
  %1665 = vmatpush1.bf16.msra.mxu0 0
  %1666 = vmatprep.subr.bf16.mxu0 0
  %1667 = vmatpush1.bf16.msra.mxu0 0
  %1668 = vmatprep.subr.bf16.mxu0 0
  %1669 = vmatpush1.bf16.msra.mxu0 0
  %1670 = vmatprep.subr.bf16.mxu0 0
  %1671 = vmatpush1.bf16.msra.mxu0 0
  %1672 = vmatprep.subr.bf16.mxu0 0
  %1673 = vmatpush1.bf16.msra.mxu0 0
  %1674 = vmatprep.subr.bf16.mxu0 0
  %1675 = vmatpush1.bf16.msra.mxu0 0
  %1676 = vmatprep.subr.bf16.mxu0 0
  %1677 = vmatpush1.bf16.msra.mxu0 %v812
  %1678 = vmatprep.subr.bf16.mxu0 0
  %1679 = vmatpush1.bf16.msra.mxu0 %v811
  %1680 = vmatprep.subr.bf16.mxu0 0
  %1681 = vmatpush2.bf16.msra.mxu0 0
  %1682 = vmatprep.subr.bf16.mxu0 0
  %1683 = vmatpush2.bf16.msra.mxu0 0
  %1684 = vmatprep.subr.bf16.mxu0 0
  %1685 = vmatpush2.bf16.msra.mxu0 0
  %1686 = vmatprep.subr.bf16.mxu0 0
  %1687 = vmatpush2.bf16.msra.mxu0 0
  %1688 = vmatprep.subr.bf16.mxu0 0
  %1689 = vmatpush2.bf16.msra.mxu0 0
  %1690 = vmatprep.subr.bf16.mxu0 0
  %1691 = vmatpush2.bf16.msra.mxu0 0
  %1692 = vmatprep.subr.bf16.mxu0 0
  %1693 = vmatpush2.bf16.msra.mxu0 0
  %1694 = vmatprep.subr.bf16.mxu0 0
  %1695 = vmatpush2.bf16.msra.mxu0 0
  %1696 = vmatprep.mubr.bf16.mxu0 0
  %1697 = vmatmul.mubr.bf16.gmra.mxu0 %v1662
  %v1698 = vpop.f32.mrf.mxu0
  %v1699 = vadd.f32 %v801, %v1698
  %v1700 = vpop.f32.mrf.mxu0
  %v1701 = vpop.f32.mrf.mxu0
  %v1702 = vadd.f32 %v801, %v1701
  %v1703 = vpop.f32.mrf.mxu0
  %1704 = vdwg.mxu0
  %v1705 = vadd.f32 %v1699, %v33
  %v1706 = vadd.f32 %v1702, %v34
  %1707 = vst.msk [vmem:[%s7 + $0x30] sm:$0xff] %vm74, %v1705
  %1708 = vst.msk [vmem:[%s7 + $0x38] sm:$0xff] %vm74, %v1706
  %v1709 = vmul.bf16 %v442, %v508
  %v1710 = vmul.bf16 %v442, %v510
  %v1711 = vmul.bf16 %v442, %v512
  %v1712 = vmul.bf16 %v442, %v514
  %v1713 = vmul.bf16 %v442, %v516
  %v1714 = vmul.bf16 %v442, %v518
  %v1715 = vmul.bf16 %v442, %v520
  %v1716 = vmul.bf16 %v442, %v522
  %v1717 = vmul.bf16 %v442, %v540
  %v1718 = vmul.bf16 %v442, %v542
  %v1719 = vmul.bf16 %v442, %v544
  %v1720 = vmul.bf16 %v442, %v546
  %v1721 = vmul.bf16 %v442, %v548
  %v1722 = vmul.bf16 %v442, %v550
  %v1723 = vmul.bf16 %v442, %v552
  %v1724 = vmul.bf16 %v442, %v554
  %1733 = vrot.lane.b32.xlu0 %v1709, 96
  %v1734 = vpop.permute.xlu0 %1733
  %1735 = vrot.lane.b32.xlu0 %v1710, 96
  %v1736 = vpop.permute.xlu0 %1735
  %1737 = vrot.lane.b32.xlu0 %v1711, 96
  %v1738 = vpop.permute.xlu0 %1737
  %1739 = vrot.lane.b32.xlu0 %v1712, 96
  %v1740 = vpop.permute.xlu0 %1739
  %1741 = vrot.lane.b32.xlu0 %v1713, 96
  %v1742 = vpop.permute.xlu0 %1741
  %1743 = vrot.lane.b32.xlu0 %v1714, 96
  %v1744 = vpop.permute.xlu0 %1743
  %1745 = vrot.lane.b32.xlu0 %v1715, 96
  %v1746 = vpop.permute.xlu0 %1745
  %1747 = vrot.lane.b32.xlu0 %v1716, 96
  %v1748 = vpop.permute.xlu0 %1747
  %v1750 = vsel %vm74, %v442, 0
  %v1753 = vsel %vm74, %v1734, 0
  %v1756 = vsel %vm74, %v1736, 0
  %v1759 = vsel %vm74, %v1738, 0
  %v1762 = vsel %vm74, %v1740, 0
  %v1765 = vsel %vm74, %v1742, 0
  %v1768 = vsel %vm74, %v1744, 0
  %v1771 = vsel %vm74, %v1746, 0
  %v1774 = vsel %vm74, %v1748, 0
  %1776 = vmatprep.subr.bf16.mxu0 0
  %1777 = vmatpush1.bf16.xpose.msra.mxu0 %v1774
  %1778 = vmatprep.subr.bf16.mxu0 0
  %1779 = vmatpush1.bf16.xpose.msra.mxu0 %v1771
  %1780 = vmatprep.subr.bf16.mxu0 0
  %1781 = vmatpush1.bf16.xpose.msra.mxu0 %v1768
  %1782 = vmatprep.subr.bf16.mxu0 0
  %1783 = vmatpush1.bf16.xpose.msra.mxu0 %v1765
  %1784 = vmatprep.subr.bf16.mxu0 0
  %1785 = vmatpush1.bf16.xpose.msra.mxu0 %v1762
  %1786 = vmatprep.subr.bf16.mxu0 0
  %1787 = vmatpush1.bf16.xpose.msra.mxu0 %v1759
  %1788 = vmatprep.subr.bf16.mxu0 0
  %1789 = vmatpush1.bf16.xpose.msra.mxu0 %v1756
  %1790 = vmatprep.subr.bf16.mxu0 0
  %1791 = vmatpush1.bf16.xpose.msra.mxu0 %v1753
  %1792 = vmatprep.subr.bf16.mxu0 0
  %1793 = vmatpush2.bf16.xpose.msra.mxu0 0
  %1794 = vmatprep.subr.bf16.mxu0 0
  %1795 = vmatpush2.bf16.xpose.msra.mxu0 0
  %1796 = vmatprep.subr.bf16.mxu0 0
  %1797 = vmatpush2.bf16.xpose.msra.mxu0 0
  %1798 = vmatprep.subr.bf16.mxu0 0
  %1799 = vmatpush2.bf16.xpose.msra.mxu0 0
  %1800 = vmatprep.subr.bf16.mxu0 0
  %1801 = vmatpush2.bf16.xpose.msra.mxu0 0
  %1802 = vmatprep.subr.bf16.mxu0 0
  %1803 = vmatpush2.bf16.xpose.msra.mxu0 0
  %1804 = vmatprep.subr.bf16.mxu0 0
  %1805 = vmatpush2.bf16.xpose.msra.mxu0 0
  %1806 = vmatprep.subr.bf16.mxu0 0
  %1807 = vmatpush2.bf16.xpose.msra.mxu0 0
  %1808 = vmatprep.mubr.bf16.mxu0 0
  %1809 = vmatmul.mubr.bf16.gmra.mxu0 %v1750
  %v1810 = vpop.f32.mrf.mxu0
  %v1811 = vadd.f32 0.0, %v1810
  %v1812 = vpop.f32.mrf.mxu0
  %v1813 = vpop.f32.mrf.mxu0
  %v1814 = vadd.f32 0.0, %v1813
  %v1815 = vpop.f32.mrf.mxu0
  %1816 = vdwg.mxu0
  %v1817 = vmul.f32 %v1811, 0.5
  %v1818 = vmul.f32 %v1814, 0.5
  %v1819 = vmul.f32 %v1817, 1.442695
  %v1820 = vpow.pop %v1819
  %v1821 = vmul.f32 %v1818, 1.442695
  %v1822 = vpow.pop %v1821
  %v1823 = vpack.c.bf16 %v1822, %v1820
  %1824 = vmatprep.subr.bf16.mxu0 0
  %1825 = vmatpush1.bf16.msra.mxu0 %v506
  %1826 = vmatprep.subr.bf16.mxu0 0
  %1827 = vmatpush1.bf16.msra.mxu0 %v505
  %1828 = vmatprep.subr.bf16.mxu0 0
  %1829 = vmatpush1.bf16.msra.mxu0 %v504
  %1830 = vmatprep.subr.bf16.mxu0 0
  %1831 = vmatpush1.bf16.msra.mxu0 %v503
  %1832 = vmatprep.subr.bf16.mxu0 0
  %1833 = vmatpush1.bf16.msra.mxu0 %v502
  %1834 = vmatprep.subr.bf16.mxu0 0
  %1835 = vmatpush1.bf16.msra.mxu0 %v501
  %1836 = vmatprep.subr.bf16.mxu0 0
  %1837 = vmatpush1.bf16.msra.mxu0 %v500
  %1838 = vmatprep.subr.bf16.mxu0 0
  %1839 = vmatpush1.bf16.msra.mxu0 %v499
  %1840 = vmatprep.subr.bf16.mxu0 0
  %1841 = vmatpush2.bf16.msra.mxu0 0
  %1842 = vmatprep.subr.bf16.mxu0 0
  %1843 = vmatpush2.bf16.msra.mxu0 0
  %1844 = vmatprep.subr.bf16.mxu0 0
  %1845 = vmatpush2.bf16.msra.mxu0 0
  %1846 = vmatprep.subr.bf16.mxu0 0
  %1847 = vmatpush2.bf16.msra.mxu0 0
  %1848 = vmatprep.subr.bf16.mxu0 0
  %1849 = vmatpush2.bf16.msra.mxu0 0
  %1850 = vmatprep.subr.bf16.mxu0 0
  %1851 = vmatpush2.bf16.msra.mxu0 0
  %1852 = vmatprep.subr.bf16.mxu0 0
  %1853 = vmatpush2.bf16.msra.mxu0 0
  %1854 = vmatprep.subr.bf16.mxu0 0
  %1855 = vmatpush2.bf16.msra.mxu0 0
  %1856 = vmatprep.mubr.bf16.mxu0 0
  %1857 = vmatmul.mubr.bf16.gmra.mxu0 %v1823
  %v1858 = vpop.f32.mrf.mxu0
  %v1859 = vadd.f32 0.0, %v1858
  %v1860 = vpop.f32.mrf.mxu0
  %v1861 = vpop.f32.mrf.mxu0
  %v1862 = vadd.f32 0.0, %v1861
  %v1863 = vpop.f32.mrf.mxu0
  %1864 = vdwg.mxu0
  %1873 = vrot.lane.b32.xlu0 %v1717, 64
  %v1874 = vpop.permute.xlu0 %1873
  %1875 = vrot.lane.b32.xlu0 %v1718, 64
  %v1876 = vpop.permute.xlu0 %1875
  %1877 = vrot.lane.b32.xlu0 %v1719, 64
  %v1878 = vpop.permute.xlu0 %1877
  %1879 = vrot.lane.b32.xlu0 %v1720, 64
  %v1880 = vpop.permute.xlu0 %1879
  %1881 = vrot.lane.b32.xlu0 %v1721, 64
  %v1882 = vpop.permute.xlu0 %1881
  %1883 = vrot.lane.b32.xlu0 %v1722, 64
  %v1884 = vpop.permute.xlu0 %1883
  %1885 = vrot.lane.b32.xlu0 %v1723, 64
  %v1886 = vpop.permute.xlu0 %1885
  %1887 = vrot.lane.b32.xlu0 %v1724, 64
  %v1888 = vpop.permute.xlu0 %1887
  %1897 = vmatprep.subr.bf16.mxu0 0
  %1898 = vmatpush1.bf16.msra.mxu0 %v1888
  %1899 = vmatprep.subr.bf16.mxu0 0
  %1900 = vmatpush1.bf16.msra.mxu0 %v1886
  %1901 = vmatprep.subr.bf16.mxu0 0
  %1902 = vmatpush1.bf16.msra.mxu0 %v1884
  %1903 = vmatprep.subr.bf16.mxu0 0
  %1904 = vmatpush1.bf16.msra.mxu0 %v1882
  %1905 = vmatprep.subr.bf16.mxu0 0
  %1906 = vmatpush1.bf16.msra.mxu0 %v1880
  %1907 = vmatprep.subr.bf16.mxu0 0
  %1908 = vmatpush1.bf16.msra.mxu0 %v1878
  %1909 = vmatprep.subr.bf16.mxu0 0
  %1910 = vmatpush1.bf16.msra.mxu0 %v1876
  %1911 = vmatprep.subr.bf16.mxu0 0
  %1912 = vmatpush1.bf16.msra.mxu0 %v1874
  %1913 = vmatprep.subr.bf16.mxu0 0
  %1914 = vmatpush2.bf16.msra.mxu0 0
  %1915 = vmatprep.subr.bf16.mxu0 0
  %1916 = vmatpush2.bf16.msra.mxu0 0
  %1917 = vmatprep.subr.bf16.mxu0 0
  %1918 = vmatpush2.bf16.msra.mxu0 0
  %1919 = vmatprep.subr.bf16.mxu0 0
  %1920 = vmatpush2.bf16.msra.mxu0 0
  %1921 = vmatprep.subr.bf16.mxu0 0
  %1922 = vmatpush2.bf16.msra.mxu0 0
  %1923 = vmatprep.subr.bf16.mxu0 0
  %1924 = vmatpush2.bf16.msra.mxu0 0
  %1925 = vmatprep.subr.bf16.mxu0 0
  %1926 = vmatpush2.bf16.msra.mxu0 0
  %1927 = vmatprep.subr.bf16.mxu0 0
  %1928 = vmatpush2.bf16.msra.mxu0 0
  %1929 = vmatprep.mubr.bf16.mxu0 0
  %1930 = vmatmul.mubr.bf16.gmra.mxu0 %v1823
  %v1931 = vpop.f32.mrf.mxu0
  %v1932 = vadd.f32 0.0, %v1931
  %v1933 = vpop.f32.mrf.mxu0
  %v1934 = vpop.f32.mrf.mxu0
  %v1935 = vadd.f32 0.0, %v1934
  %v1936 = vpop.f32.mrf.mxu0
  %1937 = vdwg.mxu0
  %v1938 = vrcp.pop %v1859
  %v1939 = vrcp.pop %v1862
  %v1940 = vmul.f32 %v1932, %v1938
  %v1941 = vmul.f32 %v1935, %v1939
  %v1942 = vpack.c.bf16 %v1941, %v1940
  %v1944 = vsel %vm74, %v1942, 0
  %1946 = vmatprep.subr.bf16.mxu0 0
  %1947 = vmatpush1.bf16.msra.mxu0 0
  %1948 = vmatprep.subr.bf16.mxu0 0
  %1949 = vmatpush1.bf16.msra.mxu0 0
  %1950 = vmatprep.subr.bf16.mxu0 0
  %1951 = vmatpush1.bf16.msra.mxu0 0
  %1952 = vmatprep.subr.bf16.mxu0 0
  %1953 = vmatpush1.bf16.msra.mxu0 0
  %1954 = vmatprep.subr.bf16.mxu0 0
  %1955 = vmatpush1.bf16.msra.mxu0 0
  %1956 = vmatprep.subr.bf16.mxu0 0
  %1957 = vmatpush1.bf16.msra.mxu0 0
  %1958 = vmatprep.subr.bf16.mxu0 0
  %1959 = vmatpush1.bf16.msra.mxu0 %v812
  %1960 = vmatprep.subr.bf16.mxu0 0
  %1961 = vmatpush1.bf16.msra.mxu0 %v811
  %1962 = vmatprep.subr.bf16.mxu0 0
  %1963 = vmatpush2.bf16.msra.mxu0 0
  %1964 = vmatprep.subr.bf16.mxu0 0
  %1965 = vmatpush2.bf16.msra.mxu0 0
  %1966 = vmatprep.subr.bf16.mxu0 0
  %1967 = vmatpush2.bf16.msra.mxu0 0
  %1968 = vmatprep.subr.bf16.mxu0 0
  %1969 = vmatpush2.bf16.msra.mxu0 0
  %1970 = vmatprep.subr.bf16.mxu0 0
  %1971 = vmatpush2.bf16.msra.mxu0 0
  %1972 = vmatprep.subr.bf16.mxu0 0
  %1973 = vmatpush2.bf16.msra.mxu0 0
  %1974 = vmatprep.subr.bf16.mxu0 0
  %1975 = vmatpush2.bf16.msra.mxu0 0
  %1976 = vmatprep.subr.bf16.mxu0 0
  %1977 = vmatpush2.bf16.msra.mxu0 0
  %1978 = vmatprep.mubr.bf16.mxu0 0
  %1979 = vmatmul.mubr.bf16.gmra.mxu0 %v1944
  %v1980 = vpop.f32.mrf.mxu0
  %v1981 = vadd.f32 %v801, %v1980
  %v1982 = vpop.f32.mrf.mxu0
  %v1983 = vpop.f32.mrf.mxu0
  %v1984 = vadd.f32 %v801, %v1983
  %v1985 = vpop.f32.mrf.mxu0
  %1986 = vdwg.mxu0
  %v1987 = vadd.f32 %v1981, %v35
  %v1988 = vadd.f32 %v1984, %v36
  %1989 = vst.msk [vmem:[%s7 + $0x40] sm:$0xff] %vm74, %v1987
  %1990 = vst.msk [vmem:[%s7 + $0x48] sm:$0xff] %vm74, %v1988
  %v1991 = vmul.bf16 %v443, %v508
  %v1992 = vmul.bf16 %v443, %v510
  %v1993 = vmul.bf16 %v443, %v512
  %v1994 = vmul.bf16 %v443, %v514
  %v1995 = vmul.bf16 %v443, %v516
  %v1996 = vmul.bf16 %v443, %v518
  %v1997 = vmul.bf16 %v443, %v520
  %v1998 = vmul.bf16 %v443, %v522
  %v1999 = vmul.bf16 %v443, %v540
  %v2000 = vmul.bf16 %v443, %v542
  %v2001 = vmul.bf16 %v443, %v544
  %v2002 = vmul.bf16 %v443, %v546
  %v2003 = vmul.bf16 %v443, %v548
  %v2004 = vmul.bf16 %v443, %v550
  %v2005 = vmul.bf16 %v443, %v552
  %v2006 = vmul.bf16 %v443, %v554
  %2015 = vrot.lane.b32.xlu0 %v1991, 96
  %v2016 = vpop.permute.xlu0 %2015
  %2017 = vrot.lane.b32.xlu0 %v1992, 96
  %v2018 = vpop.permute.xlu0 %2017
  %2019 = vrot.lane.b32.xlu0 %v1993, 96
  %v2020 = vpop.permute.xlu0 %2019
  %2021 = vrot.lane.b32.xlu0 %v1994, 96
  %v2022 = vpop.permute.xlu0 %2021
  %2023 = vrot.lane.b32.xlu0 %v1995, 96
  %v2024 = vpop.permute.xlu0 %2023
  %2025 = vrot.lane.b32.xlu0 %v1996, 96
  %v2026 = vpop.permute.xlu0 %2025
  %2027 = vrot.lane.b32.xlu0 %v1997, 96
  %v2028 = vpop.permute.xlu0 %2027
  %2029 = vrot.lane.b32.xlu0 %v1998, 96
  %v2030 = vpop.permute.xlu0 %2029
  %v2032 = vsel %vm74, %v443, 0
  %v2035 = vsel %vm74, %v2016, 0
  %v2038 = vsel %vm74, %v2018, 0
  %v2041 = vsel %vm74, %v2020, 0
  %v2044 = vsel %vm74, %v2022, 0
  %v2047 = vsel %vm74, %v2024, 0
  %v2050 = vsel %vm74, %v2026, 0
  %v2053 = vsel %vm74, %v2028, 0
  %v2056 = vsel %vm74, %v2030, 0
  %2058 = vmatprep.subr.bf16.mxu0 0
  %2059 = vmatpush1.bf16.xpose.msra.mxu0 %v2056
  %2060 = vmatprep.subr.bf16.mxu0 0
  %2061 = vmatpush1.bf16.xpose.msra.mxu0 %v2053
  %2062 = vmatprep.subr.bf16.mxu0 0
  %2063 = vmatpush1.bf16.xpose.msra.mxu0 %v2050
  %2064 = vmatprep.subr.bf16.mxu0 0
  %2065 = vmatpush1.bf16.xpose.msra.mxu0 %v2047
  %2066 = vmatprep.subr.bf16.mxu0 0
  %2067 = vmatpush1.bf16.xpose.msra.mxu0 %v2044
  %2068 = vmatprep.subr.bf16.mxu0 0
  %2069 = vmatpush1.bf16.xpose.msra.mxu0 %v2041
  %2070 = vmatprep.subr.bf16.mxu0 0
  %2071 = vmatpush1.bf16.xpose.msra.mxu0 %v2038
  %2072 = vmatprep.subr.bf16.mxu0 0
  %2073 = vmatpush1.bf16.xpose.msra.mxu0 %v2035
  %2074 = vmatprep.subr.bf16.mxu0 0
  %2075 = vmatpush2.bf16.xpose.msra.mxu0 0
  %2076 = vmatprep.subr.bf16.mxu0 0
  %2077 = vmatpush2.bf16.xpose.msra.mxu0 0
  %2078 = vmatprep.subr.bf16.mxu0 0
  %2079 = vmatpush2.bf16.xpose.msra.mxu0 0
  %2080 = vmatprep.subr.bf16.mxu0 0
  %2081 = vmatpush2.bf16.xpose.msra.mxu0 0
  %2082 = vmatprep.subr.bf16.mxu0 0
  %2083 = vmatpush2.bf16.xpose.msra.mxu0 0
  %2084 = vmatprep.subr.bf16.mxu0 0
  %2085 = vmatpush2.bf16.xpose.msra.mxu0 0
  %2086 = vmatprep.subr.bf16.mxu0 0
  %2087 = vmatpush2.bf16.xpose.msra.mxu0 0
  %2088 = vmatprep.subr.bf16.mxu0 0
  %2089 = vmatpush2.bf16.xpose.msra.mxu0 0
  %2090 = vmatprep.mubr.bf16.mxu0 0
  %2091 = vmatmul.mubr.bf16.gmra.mxu0 %v2032
  %v2092 = vpop.f32.mrf.mxu0
  %v2093 = vadd.f32 0.0, %v2092
  %v2094 = vpop.f32.mrf.mxu0
  %v2095 = vpop.f32.mrf.mxu0
  %v2096 = vadd.f32 0.0, %v2095
  %v2097 = vpop.f32.mrf.mxu0
  %2098 = vdwg.mxu0
  %v2099 = vmul.f32 %v2093, 0.5
  %v2100 = vmul.f32 %v2096, 0.5
  %v2101 = vmul.f32 %v2099, 1.442695
  %v2102 = vpow.pop %v2101
  %v2103 = vmul.f32 %v2100, 1.442695
  %v2104 = vpow.pop %v2103
  %v2105 = vpack.c.bf16 %v2104, %v2102
  %2106 = vmatprep.subr.bf16.mxu0 0
  %2107 = vmatpush1.bf16.msra.mxu0 %v506
  %2108 = vmatprep.subr.bf16.mxu0 0
  %2109 = vmatpush1.bf16.msra.mxu0 %v505
  %2110 = vmatprep.subr.bf16.mxu0 0
  %2111 = vmatpush1.bf16.msra.mxu0 %v504
  %2112 = vmatprep.subr.bf16.mxu0 0
  %2113 = vmatpush1.bf16.msra.mxu0 %v503
  %2114 = vmatprep.subr.bf16.mxu0 0
  %2115 = vmatpush1.bf16.msra.mxu0 %v502
  %2116 = vmatprep.subr.bf16.mxu0 0
  %2117 = vmatpush1.bf16.msra.mxu0 %v501
  %2118 = vmatprep.subr.bf16.mxu0 0
  %2119 = vmatpush1.bf16.msra.mxu0 %v500
  %2120 = vmatprep.subr.bf16.mxu0 0
  %2121 = vmatpush1.bf16.msra.mxu0 %v499
  %2122 = vmatprep.subr.bf16.mxu0 0
  %2123 = vmatpush2.bf16.msra.mxu0 0
  %2124 = vmatprep.subr.bf16.mxu0 0
  %2125 = vmatpush2.bf16.msra.mxu0 0
  %2126 = vmatprep.subr.bf16.mxu0 0
  %2127 = vmatpush2.bf16.msra.mxu0 0
  %2128 = vmatprep.subr.bf16.mxu0 0
  %2129 = vmatpush2.bf16.msra.mxu0 0
  %2130 = vmatprep.subr.bf16.mxu0 0
  %2131 = vmatpush2.bf16.msra.mxu0 0
  %2132 = vmatprep.subr.bf16.mxu0 0
  %2133 = vmatpush2.bf16.msra.mxu0 0
  %2134 = vmatprep.subr.bf16.mxu0 0
  %2135 = vmatpush2.bf16.msra.mxu0 0
  %2136 = vmatprep.subr.bf16.mxu0 0
  %2137 = vmatpush2.bf16.msra.mxu0 0
  %2138 = vmatprep.mubr.bf16.mxu0 0
  %2139 = vmatmul.mubr.bf16.gmra.mxu0 %v2105
  %v2140 = vpop.f32.mrf.mxu0
  %v2141 = vadd.f32 0.0, %v2140
  %v2142 = vpop.f32.mrf.mxu0
  %v2143 = vpop.f32.mrf.mxu0
  %v2144 = vadd.f32 0.0, %v2143
  %v2145 = vpop.f32.mrf.mxu0
  %2146 = vdwg.mxu0
  %2155 = vrot.lane.b32.xlu0 %v1999, 64
  %v2156 = vpop.permute.xlu0 %2155
  %2157 = vrot.lane.b32.xlu0 %v2000, 64
  %v2158 = vpop.permute.xlu0 %2157
  %2159 = vrot.lane.b32.xlu0 %v2001, 64
  %v2160 = vpop.permute.xlu0 %2159
  %2161 = vrot.lane.b32.xlu0 %v2002, 64
  %v2162 = vpop.permute.xlu0 %2161
  %2163 = vrot.lane.b32.xlu0 %v2003, 64
  %v2164 = vpop.permute.xlu0 %2163
  %2165 = vrot.lane.b32.xlu0 %v2004, 64
  %v2166 = vpop.permute.xlu0 %2165
  %2167 = vrot.lane.b32.xlu0 %v2005, 64
  %v2168 = vpop.permute.xlu0 %2167
  %2169 = vrot.lane.b32.xlu0 %v2006, 64
  %v2170 = vpop.permute.xlu0 %2169
  %2179 = vmatprep.subr.bf16.mxu0 0
  %2180 = vmatpush1.bf16.msra.mxu0 %v2170
  %2181 = vmatprep.subr.bf16.mxu0 0
  %2182 = vmatpush1.bf16.msra.mxu0 %v2168
  %2183 = vmatprep.subr.bf16.mxu0 0
  %2184 = vmatpush1.bf16.msra.mxu0 %v2166
  %2185 = vmatprep.subr.bf16.mxu0 0
  %2186 = vmatpush1.bf16.msra.mxu0 %v2164
  %2187 = vmatprep.subr.bf16.mxu0 0
  %2188 = vmatpush1.bf16.msra.mxu0 %v2162
  %2189 = vmatprep.subr.bf16.mxu0 0
  %2190 = vmatpush1.bf16.msra.mxu0 %v2160
  %2191 = vmatprep.subr.bf16.mxu0 0
  %2192 = vmatpush1.bf16.msra.mxu0 %v2158
  %2193 = vmatprep.subr.bf16.mxu0 0
  %2194 = vmatpush1.bf16.msra.mxu0 %v2156
  %2195 = vmatprep.subr.bf16.mxu0 0
  %2196 = vmatpush2.bf16.msra.mxu0 0
  %2197 = vmatprep.subr.bf16.mxu0 0
  %2198 = vmatpush2.bf16.msra.mxu0 0
  %2199 = vmatprep.subr.bf16.mxu0 0
  %2200 = vmatpush2.bf16.msra.mxu0 0
  %2201 = vmatprep.subr.bf16.mxu0 0
  %2202 = vmatpush2.bf16.msra.mxu0 0
  %2203 = vmatprep.subr.bf16.mxu0 0
  %2204 = vmatpush2.bf16.msra.mxu0 0
  %2205 = vmatprep.subr.bf16.mxu0 0
  %2206 = vmatpush2.bf16.msra.mxu0 0
  %2207 = vmatprep.subr.bf16.mxu0 0
  %2208 = vmatpush2.bf16.msra.mxu0 0
  %2209 = vmatprep.subr.bf16.mxu0 0
  %2210 = vmatpush2.bf16.msra.mxu0 0
  %2211 = vmatprep.mubr.bf16.mxu0 0
  %2212 = vmatmul.mubr.bf16.gmra.mxu0 %v2105
  %v2213 = vpop.f32.mrf.mxu0
  %v2214 = vadd.f32 0.0, %v2213
  %v2215 = vpop.f32.mrf.mxu0
  %v2216 = vpop.f32.mrf.mxu0
  %v2217 = vadd.f32 0.0, %v2216
  %v2218 = vpop.f32.mrf.mxu0
  %2219 = vdwg.mxu0
  %v2220 = vrcp.pop %v2141
  %v2221 = vrcp.pop %v2144
  %v2222 = vmul.f32 %v2214, %v2220
  %v2223 = vmul.f32 %v2217, %v2221
  %v2224 = vpack.c.bf16 %v2223, %v2222
  %v2226 = vsel %vm74, %v2224, 0
  %2228 = vmatprep.subr.bf16.mxu0 0
  %2229 = vmatpush1.bf16.msra.mxu0 0
  %2230 = vmatprep.subr.bf16.mxu0 0
  %2231 = vmatpush1.bf16.msra.mxu0 0
  %2232 = vmatprep.subr.bf16.mxu0 0
  %2233 = vmatpush1.bf16.msra.mxu0 0
  %2234 = vmatprep.subr.bf16.mxu0 0
  %2235 = vmatpush1.bf16.msra.mxu0 0
  %2236 = vmatprep.subr.bf16.mxu0 0
  %2237 = vmatpush1.bf16.msra.mxu0 0
  %2238 = vmatprep.subr.bf16.mxu0 0
  %2239 = vmatpush1.bf16.msra.mxu0 0
  %2240 = vmatprep.subr.bf16.mxu0 0
  %2241 = vmatpush1.bf16.msra.mxu0 %v812
  %2242 = vmatprep.subr.bf16.mxu0 0
  %2243 = vmatpush1.bf16.msra.mxu0 %v811
  %2244 = vmatprep.subr.bf16.mxu0 0
  %2245 = vmatpush2.bf16.msra.mxu0 0
  %2246 = vmatprep.subr.bf16.mxu0 0
  %2247 = vmatpush2.bf16.msra.mxu0 0
  %2248 = vmatprep.subr.bf16.mxu0 0
  %2249 = vmatpush2.bf16.msra.mxu0 0
  %2250 = vmatprep.subr.bf16.mxu0 0
  %2251 = vmatpush2.bf16.msra.mxu0 0
  %2252 = vmatprep.subr.bf16.mxu0 0
  %2253 = vmatpush2.bf16.msra.mxu0 0
  %2254 = vmatprep.subr.bf16.mxu0 0
  %2255 = vmatpush2.bf16.msra.mxu0 0
  %2256 = vmatprep.subr.bf16.mxu0 0
  %2257 = vmatpush2.bf16.msra.mxu0 0
  %2258 = vmatprep.subr.bf16.mxu0 0
  %2259 = vmatpush2.bf16.msra.mxu0 0
  %2260 = vmatprep.mubr.bf16.mxu0 0
  %2261 = vmatmul.mubr.bf16.gmra.mxu0 %v2226
  %v2262 = vpop.f32.mrf.mxu0
  %v2263 = vadd.f32 %v801, %v2262
  %v2264 = vpop.f32.mrf.mxu0
  %v2265 = vpop.f32.mrf.mxu0
  %v2266 = vadd.f32 %v801, %v2265
  %v2267 = vpop.f32.mrf.mxu0
  %2268 = vdwg.mxu0
  %v2269 = vadd.f32 %v2263, %v37
  %v2270 = vadd.f32 %v2266, %v38
  %2271 = vst.msk [vmem:[%s7 + $0x50] sm:$0xff] %vm74, %v2269
  %2272 = vst.msk [vmem:[%s7 + $0x58] sm:$0xff] %vm74, %v2270
  %v2273 = vmul.bf16 %v444, %v508
  %v2274 = vmul.bf16 %v444, %v510
  %v2275 = vmul.bf16 %v444, %v512
  %v2276 = vmul.bf16 %v444, %v514
  %v2277 = vmul.bf16 %v444, %v516
  %v2278 = vmul.bf16 %v444, %v518
  %v2279 = vmul.bf16 %v444, %v520
  %v2280 = vmul.bf16 %v444, %v522
  %v2281 = vmul.bf16 %v444, %v540
  %v2282 = vmul.bf16 %v444, %v542
  %v2283 = vmul.bf16 %v444, %v544
  %v2284 = vmul.bf16 %v444, %v546
  %v2285 = vmul.bf16 %v444, %v548
  %v2286 = vmul.bf16 %v444, %v550
  %v2287 = vmul.bf16 %v444, %v552
  %v2288 = vmul.bf16 %v444, %v554
  %2297 = vrot.lane.b32.xlu0 %v2273, 96
  %v2298 = vpop.permute.xlu0 %2297
  %2299 = vrot.lane.b32.xlu0 %v2274, 96
  %v2300 = vpop.permute.xlu0 %2299
  %2301 = vrot.lane.b32.xlu0 %v2275, 96
  %v2302 = vpop.permute.xlu0 %2301
  %2303 = vrot.lane.b32.xlu0 %v2276, 96
  %v2304 = vpop.permute.xlu0 %2303
  %2305 = vrot.lane.b32.xlu0 %v2277, 96
  %v2306 = vpop.permute.xlu0 %2305
  %2307 = vrot.lane.b32.xlu0 %v2278, 96
  %v2308 = vpop.permute.xlu0 %2307
  %2309 = vrot.lane.b32.xlu0 %v2279, 96
  %v2310 = vpop.permute.xlu0 %2309
  %2311 = vrot.lane.b32.xlu0 %v2280, 96
  %v2312 = vpop.permute.xlu0 %2311
  %v2314 = vsel %vm74, %v444, 0
  %v2317 = vsel %vm74, %v2298, 0
  %v2320 = vsel %vm74, %v2300, 0
  %v2323 = vsel %vm74, %v2302, 0
  %v2326 = vsel %vm74, %v2304, 0
  %v2329 = vsel %vm74, %v2306, 0
  %v2332 = vsel %vm74, %v2308, 0
  %v2335 = vsel %vm74, %v2310, 0
  %v2338 = vsel %vm74, %v2312, 0
  %2340 = vmatprep.subr.bf16.mxu0 0
  %2341 = vmatpush1.bf16.xpose.msra.mxu0 %v2338
  %2342 = vmatprep.subr.bf16.mxu0 0
  %2343 = vmatpush1.bf16.xpose.msra.mxu0 %v2335
  %2344 = vmatprep.subr.bf16.mxu0 0
  %2345 = vmatpush1.bf16.xpose.msra.mxu0 %v2332
  %2346 = vmatprep.subr.bf16.mxu0 0
  %2347 = vmatpush1.bf16.xpose.msra.mxu0 %v2329
  %2348 = vmatprep.subr.bf16.mxu0 0
  %2349 = vmatpush1.bf16.xpose.msra.mxu0 %v2326
  %2350 = vmatprep.subr.bf16.mxu0 0
  %2351 = vmatpush1.bf16.xpose.msra.mxu0 %v2323
  %2352 = vmatprep.subr.bf16.mxu0 0
  %2353 = vmatpush1.bf16.xpose.msra.mxu0 %v2320
  %2354 = vmatprep.subr.bf16.mxu0 0
  %2355 = vmatpush1.bf16.xpose.msra.mxu0 %v2317
  %2356 = vmatprep.subr.bf16.mxu0 0
  %2357 = vmatpush2.bf16.xpose.msra.mxu0 0
  %2358 = vmatprep.subr.bf16.mxu0 0
  %2359 = vmatpush2.bf16.xpose.msra.mxu0 0
  %2360 = vmatprep.subr.bf16.mxu0 0
  %2361 = vmatpush2.bf16.xpose.msra.mxu0 0
  %2362 = vmatprep.subr.bf16.mxu0 0
  %2363 = vmatpush2.bf16.xpose.msra.mxu0 0
  %2364 = vmatprep.subr.bf16.mxu0 0
  %2365 = vmatpush2.bf16.xpose.msra.mxu0 0
  %2366 = vmatprep.subr.bf16.mxu0 0
  %2367 = vmatpush2.bf16.xpose.msra.mxu0 0
  %2368 = vmatprep.subr.bf16.mxu0 0
  %2369 = vmatpush2.bf16.xpose.msra.mxu0 0
  %2370 = vmatprep.subr.bf16.mxu0 0
  %2371 = vmatpush2.bf16.xpose.msra.mxu0 0
  %2372 = vmatprep.mubr.bf16.mxu0 0
  %2373 = vmatmul.mubr.bf16.gmra.mxu0 %v2314
  %v2374 = vpop.f32.mrf.mxu0
  %v2375 = vadd.f32 0.0, %v2374
  %v2376 = vpop.f32.mrf.mxu0
  %v2377 = vpop.f32.mrf.mxu0
  %v2378 = vadd.f32 0.0, %v2377
  %v2379 = vpop.f32.mrf.mxu0
  %2380 = vdwg.mxu0
  %v2381 = vmul.f32 %v2375, 0.5
  %v2382 = vmul.f32 %v2378, 0.5
  %v2383 = vmul.f32 %v2381, 1.442695
  %v2384 = vpow.pop %v2383
  %v2385 = vmul.f32 %v2382, 1.442695
  %v2386 = vpow.pop %v2385
  %v2387 = vpack.c.bf16 %v2386, %v2384
  %2388 = vmatprep.subr.bf16.mxu0 0
  %2389 = vmatpush1.bf16.msra.mxu0 %v506
  %2390 = vmatprep.subr.bf16.mxu0 0
  %2391 = vmatpush1.bf16.msra.mxu0 %v505
  %2392 = vmatprep.subr.bf16.mxu0 0
  %2393 = vmatpush1.bf16.msra.mxu0 %v504
  %2394 = vmatprep.subr.bf16.mxu0 0
  %2395 = vmatpush1.bf16.msra.mxu0 %v503
  %2396 = vmatprep.subr.bf16.mxu0 0
  %2397 = vmatpush1.bf16.msra.mxu0 %v502
  %2398 = vmatprep.subr.bf16.mxu0 0
  %2399 = vmatpush1.bf16.msra.mxu0 %v501
  %2400 = vmatprep.subr.bf16.mxu0 0
  %2401 = vmatpush1.bf16.msra.mxu0 %v500
  %2402 = vmatprep.subr.bf16.mxu0 0
  %2403 = vmatpush1.bf16.msra.mxu0 %v499
  %2404 = vmatprep.subr.bf16.mxu0 0
  %2405 = vmatpush2.bf16.msra.mxu0 0
  %2406 = vmatprep.subr.bf16.mxu0 0
  %2407 = vmatpush2.bf16.msra.mxu0 0
  %2408 = vmatprep.subr.bf16.mxu0 0
  %2409 = vmatpush2.bf16.msra.mxu0 0
  %2410 = vmatprep.subr.bf16.mxu0 0
  %2411 = vmatpush2.bf16.msra.mxu0 0
  %2412 = vmatprep.subr.bf16.mxu0 0
  %2413 = vmatpush2.bf16.msra.mxu0 0
  %2414 = vmatprep.subr.bf16.mxu0 0
  %2415 = vmatpush2.bf16.msra.mxu0 0
  %2416 = vmatprep.subr.bf16.mxu0 0
  %2417 = vmatpush2.bf16.msra.mxu0 0
  %2418 = vmatprep.subr.bf16.mxu0 0
  %2419 = vmatpush2.bf16.msra.mxu0 0
  %2420 = vmatprep.mubr.bf16.mxu0 0
  %2421 = vmatmul.mubr.bf16.gmra.mxu0 %v2387
  %v2422 = vpop.f32.mrf.mxu0
  %v2423 = vadd.f32 0.0, %v2422
  %v2424 = vpop.f32.mrf.mxu0
  %v2425 = vpop.f32.mrf.mxu0
  %v2426 = vadd.f32 0.0, %v2425
  %v2427 = vpop.f32.mrf.mxu0
  %2428 = vdwg.mxu0
  %2437 = vrot.lane.b32.xlu0 %v2281, 64
  %v2438 = vpop.permute.xlu0 %2437
  %2439 = vrot.lane.b32.xlu0 %v2282, 64
  %v2440 = vpop.permute.xlu0 %2439
  %2441 = vrot.lane.b32.xlu0 %v2283, 64
  %v2442 = vpop.permute.xlu0 %2441
  %2443 = vrot.lane.b32.xlu0 %v2284, 64
  %v2444 = vpop.permute.xlu0 %2443
  %2445 = vrot.lane.b32.xlu0 %v2285, 64
  %v2446 = vpop.permute.xlu0 %2445
  %2447 = vrot.lane.b32.xlu0 %v2286, 64
  %v2448 = vpop.permute.xlu0 %2447
  %2449 = vrot.lane.b32.xlu0 %v2287, 64
  %v2450 = vpop.permute.xlu0 %2449
  %2451 = vrot.lane.b32.xlu0 %v2288, 64
  %v2452 = vpop.permute.xlu0 %2451
  %2461 = vmatprep.subr.bf16.mxu0 0
  %2462 = vmatpush1.bf16.msra.mxu0 %v2452
  %2463 = vmatprep.subr.bf16.mxu0 0
  %2464 = vmatpush1.bf16.msra.mxu0 %v2450
  %2465 = vmatprep.subr.bf16.mxu0 0
  %2466 = vmatpush1.bf16.msra.mxu0 %v2448
  %2467 = vmatprep.subr.bf16.mxu0 0
  %2468 = vmatpush1.bf16.msra.mxu0 %v2446
  %2469 = vmatprep.subr.bf16.mxu0 0
  %2470 = vmatpush1.bf16.msra.mxu0 %v2444
  %2471 = vmatprep.subr.bf16.mxu0 0
  %2472 = vmatpush1.bf16.msra.mxu0 %v2442
  %2473 = vmatprep.subr.bf16.mxu0 0
  %2474 = vmatpush1.bf16.msra.mxu0 %v2440
  %2475 = vmatprep.subr.bf16.mxu0 0
  %2476 = vmatpush1.bf16.msra.mxu0 %v2438
  %2477 = vmatprep.subr.bf16.mxu0 0
  %2478 = vmatpush2.bf16.msra.mxu0 0
  %2479 = vmatprep.subr.bf16.mxu0 0
  %2480 = vmatpush2.bf16.msra.mxu0 0
  %2481 = vmatprep.subr.bf16.mxu0 0
  %2482 = vmatpush2.bf16.msra.mxu0 0
  %2483 = vmatprep.subr.bf16.mxu0 0
  %2484 = vmatpush2.bf16.msra.mxu0 0
  %2485 = vmatprep.subr.bf16.mxu0 0
  %2486 = vmatpush2.bf16.msra.mxu0 0
  %2487 = vmatprep.subr.bf16.mxu0 0
  %2488 = vmatpush2.bf16.msra.mxu0 0
  %2489 = vmatprep.subr.bf16.mxu0 0
  %2490 = vmatpush2.bf16.msra.mxu0 0
  %2491 = vmatprep.subr.bf16.mxu0 0
  %2492 = vmatpush2.bf16.msra.mxu0 0
  %2493 = vmatprep.mubr.bf16.mxu0 0
  %2494 = vmatmul.mubr.bf16.gmra.mxu0 %v2387
  %v2495 = vpop.f32.mrf.mxu0
  %v2496 = vadd.f32 0.0, %v2495
  %v2497 = vpop.f32.mrf.mxu0
  %v2498 = vpop.f32.mrf.mxu0
  %v2499 = vadd.f32 0.0, %v2498
  %v2500 = vpop.f32.mrf.mxu0
  %2501 = vdwg.mxu0
  %v2502 = vrcp.pop %v2423
  %v2503 = vrcp.pop %v2426
  %v2504 = vmul.f32 %v2496, %v2502
  %v2505 = vmul.f32 %v2499, %v2503
  %v2506 = vpack.c.bf16 %v2505, %v2504
  %v2508 = vsel %vm74, %v2506, 0
  %2510 = vmatprep.subr.bf16.mxu0 0
  %2511 = vmatpush1.bf16.msra.mxu0 0
  %2512 = vmatprep.subr.bf16.mxu0 0
  %2513 = vmatpush1.bf16.msra.mxu0 0
  %2514 = vmatprep.subr.bf16.mxu0 0
  %2515 = vmatpush1.bf16.msra.mxu0 0
  %2516 = vmatprep.subr.bf16.mxu0 0
  %2517 = vmatpush1.bf16.msra.mxu0 0
  %2518 = vmatprep.subr.bf16.mxu0 0
  %2519 = vmatpush1.bf16.msra.mxu0 0
  %2520 = vmatprep.subr.bf16.mxu0 0
  %2521 = vmatpush1.bf16.msra.mxu0 0
  %2522 = vmatprep.subr.bf16.mxu0 0
  %2523 = vmatpush1.bf16.msra.mxu0 %v812
  %2524 = vmatprep.subr.bf16.mxu0 0
  %2525 = vmatpush1.bf16.msra.mxu0 %v811
  %2526 = vmatprep.subr.bf16.mxu0 0
  %2527 = vmatpush2.bf16.msra.mxu0 0
  %2528 = vmatprep.subr.bf16.mxu0 0
  %2529 = vmatpush2.bf16.msra.mxu0 0
  %2530 = vmatprep.subr.bf16.mxu0 0
  %2531 = vmatpush2.bf16.msra.mxu0 0
  %2532 = vmatprep.subr.bf16.mxu0 0
  %2533 = vmatpush2.bf16.msra.mxu0 0
  %2534 = vmatprep.subr.bf16.mxu0 0
  %2535 = vmatpush2.bf16.msra.mxu0 0
  %2536 = vmatprep.subr.bf16.mxu0 0
  %2537 = vmatpush2.bf16.msra.mxu0 0
  %2538 = vmatprep.subr.bf16.mxu0 0
  %2539 = vmatpush2.bf16.msra.mxu0 0
  %2540 = vmatprep.subr.bf16.mxu0 0
  %2541 = vmatpush2.bf16.msra.mxu0 0
  %2542 = vmatprep.mubr.bf16.mxu0 0
  %2543 = vmatmul.mubr.bf16.gmra.mxu0 %v2508
  %v2544 = vpop.f32.mrf.mxu0
  %v2545 = vadd.f32 %v801, %v2544
  %v2546 = vpop.f32.mrf.mxu0
  %v2547 = vpop.f32.mrf.mxu0
  %v2548 = vadd.f32 %v801, %v2547
  %v2549 = vpop.f32.mrf.mxu0
  %2550 = vdwg.mxu0
  %v2551 = vadd.f32 %v2545, %v39
  %v2552 = vadd.f32 %v2548, %v40
  %2553 = vst.msk [vmem:[%s7 + $0x60] sm:$0xff] %vm74, %v2551
  %2554 = vst.msk [vmem:[%s7 + $0x68] sm:$0xff] %vm74, %v2552
  %v2555 = vmul.bf16 %v445, %v508
  %v2556 = vmul.bf16 %v445, %v510
  %v2557 = vmul.bf16 %v445, %v512
  %v2558 = vmul.bf16 %v445, %v514
  %v2559 = vmul.bf16 %v445, %v516
  %v2560 = vmul.bf16 %v445, %v518
  %v2561 = vmul.bf16 %v445, %v520
  %v2562 = vmul.bf16 %v445, %v522
  %v2563 = vmul.bf16 %v445, %v540
  %v2564 = vmul.bf16 %v445, %v542
  %v2565 = vmul.bf16 %v445, %v544
  %v2566 = vmul.bf16 %v445, %v546
  %v2567 = vmul.bf16 %v445, %v548
  %v2568 = vmul.bf16 %v445, %v550
  %v2569 = vmul.bf16 %v445, %v552
  %v2570 = vmul.bf16 %v445, %v554
  %2579 = vrot.lane.b32.xlu0 %v2555, 96
  %v2580 = vpop.permute.xlu0 %2579
  %2581 = vrot.lane.b32.xlu0 %v2556, 96
  %v2582 = vpop.permute.xlu0 %2581
  %2583 = vrot.lane.b32.xlu0 %v2557, 96
  %v2584 = vpop.permute.xlu0 %2583
  %2585 = vrot.lane.b32.xlu0 %v2558, 96
  %v2586 = vpop.permute.xlu0 %2585
  %2587 = vrot.lane.b32.xlu0 %v2559, 96
  %v2588 = vpop.permute.xlu0 %2587
  %2589 = vrot.lane.b32.xlu0 %v2560, 96
  %v2590 = vpop.permute.xlu0 %2589
  %2591 = vrot.lane.b32.xlu0 %v2561, 96
  %v2592 = vpop.permute.xlu0 %2591
  %2593 = vrot.lane.b32.xlu0 %v2562, 96
  %v2594 = vpop.permute.xlu0 %2593
  %v2596 = vsel %vm74, %v445, 0
  %v2599 = vsel %vm74, %v2580, 0
  %v2602 = vsel %vm74, %v2582, 0
  %v2605 = vsel %vm74, %v2584, 0
  %v2608 = vsel %vm74, %v2586, 0
  %v2611 = vsel %vm74, %v2588, 0
  %v2614 = vsel %vm74, %v2590, 0
  %v2617 = vsel %vm74, %v2592, 0
  %v2620 = vsel %vm74, %v2594, 0
  %2622 = vmatprep.subr.bf16.mxu0 0
  %2623 = vmatpush1.bf16.xpose.msra.mxu0 %v2620
  %2624 = vmatprep.subr.bf16.mxu0 0
  %2625 = vmatpush1.bf16.xpose.msra.mxu0 %v2617
  %2626 = vmatprep.subr.bf16.mxu0 0
  %2627 = vmatpush1.bf16.xpose.msra.mxu0 %v2614
  %2628 = vmatprep.subr.bf16.mxu0 0
  %2629 = vmatpush1.bf16.xpose.msra.mxu0 %v2611
  %2630 = vmatprep.subr.bf16.mxu0 0
  %2631 = vmatpush1.bf16.xpose.msra.mxu0 %v2608
  %2632 = vmatprep.subr.bf16.mxu0 0
  %2633 = vmatpush1.bf16.xpose.msra.mxu0 %v2605
  %2634 = vmatprep.subr.bf16.mxu0 0
  %2635 = vmatpush1.bf16.xpose.msra.mxu0 %v2602
  %2636 = vmatprep.subr.bf16.mxu0 0
  %2637 = vmatpush1.bf16.xpose.msra.mxu0 %v2599
  %2638 = vmatprep.subr.bf16.mxu0 0
  %2639 = vmatpush2.bf16.xpose.msra.mxu0 0
  %2640 = vmatprep.subr.bf16.mxu0 0
  %2641 = vmatpush2.bf16.xpose.msra.mxu0 0
  %2642 = vmatprep.subr.bf16.mxu0 0
  %2643 = vmatpush2.bf16.xpose.msra.mxu0 0
  %2644 = vmatprep.subr.bf16.mxu0 0
  %2645 = vmatpush2.bf16.xpose.msra.mxu0 0
  %2646 = vmatprep.subr.bf16.mxu0 0
  %2647 = vmatpush2.bf16.xpose.msra.mxu0 0
  %2648 = vmatprep.subr.bf16.mxu0 0
  %2649 = vmatpush2.bf16.xpose.msra.mxu0 0
  %2650 = vmatprep.subr.bf16.mxu0 0
  %2651 = vmatpush2.bf16.xpose.msra.mxu0 0
  %2652 = vmatprep.subr.bf16.mxu0 0
  %2653 = vmatpush2.bf16.xpose.msra.mxu0 0
  %2654 = vmatprep.mubr.bf16.mxu0 0
  %2655 = vmatmul.mubr.bf16.gmra.mxu0 %v2596
  %v2656 = vpop.f32.mrf.mxu0
  %v2657 = vadd.f32 0.0, %v2656
  %v2658 = vpop.f32.mrf.mxu0
  %v2659 = vpop.f32.mrf.mxu0
  %v2660 = vadd.f32 0.0, %v2659
  %v2661 = vpop.f32.mrf.mxu0
  %2662 = vdwg.mxu0
  %v2663 = vmul.f32 %v2657, 0.5
  %v2664 = vmul.f32 %v2660, 0.5
  %v2665 = vmul.f32 %v2663, 1.442695
  %v2666 = vpow.pop %v2665
  %v2667 = vmul.f32 %v2664, 1.442695
  %v2668 = vpow.pop %v2667
  %v2669 = vpack.c.bf16 %v2668, %v2666
  %2670 = vmatprep.subr.bf16.mxu0 0
  %2671 = vmatpush1.bf16.msra.mxu0 %v506
  %2672 = vmatprep.subr.bf16.mxu0 0
  %2673 = vmatpush1.bf16.msra.mxu0 %v505
  %2674 = vmatprep.subr.bf16.mxu0 0
  %2675 = vmatpush1.bf16.msra.mxu0 %v504
  %2676 = vmatprep.subr.bf16.mxu0 0
  %2677 = vmatpush1.bf16.msra.mxu0 %v503
  %2678 = vmatprep.subr.bf16.mxu0 0
  %2679 = vmatpush1.bf16.msra.mxu0 %v502
  %2680 = vmatprep.subr.bf16.mxu0 0
  %2681 = vmatpush1.bf16.msra.mxu0 %v501
  %2682 = vmatprep.subr.bf16.mxu0 0
  %2683 = vmatpush1.bf16.msra.mxu0 %v500
  %2684 = vmatprep.subr.bf16.mxu0 0
  %2685 = vmatpush1.bf16.msra.mxu0 %v499
  %2686 = vmatprep.subr.bf16.mxu0 0
  %2687 = vmatpush2.bf16.msra.mxu0 0
  %2688 = vmatprep.subr.bf16.mxu0 0
  %2689 = vmatpush2.bf16.msra.mxu0 0
  %2690 = vmatprep.subr.bf16.mxu0 0
  %2691 = vmatpush2.bf16.msra.mxu0 0
  %2692 = vmatprep.subr.bf16.mxu0 0
  %2693 = vmatpush2.bf16.msra.mxu0 0
  %2694 = vmatprep.subr.bf16.mxu0 0
  %2695 = vmatpush2.bf16.msra.mxu0 0
  %2696 = vmatprep.subr.bf16.mxu0 0
  %2697 = vmatpush2.bf16.msra.mxu0 0
  %2698 = vmatprep.subr.bf16.mxu0 0
  %2699 = vmatpush2.bf16.msra.mxu0 0
  %2700 = vmatprep.subr.bf16.mxu0 0
  %2701 = vmatpush2.bf16.msra.mxu0 0
  %2702 = vmatprep.mubr.bf16.mxu0 0
  %2703 = vmatmul.mubr.bf16.gmra.mxu0 %v2669
  %v2704 = vpop.f32.mrf.mxu0
  %v2705 = vadd.f32 0.0, %v2704
  %v2706 = vpop.f32.mrf.mxu0
  %v2707 = vpop.f32.mrf.mxu0
  %v2708 = vadd.f32 0.0, %v2707
  %v2709 = vpop.f32.mrf.mxu0
  %2710 = vdwg.mxu0
  %2719 = vrot.lane.b32.xlu0 %v2563, 64
  %v2720 = vpop.permute.xlu0 %2719
  %2721 = vrot.lane.b32.xlu0 %v2564, 64
  %v2722 = vpop.permute.xlu0 %2721
  %2723 = vrot.lane.b32.xlu0 %v2565, 64
  %v2724 = vpop.permute.xlu0 %2723
  %2725 = vrot.lane.b32.xlu0 %v2566, 64
  %v2726 = vpop.permute.xlu0 %2725
  %2727 = vrot.lane.b32.xlu0 %v2567, 64
  %v2728 = vpop.permute.xlu0 %2727
  %2729 = vrot.lane.b32.xlu0 %v2568, 64
  %v2730 = vpop.permute.xlu0 %2729
  %2731 = vrot.lane.b32.xlu0 %v2569, 64
  %v2732 = vpop.permute.xlu0 %2731
  %2733 = vrot.lane.b32.xlu0 %v2570, 64
  %v2734 = vpop.permute.xlu0 %2733
  %2743 = vmatprep.subr.bf16.mxu0 0
  %2744 = vmatpush1.bf16.msra.mxu0 %v2734
  %2745 = vmatprep.subr.bf16.mxu0 0
  %2746 = vmatpush1.bf16.msra.mxu0 %v2732
  %2747 = vmatprep.subr.bf16.mxu0 0
  %2748 = vmatpush1.bf16.msra.mxu0 %v2730
  %2749 = vmatprep.subr.bf16.mxu0 0
  %2750 = vmatpush1.bf16.msra.mxu0 %v2728
  %2751 = vmatprep.subr.bf16.mxu0 0
  %2752 = vmatpush1.bf16.msra.mxu0 %v2726
  %2753 = vmatprep.subr.bf16.mxu0 0
  %2754 = vmatpush1.bf16.msra.mxu0 %v2724
  %2755 = vmatprep.subr.bf16.mxu0 0
  %2756 = vmatpush1.bf16.msra.mxu0 %v2722
  %2757 = vmatprep.subr.bf16.mxu0 0
  %2758 = vmatpush1.bf16.msra.mxu0 %v2720
  %2759 = vmatprep.subr.bf16.mxu0 0
  %2760 = vmatpush2.bf16.msra.mxu0 0
  %2761 = vmatprep.subr.bf16.mxu0 0
  %2762 = vmatpush2.bf16.msra.mxu0 0
  %2763 = vmatprep.subr.bf16.mxu0 0
  %2764 = vmatpush2.bf16.msra.mxu0 0
  %2765 = vmatprep.subr.bf16.mxu0 0
  %2766 = vmatpush2.bf16.msra.mxu0 0
  %2767 = vmatprep.subr.bf16.mxu0 0
  %2768 = vmatpush2.bf16.msra.mxu0 0
  %2769 = vmatprep.subr.bf16.mxu0 0
  %2770 = vmatpush2.bf16.msra.mxu0 0
  %2771 = vmatprep.subr.bf16.mxu0 0
  %2772 = vmatpush2.bf16.msra.mxu0 0
  %2773 = vmatprep.subr.bf16.mxu0 0
  %2774 = vmatpush2.bf16.msra.mxu0 0
  %2775 = vmatprep.mubr.bf16.mxu0 0
  %2776 = vmatmul.mubr.bf16.gmra.mxu0 %v2669
  %v2777 = vpop.f32.mrf.mxu0
  %v2778 = vadd.f32 0.0, %v2777
  %v2779 = vpop.f32.mrf.mxu0
  %v2780 = vpop.f32.mrf.mxu0
  %v2781 = vadd.f32 0.0, %v2780
  %v2782 = vpop.f32.mrf.mxu0
  %2783 = vdwg.mxu0
  %v2784 = vrcp.pop %v2705
  %v2785 = vrcp.pop %v2708
  %v2786 = vmul.f32 %v2778, %v2784
  %v2787 = vmul.f32 %v2781, %v2785
  %v2788 = vpack.c.bf16 %v2787, %v2786
  %v2790 = vsel %vm74, %v2788, 0
  %2792 = vmatprep.subr.bf16.mxu0 0
  %2793 = vmatpush1.bf16.msra.mxu0 0
  %2794 = vmatprep.subr.bf16.mxu0 0
  %2795 = vmatpush1.bf16.msra.mxu0 0
  %2796 = vmatprep.subr.bf16.mxu0 0
  %2797 = vmatpush1.bf16.msra.mxu0 0
  %2798 = vmatprep.subr.bf16.mxu0 0
  %2799 = vmatpush1.bf16.msra.mxu0 0
  %2800 = vmatprep.subr.bf16.mxu0 0
  %2801 = vmatpush1.bf16.msra.mxu0 0
  %2802 = vmatprep.subr.bf16.mxu0 0
  %2803 = vmatpush1.bf16.msra.mxu0 0
  %2804 = vmatprep.subr.bf16.mxu0 0
  %2805 = vmatpush1.bf16.msra.mxu0 %v812
  %2806 = vmatprep.subr.bf16.mxu0 0
  %2807 = vmatpush1.bf16.msra.mxu0 %v811
  %2808 = vmatprep.subr.bf16.mxu0 0
  %2809 = vmatpush2.bf16.msra.mxu0 0
  %2810 = vmatprep.subr.bf16.mxu0 0
  %2811 = vmatpush2.bf16.msra.mxu0 0
  %2812 = vmatprep.subr.bf16.mxu0 0
  %2813 = vmatpush2.bf16.msra.mxu0 0
  %2814 = vmatprep.subr.bf16.mxu0 0
  %2815 = vmatpush2.bf16.msra.mxu0 0
  %2816 = vmatprep.subr.bf16.mxu0 0
  %2817 = vmatpush2.bf16.msra.mxu0 0
  %2818 = vmatprep.subr.bf16.mxu0 0
  %2819 = vmatpush2.bf16.msra.mxu0 0
  %2820 = vmatprep.subr.bf16.mxu0 0
  %2821 = vmatpush2.bf16.msra.mxu0 0
  %2822 = vmatprep.subr.bf16.mxu0 0
  %2823 = vmatpush2.bf16.msra.mxu0 0
  %2824 = vmatprep.mubr.bf16.mxu0 0
  %2825 = vmatmul.mubr.bf16.gmra.mxu0 %v2790
  %v2826 = vpop.f32.mrf.mxu0
  %v2827 = vadd.f32 %v801, %v2826
  %v2828 = vpop.f32.mrf.mxu0
  %v2829 = vpop.f32.mrf.mxu0
  %v2830 = vadd.f32 %v801, %v2829
  %v2831 = vpop.f32.mrf.mxu0
  %2832 = vdwg.mxu0
  %v2833 = vadd.f32 %v2827, %v41
  %v2834 = vadd.f32 %v2830, %v42
  %2835 = vst.msk [vmem:[%s7 + $0x70] sm:$0xff] %vm74, %v2833
  %2836 = vst.msk [vmem:[%s7 + $0x78] sm:$0xff] %vm74, %v2834
  // Predicated region
  $region30: #{tpu_custom_call.1} parent=0 // pred_check
    _
  $region31: #{tpu_custom_call.1} parent=0 // pred_check_branch
    %2838 = sbr.rel (0) target = $region33
  $region32: #{tpu_custom_call.1} parent=0 // pred_region
    _
  $region33: #{tpu_custom_call.1} parent=0 // pred_fallthru
    _
  // Predicated region
  $region34: #{tpu_custom_call.1} parent=0 // pred_check
    _
  $region35: #{tpu_custom_call.1} parent=0 // pred_check_branch
    %2840 = sbr.rel (0) target = $region37
  $region36: #{tpu_custom_call.1} parent=0 // pred_region
    _
  $region37: #{tpu_custom_call.1} parent=0 // pred_fallthru
    _

</llo_original>
